<compile_context>
chip_gen: v5e
topology: v5e:2x2
jax: 0.10.0
libtpu: 0.0.40
codegen_flags: <defaults>
</compile_context>

<pallas_src>
import functools

import jax
import jax.numpy as jnp
from jax.experimental import pallas as pl
from jax.experimental.pallas import tpu as pltpu

_LANES = 128
_SUBLANES = 8


def _fused_conv2d_lrelu_kernel(x_ref, mask_ref, w1_ref, b1_ref, w2_ref, b2_ref,
                               o_ref, *, window, width):
    """Two fused [KxK 'same' conv + LeakyReLU] stages on flat (rows, 128) slabs.

    x_ref    : (Cin,  R, 128)   input, (n,h,w) flattened row-major     (VMEM)
    mask_ref : (K*K,  R, 128)   0/1 zero-padding mask per tap          (VMEM)
    w1_ref   : (K*K*Cin*Cout,)  stage-1 weights, flat                  (SMEM)
    b1_ref   : (Cout,)          stage-1 bias                           (SMEM)
    w2_ref   : (K*K*Cout*Cout,) stage-2 weights, flat                  (SMEM)
    b2_ref   : (Cout,)          stage-2 bias                           (SMEM)
    o_ref    : (Cout, R, 128)   output, same flat layout               (VMEM)

    Flat weight layout: w[((kh*K + kw)*Cin + ci)*Cout + co].
    """
    cin, rows, lanes = x_ref.shape
    cout = o_ref.shape[0]
    k = window
    p = (k - 1) // 2
    neg_slope = 0.01                       # PyTorch LeakyReLU default.

    lane = jax.lax.broadcasted_iota(jnp.int32, (rows, lanes), 1)

    def flat_shift(v, off):
        # y_flat[s] = v_flat[s + off] on the row-major (rows, lanes) slab.
        # Positions whose source wraps around the slab are garbage; the caller
        # masks them (they are exactly the zero-padding positions).
        if off == 0:
            return v
        if off > 0:
            a = pltpu.roll(v, (-off) % lanes, axis=1)        # lane part (XLU)
            b = pltpu.roll(a, (rows - 1) % rows, axis=0)     # carry row (XLU)
            return jnp.where(lane < lanes - off, a, b)
        m = -off
        a = pltpu.roll(v, m, axis=1)
        b = pltpu.roll(a, 1 % rows, axis=0)
        return jnp.where(lane >= m, a, b)

    def leaky(v):
        return jnp.where(v > 0, v, neg_slope * v)

    def conv_stage(planes, w_ref, b_ref, n_in, n_out):
        acc = [None] * n_out
        for kh in range(k):
            for kw in range(k):
                t = kh * k + kw
                off = (kh - p) * width + (kw - p)
                if off == 0:
                    taps = planes                  # centre tap: no shift/mask
                else:
                    m = mask_ref[t]
                    taps = [flat_shift(planes[ci], off) * m
                            for ci in range(n_in)]
                base = t * n_in * n_out
                for co in range(n_out):
                    v = w_ref[base + co] * taps[0]
                    for ci in range(1, n_in):
                        v = v + w_ref[base + ci * n_out + co] * taps[ci]
                    acc[co] = v if acc[co] is None else acc[co] + v
        return [leaky(acc[co] + b_ref[co]) for co in range(n_out)]

    xs = [x_ref[ci] for ci in range(cin)]
    mid = conv_stage(xs, w1_ref, b1_ref, cin, cout)   # stage-1 act stays in vregs
    out = conv_stage(mid, w2_ref, b2_ref, cout, cout)
    for co in range(cout):
        o_ref[co] = out[co].astype(o_ref.dtype)       # full-lane (128) stores


def _flatten_oihw(w_oihw):
    """OIHW -> flat [((kh*K + kw)*Cin + ci)*Cout + co]."""
    return jnp.transpose(w_oihw, (2, 3, 1, 0)).reshape(-1)


def _tap_masks(n, h, w, window, rows):
    """0/1 float masks (one per tap) implementing 'same' zero padding on the
    row-major flat (n, h, w) -> (rows, 128) layout.  Tail-padding positions
    (s >= n*h*w) never feed a valid output and are dropped by the wrapper."""
    p = (window - 1) // 2
    s = jnp.arange(rows * _LANES, dtype=jnp.int32)
    i = (s // w) % h
    j = s % w
    masks = []
    for kh in range(window):
        for kw in range(window):
            dh, dw = kh - p, kw - p
            ok = ((i + dh >= 0) & (i + dh < h) & (j + dw >= 0) & (j + dw < w))
            masks.append(ok)
    return jnp.stack(masks).astype(jnp.float32).reshape(
        window * window, rows, _LANES)


def standard_conv2d_forward(coded_nchw, params, *, window=3):
    """Matches StandardConv2D.forward: two [conv 'same' + LeakyReLU], fused."""
    (w1, b1), (w2, b2) = params
    n, cin, h, w = coded_nchw.shape
    cout = w1.shape[0]
    p = (window - 1) // 2
    # TODO(synk): for W >= ~127 the flat tap shift no longer fits one lane
    #   tile; fall back to 2-D (H, W)-tiled planes with an H grid axis.
    if p * (w + 1) >= _LANES:
        raise NotImplementedError("flat tap shift must fit inside one lane tile")

    nhw = n * h * w
    rows = pl.cdiv(nhw, _SUBLANES * _LANES) * _SUBLANES   # full (8,128) vregs
    flat_pad = rows * _LANES - nhw

    # Layout plumbing (wrapper side, blessed): NCHW -> (Cin, flat(n,h,w)).
    x_flat = jnp.transpose(coded_nchw, (1, 0, 2, 3)).reshape(cin, nhw)
    if flat_pad:
        x_flat = jnp.pad(x_flat, ((0, 0), (0, flat_pad)))
    x_flat = x_flat.reshape(cin, rows, _LANES)

    masks = _tap_masks(n, h, w, window, rows)
    w1_flat = _flatten_oihw(w1)
    w2_flat = _flatten_oihw(w2)

    kernel = functools.partial(_fused_conv2d_lrelu_kernel,
                               window=window, width=w)

    out_flat = pl.pallas_call(
        kernel,
        out_shape=jax.ShapeDtypeStruct((cout, rows, _LANES), coded_nchw.dtype),
        grid_spec=pltpu.PrefetchScalarGridSpec(
            num_scalar_prefetch=0,
            grid=(1,),                    # whole batch in one step (no serial
            in_specs=[                    # grid overhead on v5e/v6e)
                pl.BlockSpec((cin, rows, _LANES), lambda i: (0, 0, 0)),
                pl.BlockSpec((window * window, rows, _LANES),
                             lambda i: (0, 0, 0)),
                pl.BlockSpec(memory_space=pltpu.MemorySpace.SMEM),  # w1
                pl.BlockSpec(memory_space=pltpu.MemorySpace.SMEM),  # b1
                pl.BlockSpec(memory_space=pltpu.MemorySpace.SMEM),  # w2
                pl.BlockSpec(memory_space=pltpu.MemorySpace.SMEM),  # b2
            ],
            out_specs=pl.BlockSpec((cout, rows, _LANES), lambda i: (0, 0, 0)),
        ),
        compiler_params=pltpu.CompilerParams(
            dimension_semantics=("arbitrary",),
            vmem_limit_bytes=32 * 1024 * 1024,
        ),
    )(x_flat, masks, w1_flat, b1, w2_flat, b2)

    out = out_flat.reshape(cout, rows * _LANES)[:, :nhw].reshape(cout, n, h, w)
    return jnp.transpose(out, (1, 0, 2, 3))


def init_conv_params(key, in_channels, out_channels, window):
    """Deterministic init mirroring PyTorch Conv2d default (kaiming-uniform-ish)."""
    kw_, kb_ = jax.random.split(key)
    fan_in = in_channels * window * window
    bound = 1.0 / jnp.sqrt(jnp.float32(fan_in))
    wgt = jax.random.uniform(kw_, (out_channels, in_channels, window, window),
                             jnp.float32, minval=-bound, maxval=bound)
    b = jax.random.uniform(kb_, (out_channels,), jnp.float32,
                           minval=-bound, maxval=bound)
    return wgt, b


def _reference_forward(coded_nchw, params, *, window=3):
    """Pure-JAX reference for validation."""
    pad = (window - 1) // 2
    out = coded_nchw
    for wgt, b in params:
        out = jax.lax.conv_general_dilated(
            out, wgt, window_strides=(1, 1),
            padding=[(pad, pad), (pad, pad)],
            dimension_numbers=("NCHW", "OIHW", "NCHW"),
            precision=jax.lax.Precision.HIGHEST)
        out = out + b[None, :, None, None]
        out = jnp.where(out > 0, out, 0.01 * out)
    return out


if __name__ == "__main__":
    # Module hardcodes the first conv to in_channels=3.
    N, C_IN, H, W = 2, 3, 16, 16
    C_OUT = 4
    WINDOW = 3

    key = jax.random.PRNGKey(0)
    k_x, k_l1, k_l2 = jax.random.split(key, 3)

    x = jax.random.normal(k_x, (N, C_IN, H, W), jnp.float32)
    params = (
        init_conv_params(k_l1, 3, C_OUT, WINDOW),       # inverse_layer
        init_conv_params(k_l2, C_OUT, C_OUT, WINDOW),   # inverse_layer2
    )

    fwd = jax.jit(functools.partial(standard_conv2d_forward, window=WINDOW))
    out = jax.block_until_ready(fwd(x, params))

    ref = _reference_forward(x, params, window=WINDOW)
    assert out.shape == (N, C_OUT, H, W)
    assert jnp.allclose(out, ref, atol=1e-5, rtol=1e-5), (
        float(jnp.max(jnp.abs(out - ref))))

    print("KERNEL_OK")
</pallas_src>

<mosaic_0001>
module attributes {stable_mosaic.version = 11 : i64} {
  func.func @_fused_conv2d_lrelu_kernel(%arg0: i32, %arg1: memref<3x8x128xf32, #tpu.memory_space<vmem>>, %arg2: memref<9x8x128xf32, #tpu.memory_space<vmem>>, %arg3: memref<108xf32, #tpu.memory_space<smem>>, %arg4: memref<4xf32, #tpu.memory_space<smem>>, %arg5: memref<144xf32, #tpu.memory_space<smem>>, %arg6: memref<4xf32, #tpu.memory_space<smem>>, %arg7: memref<4x8x128xf32, #tpu.memory_space<vmem>>) attributes {dimension_semantics = [#tpu.dimension_semantics<arbitrary>], iteration_bounds = array<i64: 1>, scalar_prefetch = 0 : i64, scratch_operands = 0 : i64, tpu.core_type = #tpu.core_type<tc>, window_params = [{pipeline_mode = #tpu.pipeline_mode<synchronous>, transform_indices = @transform_0, window_bounds = array<i64: 3, 8, 128>}, {pipeline_mode = #tpu.pipeline_mode<synchronous>, transform_indices = @transform_1, window_bounds = array<i64: 9, 8, 128>}, {transform_indices = @transform_2, window_bounds = array<i64: 108>}, {transform_indices = @transform_3, window_bounds = array<i64: 4>}, {transform_indices = @transform_4, window_bounds = array<i64: 144>}, {transform_indices = @transform_5, window_bounds = array<i64: 4>}, {pipeline_mode = #tpu.pipeline_mode<synchronous>, transform_indices = @transform_6, window_bounds = array<i64: 4, 8, 128>}]} {
    %0 = tpu.iota {dimensions = array<i32: 1>} : vector<8x128xi32>
    %c0 = arith.constant 0 : index
    %c0_0 = arith.constant 0 : index
    %c0_1 = arith.constant 0 : index
    %1 = vector.load %arg1[%c0, %c0_0, %c0_1] : memref<3x8x128xf32, #tpu.memory_space<vmem>>, vector<1x8x128xf32>
    %2 = vector.shape_cast %1 : vector<1x8x128xf32> to vector<8x128xf32>
    %c1 = arith.constant 1 : index
    %c0_2 = arith.constant 0 : index
    %c0_3 = arith.constant 0 : index
    %3 = vector.load %arg1[%c1, %c0_2, %c0_3] : memref<3x8x128xf32, #tpu.memory_space<vmem>>, vector<1x8x128xf32>
    %4 = vector.shape_cast %3 : vector<1x8x128xf32> to vector<8x128xf32>
    %c2 = arith.constant 2 : index
    %c0_4 = arith.constant 0 : index
    %c0_5 = arith.constant 0 : index
    %5 = vector.load %arg1[%c2, %c0_4, %c0_5] : memref<3x8x128xf32, #tpu.memory_space<vmem>>, vector<1x8x128xf32>
    %6 = vector.shape_cast %5 : vector<1x8x128xf32> to vector<8x128xf32>
    %c0_6 = arith.constant 0 : index
    %c0_7 = arith.constant 0 : index
    %c0_8 = arith.constant 0 : index
    %7 = vector.load %arg2[%c0_6, %c0_7, %c0_8] : memref<9x8x128xf32, #tpu.memory_space<vmem>>, vector<1x8x128xf32>
    %8 = vector.shape_cast %7 : vector<1x8x128xf32> to vector<8x128xf32>
    %c17_i32 = arith.constant 17 : i32
    %9 = tpu.dynamic_rotate %2 by %c17_i32 dim 1 : vector<8x128xf32>, i32 -> vector<8x128xf32>
    %c1_i32 = arith.constant 1 : i32
    %10 = tpu.dynamic_rotate %9 by %c1_i32 dim 0 : vector<8x128xf32>, i32 -> vector<8x128xf32>
    %c17_i32_9 = arith.constant 17 : i32
    %11 = vector.broadcast %c17_i32_9 : i32 to vector<8x128xi32>
    %12 = arith.cmpi sge, %0, %11 : vector<8x128xi32>
    %13 = arith.select %12, %9, %10 : vector<8x128xi1>, vector<8x128xf32>
    %14 = arith.mulf %13, %8 : vector<8x128xf32>
    %c17_i32_10 = arith.constant 17 : i32
    %15 = tpu.dynamic_rotate %4 by %c17_i32_10 dim 1 : vector<8x128xf32>, i32 -> vector<8x128xf32>
    %c1_i32_11 = arith.constant 1 : i32
    %16 = tpu.dynamic_rotate %15 by %c1_i32_11 dim 0 : vector<8x128xf32>, i32 -> vector<8x128xf32>
    %c17_i32_12 = arith.constant 17 : i32
    %17 = vector.broadcast %c17_i32_12 : i32 to vector<8x128xi32>
    %18 = arith.cmpi sge, %0, %17 : vector<8x128xi32>
    %19 = arith.select %18, %15, %16 : vector<8x128xi1>, vector<8x128xf32>
    %20 = arith.mulf %19, %8 : vector<8x128xf32>
    %c17_i32_13 = arith.constant 17 : i32
    %21 = tpu.dynamic_rotate %6 by %c17_i32_13 dim 1 : vector<8x128xf32>, i32 -> vector<8x128xf32>
    %c1_i32_14 = arith.constant 1 : i32
    %22 = tpu.dynamic_rotate %21 by %c1_i32_14 dim 0 : vector<8x128xf32>, i32 -> vector<8x128xf32>
    %c17_i32_15 = arith.constant 17 : i32
    %23 = vector.broadcast %c17_i32_15 : i32 to vector<8x128xi32>
    %24 = arith.cmpi sge, %0, %23 : vector<8x128xi32>
    %25 = arith.select %24, %21, %22 : vector<8x128xi1>, vector<8x128xf32>
    %26 = arith.mulf %25, %8 : vector<8x128xf32>
    %c0_16 = arith.constant 0 : index
    %27 = memref.load %arg3[%c0_16] : memref<108xf32, #tpu.memory_space<smem>>
    %28 = vector.broadcast %27 : f32 to vector<8x128xf32>
    %29 = arith.mulf %28, %14 : vector<8x128xf32>
    %c4 = arith.constant 4 : index
    %30 = memref.load %arg3[%c4] : memref<108xf32, #tpu.memory_space<smem>>
    %31 = vector.broadcast %30 : f32 to vector<8x128xf32>
    %32 = arith.mulf %31, %20 : vector<8x128xf32>
    %33 = arith.addf %29, %32 : vector<8x128xf32>
    %c8 = arith.constant 8 : index
    %34 = memref.load %arg3[%c8] : memref<108xf32, #tpu.memory_space<smem>>
    %35 = vector.broadcast %34 : f32 to vector<8x128xf32>
    %36 = arith.mulf %35, %26 : vector<8x128xf32>
    %37 = arith.addf %33, %36 : vector<8x128xf32>
    %c1_17 = arith.constant 1 : index
    %38 = memref.load %arg3[%c1_17] : memref<108xf32, #tpu.memory_space<smem>>
    %39 = vector.broadcast %38 : f32 to vector<8x128xf32>
    %40 = arith.mulf %39, %14 : vector<8x128xf32>
    %c5 = arith.constant 5 : index
    %41 = memref.load %arg3[%c5] : memref<108xf32, #tpu.memory_space<smem>>
    %42 = vector.broadcast %41 : f32 to vector<8x128xf32>
    %43 = arith.mulf %42, %20 : vector<8x128xf32>
    %44 = arith.addf %40, %43 : vector<8x128xf32>
    %c9 = arith.constant 9 : index
    %45 = memref.load %arg3[%c9] : memref<108xf32, #tpu.memory_space<smem>>
    %46 = vector.broadcast %45 : f32 to vector<8x128xf32>
    %47 = arith.mulf %46, %26 : vector<8x128xf32>
    %48 = arith.addf %44, %47 : vector<8x128xf32>
    %c2_18 = arith.constant 2 : index
    %49 = memref.load %arg3[%c2_18] : memref<108xf32, #tpu.memory_space<smem>>
    %50 = vector.broadcast %49 : f32 to vector<8x128xf32>
    %51 = arith.mulf %50, %14 : vector<8x128xf32>
    %c6 = arith.constant 6 : index
    %52 = memref.load %arg3[%c6] : memref<108xf32, #tpu.memory_space<smem>>
    %53 = vector.broadcast %52 : f32 to vector<8x128xf32>
    %54 = arith.mulf %53, %20 : vector<8x128xf32>
    %55 = arith.addf %51, %54 : vector<8x128xf32>
    %c10 = arith.constant 10 : index
    %56 = memref.load %arg3[%c10] : memref<108xf32, #tpu.memory_space<smem>>
    %57 = vector.broadcast %56 : f32 to vector<8x128xf32>
    %58 = arith.mulf %57, %26 : vector<8x128xf32>
    %59 = arith.addf %55, %58 : vector<8x128xf32>
    %c3 = arith.constant 3 : index
    %60 = memref.load %arg3[%c3] : memref<108xf32, #tpu.memory_space<smem>>
    %61 = vector.broadcast %60 : f32 to vector<8x128xf32>
    %62 = arith.mulf %61, %14 : vector<8x128xf32>
    %c7 = arith.constant 7 : index
    %63 = memref.load %arg3[%c7] : memref<108xf32, #tpu.memory_space<smem>>
    %64 = vector.broadcast %63 : f32 to vector<8x128xf32>
    %65 = arith.mulf %64, %20 : vector<8x128xf32>
    %66 = arith.addf %62, %65 : vector<8x128xf32>
    %c11 = arith.constant 11 : index
    %67 = memref.load %arg3[%c11] : memref<108xf32, #tpu.memory_space<smem>>
    %68 = vector.broadcast %67 : f32 to vector<8x128xf32>
    %69 = arith.mulf %68, %26 : vector<8x128xf32>
    %70 = arith.addf %66, %69 : vector<8x128xf32>
    %c1_19 = arith.constant 1 : index
    %c0_20 = arith.constant 0 : index
    %c0_21 = arith.constant 0 : index
    %71 = vector.load %arg2[%c1_19, %c0_20, %c0_21] : memref<9x8x128xf32, #tpu.memory_space<vmem>>, vector<1x8x128xf32>
    %72 = vector.shape_cast %71 : vector<1x8x128xf32> to vector<8x128xf32>
    %c16_i32 = arith.constant 16 : i32
    %73 = tpu.dynamic_rotate %2 by %c16_i32 dim 1 : vector<8x128xf32>, i32 -> vector<8x128xf32>
    %c1_i32_22 = arith.constant 1 : i32
    %74 = tpu.dynamic_rotate %73 by %c1_i32_22 dim 0 : vector<8x128xf32>, i32 -> vector<8x128xf32>
    %c16_i32_23 = arith.constant 16 : i32
    %75 = vector.broadcast %c16_i32_23 : i32 to vector<8x128xi32>
    %76 = arith.cmpi sge, %0, %75 : vector<8x128xi32>
    %77 = arith.select %76, %73, %74 : vector<8x128xi1>, vector<8x128xf32>
    %78 = arith.mulf %77, %72 : vector<8x128xf32>
    %c16_i32_24 = arith.constant 16 : i32
    %79 = tpu.dynamic_rotate %4 by %c16_i32_24 dim 1 : vector<8x128xf32>, i32 -> vector<8x128xf32>
    %c1_i32_25 = arith.constant 1 : i32
    %80 = tpu.dynamic_rotate %79 by %c1_i32_25 dim 0 : vector<8x128xf32>, i32 -> vector<8x128xf32>
    %c16_i32_26 = arith.constant 16 : i32
    %81 = vector.broadcast %c16_i32_26 : i32 to vector<8x128xi32>
    %82 = arith.cmpi sge, %0, %81 : vector<8x128xi32>
    %83 = arith.select %82, %79, %80 : vector<8x128xi1>, vector<8x128xf32>
    %84 = arith.mulf %83, %72 : vector<8x128xf32>
    %c16_i32_27 = arith.constant 16 : i32
    %85 = tpu.dynamic_rotate %6 by %c16_i32_27 dim 1 : vector<8x128xf32>, i32 -> vector<8x128xf32>
    %c1_i32_28 = arith.constant 1 : i32
    %86 = tpu.dynamic_rotate %85 by %c1_i32_28 dim 0 : vector<8x128xf32>, i32 -> vector<8x128xf32>
    %c16_i32_29 = arith.constant 16 : i32
    %87 = vector.broadcast %c16_i32_29 : i32 to vector<8x128xi32>
    %88 = arith.cmpi sge, %0, %87 : vector<8x128xi32>
    %89 = arith.select %88, %85, %86 : vector<8x128xi1>, vector<8x128xf32>
    %90 = arith.mulf %89, %72 : vector<8x128xf32>
    %c12 = arith.constant 12 : index
    %91 = memref.load %arg3[%c12] : memref<108xf32, #tpu.memory_space<smem>>
    %92 = vector.broadcast %91 : f32 to vector<8x128xf32>
    %93 = arith.mulf %92, %78 : vector<8x128xf32>
    %c16 = arith.constant 16 : index
    %94 = memref.load %arg3[%c16] : memref<108xf32, #tpu.memory_space<smem>>
    %95 = vector.broadcast %94 : f32 to vector<8x128xf32>
    %96 = arith.mulf %95, %84 : vector<8x128xf32>
    %97 = arith.addf %93, %96 : vector<8x128xf32>
    %c20 = arith.constant 20 : index
    %98 = memref.load %arg3[%c20] : memref<108xf32, #tpu.memory_space<smem>>
    %99 = vector.broadcast %98 : f32 to vector<8x128xf32>
    %100 = arith.mulf %99, %90 : vector<8x128xf32>
    %101 = arith.addf %97, %100 : vector<8x128xf32>
    %102 = arith.addf %37, %101 : vector<8x128xf32>
    %c13 = arith.constant 13 : index
    %103 = memref.load %arg3[%c13] : memref<108xf32, #tpu.memory_space<smem>>
    %104 = vector.broadcast %103 : f32 to vector<8x128xf32>
    %105 = arith.mulf %104, %78 : vector<8x128xf32>
    %c17 = arith.constant 17 : index
    %106 = memref.load %arg3[%c17] : memref<108xf32, #tpu.memory_space<smem>>
    %107 = vector.broadcast %106 : f32 to vector<8x128xf32>
    %108 = arith.mulf %107, %84 : vector<8x128xf32>
    %109 = arith.addf %105, %108 : vector<8x128xf32>
    %c21 = arith.constant 21 : index
    %110 = memref.load %arg3[%c21] : memref<108xf32, #tpu.memory_space<smem>>
    %111 = vector.broadcast %110 : f32 to vector<8x128xf32>
    %112 = arith.mulf %111, %90 : vector<8x128xf32>
    %113 = arith.addf %109, %112 : vector<8x128xf32>
    %114 = arith.addf %48, %113 : vector<8x128xf32>
    %c14 = arith.constant 14 : index
    %115 = memref.load %arg3[%c14] : memref<108xf32, #tpu.memory_space<smem>>
    %116 = vector.broadcast %115 : f32 to vector<8x128xf32>
    %117 = arith.mulf %116, %78 : vector<8x128xf32>
    %c18 = arith.constant 18 : index
    %118 = memref.load %arg3[%c18] : memref<108xf32, #tpu.memory_space<smem>>
    %119 = vector.broadcast %118 : f32 to vector<8x128xf32>
    %120 = arith.mulf %119, %84 : vector<8x128xf32>
    %121 = arith.addf %117, %120 : vector<8x128xf32>
    %c22 = arith.constant 22 : index
    %122 = memref.load %arg3[%c22] : memref<108xf32, #tpu.memory_space<smem>>
    %123 = vector.broadcast %122 : f32 to vector<8x128xf32>
    %124 = arith.mulf %123, %90 : vector<8x128xf32>
    %125 = arith.addf %121, %124 : vector<8x128xf32>
    %126 = arith.addf %59, %125 : vector<8x128xf32>
    %c15 = arith.constant 15 : index
    %127 = memref.load %arg3[%c15] : memref<108xf32, #tpu.memory_space<smem>>
    %128 = vector.broadcast %127 : f32 to vector<8x128xf32>
    %129 = arith.mulf %128, %78 : vector<8x128xf32>
    %c19 = arith.constant 19 : index
    %130 = memref.load %arg3[%c19] : memref<108xf32, #tpu.memory_space<smem>>
    %131 = vector.broadcast %130 : f32 to vector<8x128xf32>
    %132 = arith.mulf %131, %84 : vector<8x128xf32>
    %133 = arith.addf %129, %132 : vector<8x128xf32>
    %c23 = arith.constant 23 : index
    %134 = memref.load %arg3[%c23] : memref<108xf32, #tpu.memory_space<smem>>
    %135 = vector.broadcast %134 : f32 to vector<8x128xf32>
    %136 = arith.mulf %135, %90 : vector<8x128xf32>
    %137 = arith.addf %133, %136 : vector<8x128xf32>
    %138 = arith.addf %70, %137 : vector<8x128xf32>
    %c2_30 = arith.constant 2 : index
    %c0_31 = arith.constant 0 : index
    %c0_32 = arith.constant 0 : index
    %139 = vector.load %arg2[%c2_30, %c0_31, %c0_32] : memref<9x8x128xf32, #tpu.memory_space<vmem>>, vector<1x8x128xf32>
    %140 = vector.shape_cast %139 : vector<1x8x128xf32> to vector<8x128xf32>
    %c15_i32 = arith.constant 15 : i32
    %141 = tpu.dynamic_rotate %2 by %c15_i32 dim 1 : vector<8x128xf32>, i32 -> vector<8x128xf32>
    %c1_i32_33 = arith.constant 1 : i32
    %142 = tpu.dynamic_rotate %141 by %c1_i32_33 dim 0 : vector<8x128xf32>, i32 -> vector<8x128xf32>
    %c15_i32_34 = arith.constant 15 : i32
    %143 = vector.broadcast %c15_i32_34 : i32 to vector<8x128xi32>
    %144 = arith.cmpi sge, %0, %143 : vector<8x128xi32>
    %145 = arith.select %144, %141, %142 : vector<8x128xi1>, vector<8x128xf32>
    %146 = arith.mulf %145, %140 : vector<8x128xf32>
    %c15_i32_35 = arith.constant 15 : i32
    %147 = tpu.dynamic_rotate %4 by %c15_i32_35 dim 1 : vector<8x128xf32>, i32 -> vector<8x128xf32>
    %c1_i32_36 = arith.constant 1 : i32
    %148 = tpu.dynamic_rotate %147 by %c1_i32_36 dim 0 : vector<8x128xf32>, i32 -> vector<8x128xf32>
    %c15_i32_37 = arith.constant 15 : i32
    %149 = vector.broadcast %c15_i32_37 : i32 to vector<8x128xi32>
    %150 = arith.cmpi sge, %0, %149 : vector<8x128xi32>
    %151 = arith.select %150, %147, %148 : vector<8x128xi1>, vector<8x128xf32>
    %152 = arith.mulf %151, %140 : vector<8x128xf32>
    %c15_i32_38 = arith.constant 15 : i32
    %153 = tpu.dynamic_rotate %6 by %c15_i32_38 dim 1 : vector<8x128xf32>, i32 -> vector<8x128xf32>
    %c1_i32_39 = arith.constant 1 : i32
    %154 = tpu.dynamic_rotate %153 by %c1_i32_39 dim 0 : vector<8x128xf32>, i32 -> vector<8x128xf32>
    %c15_i32_40 = arith.constant 15 : i32
    %155 = vector.broadcast %c15_i32_40 : i32 to vector<8x128xi32>
    %156 = arith.cmpi sge, %0, %155 : vector<8x128xi32>
    %157 = arith.select %156, %153, %154 : vector<8x128xi1>, vector<8x128xf32>
    %158 = arith.mulf %157, %140 : vector<8x128xf32>
    %c24 = arith.constant 24 : index
    %159 = memref.load %arg3[%c24] : memref<108xf32, #tpu.memory_space<smem>>
    %160 = vector.broadcast %159 : f32 to vector<8x128xf32>
    %161 = arith.mulf %160, %146 : vector<8x128xf32>
    %c28 = arith.constant 28 : index
    %162 = memref.load %arg3[%c28] : memref<108xf32, #tpu.memory_space<smem>>
    %163 = vector.broadcast %162 : f32 to vector<8x128xf32>
    %164 = arith.mulf %163, %152 : vector<8x128xf32>
    %165 = arith.addf %161, %164 : vector<8x128xf32>
    %c32 = arith.constant 32 : index
    %166 = memref.load %arg3[%c32] : memref<108xf32, #tpu.memory_space<smem>>
    %167 = vector.broadcast %166 : f32 to vector<8x128xf32>
    %168 = arith.mulf %167, %158 : vector<8x128xf32>
    %169 = arith.addf %165, %168 : vector<8x128xf32>
    %170 = arith.addf %102, %169 : vector<8x128xf32>
    %c25 = arith.constant 25 : index
    %171 = memref.load %arg3[%c25] : memref<108xf32, #tpu.memory_space<smem>>
    %172 = vector.broadcast %171 : f32 to vector<8x128xf32>
    %173 = arith.mulf %172, %146 : vector<8x128xf32>
    %c29 = arith.constant 29 : index
    %174 = memref.load %arg3[%c29] : memref<108xf32, #tpu.memory_space<smem>>
    %175 = vector.broadcast %174 : f32 to vector<8x128xf32>
    %176 = arith.mulf %175, %152 : vector<8x128xf32>
    %177 = arith.addf %173, %176 : vector<8x128xf32>
    %c33 = arith.constant 33 : index
    %178 = memref.load %arg3[%c33] : memref<108xf32, #tpu.memory_space<smem>>
    %179 = vector.broadcast %178 : f32 to vector<8x128xf32>
    %180 = arith.mulf %179, %158 : vector<8x128xf32>
    %181 = arith.addf %177, %180 : vector<8x128xf32>
    %182 = arith.addf %114, %181 : vector<8x128xf32>
    %c26 = arith.constant 26 : index
    %183 = memref.load %arg3[%c26] : memref<108xf32, #tpu.memory_space<smem>>
    %184 = vector.broadcast %183 : f32 to vector<8x128xf32>
    %185 = arith.mulf %184, %146 : vector<8x128xf32>
    %c30 = arith.constant 30 : index
    %186 = memref.load %arg3[%c30] : memref<108xf32, #tpu.memory_space<smem>>
    %187 = vector.broadcast %186 : f32 to vector<8x128xf32>
    %188 = arith.mulf %187, %152 : vector<8x128xf32>
    %189 = arith.addf %185, %188 : vector<8x128xf32>
    %c34 = arith.constant 34 : index
    %190 = memref.load %arg3[%c34] : memref<108xf32, #tpu.memory_space<smem>>
    %191 = vector.broadcast %190 : f32 to vector<8x128xf32>
    %192 = arith.mulf %191, %158 : vector<8x128xf32>
    %193 = arith.addf %189, %192 : vector<8x128xf32>
    %194 = arith.addf %126, %193 : vector<8x128xf32>
    %c27 = arith.constant 27 : index
    %195 = memref.load %arg3[%c27] : memref<108xf32, #tpu.memory_space<smem>>
    %196 = vector.broadcast %195 : f32 to vector<8x128xf32>
    %197 = arith.mulf %196, %146 : vector<8x128xf32>
    %c31 = arith.constant 31 : index
    %198 = memref.load %arg3[%c31] : memref<108xf32, #tpu.memory_space<smem>>
    %199 = vector.broadcast %198 : f32 to vector<8x128xf32>
    %200 = arith.mulf %199, %152 : vector<8x128xf32>
    %201 = arith.addf %197, %200 : vector<8x128xf32>
    %c35 = arith.constant 35 : index
    %202 = memref.load %arg3[%c35] : memref<108xf32, #tpu.memory_space<smem>>
    %203 = vector.broadcast %202 : f32 to vector<8x128xf32>
    %204 = arith.mulf %203, %158 : vector<8x128xf32>
    %205 = arith.addf %201, %204 : vector<8x128xf32>
    %206 = arith.addf %138, %205 : vector<8x128xf32>
    %c3_41 = arith.constant 3 : index
    %c0_42 = arith.constant 0 : index
    %c0_43 = arith.constant 0 : index
    %207 = vector.load %arg2[%c3_41, %c0_42, %c0_43] : memref<9x8x128xf32, #tpu.memory_space<vmem>>, vector<1x8x128xf32>
    %208 = vector.shape_cast %207 : vector<1x8x128xf32> to vector<8x128xf32>
    %c1_i32_44 = arith.constant 1 : i32
    %209 = tpu.dynamic_rotate %2 by %c1_i32_44 dim 1 : vector<8x128xf32>, i32 -> vector<8x128xf32>
    %c1_i32_45 = arith.constant 1 : i32
    %210 = tpu.dynamic_rotate %209 by %c1_i32_45 dim 0 : vector<8x128xf32>, i32 -> vector<8x128xf32>
    %c1_i32_46 = arith.constant 1 : i32
    %211 = vector.broadcast %c1_i32_46 : i32 to vector<8x128xi32>
    %212 = arith.cmpi sge, %0, %211 : vector<8x128xi32>
    %213 = arith.select %212, %209, %210 : vector<8x128xi1>, vector<8x128xf32>
    %214 = arith.mulf %213, %208 : vector<8x128xf32>
    %c1_i32_47 = arith.constant 1 : i32
    %215 = tpu.dynamic_rotate %4 by %c1_i32_47 dim 1 : vector<8x128xf32>, i32 -> vector<8x128xf32>
    %c1_i32_48 = arith.constant 1 : i32
    %216 = tpu.dynamic_rotate %215 by %c1_i32_48 dim 0 : vector<8x128xf32>, i32 -> vector<8x128xf32>
    %c1_i32_49 = arith.constant 1 : i32
    %217 = vector.broadcast %c1_i32_49 : i32 to vector<8x128xi32>
    %218 = arith.cmpi sge, %0, %217 : vector<8x128xi32>
    %219 = arith.select %218, %215, %216 : vector<8x128xi1>, vector<8x128xf32>
    %220 = arith.mulf %219, %208 : vector<8x128xf32>
    %c1_i32_50 = arith.constant 1 : i32
    %221 = tpu.dynamic_rotate %6 by %c1_i32_50 dim 1 : vector<8x128xf32>, i32 -> vector<8x128xf32>
    %c1_i32_51 = arith.constant 1 : i32
    %222 = tpu.dynamic_rotate %221 by %c1_i32_51 dim 0 : vector<8x128xf32>, i32 -> vector<8x128xf32>
    %c1_i32_52 = arith.constant 1 : i32
    %223 = vector.broadcast %c1_i32_52 : i32 to vector<8x128xi32>
    %224 = arith.cmpi sge, %0, %223 : vector<8x128xi32>
    %225 = arith.select %224, %221, %222 : vector<8x128xi1>, vector<8x128xf32>
    %226 = arith.mulf %225, %208 : vector<8x128xf32>
    %c36 = arith.constant 36 : index
    %227 = memref.load %arg3[%c36] : memref<108xf32, #tpu.memory_space<smem>>
    %228 = vector.broadcast %227 : f32 to vector<8x128xf32>
    %229 = arith.mulf %228, %214 : vector<8x128xf32>
    %c40 = arith.constant 40 : index
    %230 = memref.load %arg3[%c40] : memref<108xf32, #tpu.memory_space<smem>>
    %231 = vector.broadcast %230 : f32 to vector<8x128xf32>
    %232 = arith.mulf %231, %220 : vector<8x128xf32>
    %233 = arith.addf %229, %232 : vector<8x128xf32>
    %c44 = arith.constant 44 : index
    %234 = memref.load %arg3[%c44] : memref<108xf32, #tpu.memory_space<smem>>
    %235 = vector.broadcast %234 : f32 to vector<8x128xf32>
    %236 = arith.mulf %235, %226 : vector<8x128xf32>
    %237 = arith.addf %233, %236 : vector<8x128xf32>
    %238 = arith.addf %170, %237 : vector<8x128xf32>
    %c37 = arith.constant 37 : index
    %239 = memref.load %arg3[%c37] : memref<108xf32, #tpu.memory_space<smem>>
    %240 = vector.broadcast %239 : f32 to vector<8x128xf32>
    %241 = arith.mulf %240, %214 : vector<8x128xf32>
    %c41 = arith.constant 41 : index
    %242 = memref.load %arg3[%c41] : memref<108xf32, #tpu.memory_space<smem>>
    %243 = vector.broadcast %242 : f32 to vector<8x128xf32>
    %244 = arith.mulf %243, %220 : vector<8x128xf32>
    %245 = arith.addf %241, %244 : vector<8x128xf32>
    %c45 = arith.constant 45 : index
    %246 = memref.load %arg3[%c45] : memref<108xf32, #tpu.memory_space<smem>>
    %247 = vector.broadcast %246 : f32 to vector<8x128xf32>
    %248 = arith.mulf %247, %226 : vector<8x128xf32>
    %249 = arith.addf %245, %248 : vector<8x128xf32>
    %250 = arith.addf %182, %249 : vector<8x128xf32>
    %c38 = arith.constant 38 : index
    %251 = memref.load %arg3[%c38] : memref<108xf32, #tpu.memory_space<smem>>
    %252 = vector.broadcast %251 : f32 to vector<8x128xf32>
    %253 = arith.mulf %252, %214 : vector<8x128xf32>
    %c42 = arith.constant 42 : index
    %254 = memref.load %arg3[%c42] : memref<108xf32, #tpu.memory_space<smem>>
    %255 = vector.broadcast %254 : f32 to vector<8x128xf32>
    %256 = arith.mulf %255, %220 : vector<8x128xf32>
    %257 = arith.addf %253, %256 : vector<8x128xf32>
    %c46 = arith.constant 46 : index
    %258 = memref.load %arg3[%c46] : memref<108xf32, #tpu.memory_space<smem>>
    %259 = vector.broadcast %258 : f32 to vector<8x128xf32>
    %260 = arith.mulf %259, %226 : vector<8x128xf32>
    %261 = arith.addf %257, %260 : vector<8x128xf32>
    %262 = arith.addf %194, %261 : vector<8x128xf32>
    %c39 = arith.constant 39 : index
    %263 = memref.load %arg3[%c39] : memref<108xf32, #tpu.memory_space<smem>>
    %264 = vector.broadcast %263 : f32 to vector<8x128xf32>
    %265 = arith.mulf %264, %214 : vector<8x128xf32>
    %c43 = arith.constant 43 : index
    %266 = memref.load %arg3[%c43] : memref<108xf32, #tpu.memory_space<smem>>
    %267 = vector.broadcast %266 : f32 to vector<8x128xf32>
    %268 = arith.mulf %267, %220 : vector<8x128xf32>
    %269 = arith.addf %265, %268 : vector<8x128xf32>
    %c47 = arith.constant 47 : index
    %270 = memref.load %arg3[%c47] : memref<108xf32, #tpu.memory_space<smem>>
    %271 = vector.broadcast %270 : f32 to vector<8x128xf32>
    %272 = arith.mulf %271, %226 : vector<8x128xf32>
    %273 = arith.addf %269, %272 : vector<8x128xf32>
    %274 = arith.addf %206, %273 : vector<8x128xf32>
    %c48 = arith.constant 48 : index
    %275 = memref.load %arg3[%c48] : memref<108xf32, #tpu.memory_space<smem>>
    %276 = vector.broadcast %275 : f32 to vector<8x128xf32>
    %277 = arith.mulf %276, %2 : vector<8x128xf32>
    %c52 = arith.constant 52 : index
    %278 = memref.load %arg3[%c52] : memref<108xf32, #tpu.memory_space<smem>>
    %279 = vector.broadcast %278 : f32 to vector<8x128xf32>
    %280 = arith.mulf %279, %4 : vector<8x128xf32>
    %281 = arith.addf %277, %280 : vector<8x128xf32>
    %c56 = arith.constant 56 : index
    %282 = memref.load %arg3[%c56] : memref<108xf32, #tpu.memory_space<smem>>
    %283 = vector.broadcast %282 : f32 to vector<8x128xf32>
    %284 = arith.mulf %283, %6 : vector<8x128xf32>
    %285 = arith.addf %281, %284 : vector<8x128xf32>
    %286 = arith.addf %238, %285 : vector<8x128xf32>
    %c49 = arith.constant 49 : index
    %287 = memref.load %arg3[%c49] : memref<108xf32, #tpu.memory_space<smem>>
    %288 = vector.broadcast %287 : f32 to vector<8x128xf32>
    %289 = arith.mulf %288, %2 : vector<8x128xf32>
    %c53 = arith.constant 53 : index
    %290 = memref.load %arg3[%c53] : memref<108xf32, #tpu.memory_space<smem>>
    %291 = vector.broadcast %290 : f32 to vector<8x128xf32>
    %292 = arith.mulf %291, %4 : vector<8x128xf32>
    %293 = arith.addf %289, %292 : vector<8x128xf32>
    %c57 = arith.constant 57 : index
    %294 = memref.load %arg3[%c57] : memref<108xf32, #tpu.memory_space<smem>>
    %295 = vector.broadcast %294 : f32 to vector<8x128xf32>
    %296 = arith.mulf %295, %6 : vector<8x128xf32>
    %297 = arith.addf %293, %296 : vector<8x128xf32>
    %298 = arith.addf %250, %297 : vector<8x128xf32>
    %c50 = arith.constant 50 : index
    %299 = memref.load %arg3[%c50] : memref<108xf32, #tpu.memory_space<smem>>
    %300 = vector.broadcast %299 : f32 to vector<8x128xf32>
    %301 = arith.mulf %300, %2 : vector<8x128xf32>
    %c54 = arith.constant 54 : index
    %302 = memref.load %arg3[%c54] : memref<108xf32, #tpu.memory_space<smem>>
    %303 = vector.broadcast %302 : f32 to vector<8x128xf32>
    %304 = arith.mulf %303, %4 : vector<8x128xf32>
    %305 = arith.addf %301, %304 : vector<8x128xf32>
    %c58 = arith.constant 58 : index
    %306 = memref.load %arg3[%c58] : memref<108xf32, #tpu.memory_space<smem>>
    %307 = vector.broadcast %306 : f32 to vector<8x128xf32>
    %308 = arith.mulf %307, %6 : vector<8x128xf32>
    %309 = arith.addf %305, %308 : vector<8x128xf32>
    %310 = arith.addf %262, %309 : vector<8x128xf32>
    %c51 = arith.constant 51 : index
    %311 = memref.load %arg3[%c51] : memref<108xf32, #tpu.memory_space<smem>>
    %312 = vector.broadcast %311 : f32 to vector<8x128xf32>
    %313 = arith.mulf %312, %2 : vector<8x128xf32>
    %c55 = arith.constant 55 : index
    %314 = memref.load %arg3[%c55] : memref<108xf32, #tpu.memory_space<smem>>
    %315 = vector.broadcast %314 : f32 to vector<8x128xf32>
    %316 = arith.mulf %315, %4 : vector<8x128xf32>
    %317 = arith.addf %313, %316 : vector<8x128xf32>
    %c59 = arith.constant 59 : index
    %318 = memref.load %arg3[%c59] : memref<108xf32, #tpu.memory_space<smem>>
    %319 = vector.broadcast %318 : f32 to vector<8x128xf32>
    %320 = arith.mulf %319, %6 : vector<8x128xf32>
    %321 = arith.addf %317, %320 : vector<8x128xf32>
    %322 = arith.addf %274, %321 : vector<8x128xf32>
    %c5_53 = arith.constant 5 : index
    %c0_54 = arith.constant 0 : index
    %c0_55 = arith.constant 0 : index
    %323 = vector.load %arg2[%c5_53, %c0_54, %c0_55] : memref<9x8x128xf32, #tpu.memory_space<vmem>>, vector<1x8x128xf32>
    %324 = vector.shape_cast %323 : vector<1x8x128xf32> to vector<8x128xf32>
    %c127_i32 = arith.constant 127 : i32
    %325 = tpu.dynamic_rotate %2 by %c127_i32 dim 1 : vector<8x128xf32>, i32 -> vector<8x128xf32>
    %c7_i32 = arith.constant 7 : i32
    %326 = tpu.dynamic_rotate %325 by %c7_i32 dim 0 : vector<8x128xf32>, i32 -> vector<8x128xf32>
    %c127_i32_56 = arith.constant 127 : i32
    %327 = vector.broadcast %c127_i32_56 : i32 to vector<8x128xi32>
    %328 = arith.cmpi slt, %0, %327 : vector<8x128xi32>
    %329 = arith.select %328, %325, %326 : vector<8x128xi1>, vector<8x128xf32>
    %330 = arith.mulf %329, %324 : vector<8x128xf32>
    %c127_i32_57 = arith.constant 127 : i32
    %331 = tpu.dynamic_rotate %4 by %c127_i32_57 dim 1 : vector<8x128xf32>, i32 -> vector<8x128xf32>
    %c7_i32_58 = arith.constant 7 : i32
    %332 = tpu.dynamic_rotate %331 by %c7_i32_58 dim 0 : vector<8x128xf32>, i32 -> vector<8x128xf32>
    %c127_i32_59 = arith.constant 127 : i32
    %333 = vector.broadcast %c127_i32_59 : i32 to vector<8x128xi32>
    %334 = arith.cmpi slt, %0, %333 : vector<8x128xi32>
    %335 = arith.select %334, %331, %332 : vector<8x128xi1>, vector<8x128xf32>
    %336 = arith.mulf %335, %324 : vector<8x128xf32>
    %c127_i32_60 = arith.constant 127 : i32
    %337 = tpu.dynamic_rotate %6 by %c127_i32_60 dim 1 : vector<8x128xf32>, i32 -> vector<8x128xf32>
    %c7_i32_61 = arith.constant 7 : i32
    %338 = tpu.dynamic_rotate %337 by %c7_i32_61 dim 0 : vector<8x128xf32>, i32 -> vector<8x128xf32>
    %c127_i32_62 = arith.constant 127 : i32
    %339 = vector.broadcast %c127_i32_62 : i32 to vector<8x128xi32>
    %340 = arith.cmpi slt, %0, %339 : vector<8x128xi32>
    %341 = arith.select %340, %337, %338 : vector<8x128xi1>, vector<8x128xf32>
    %342 = arith.mulf %341, %324 : vector<8x128xf32>
    %c60 = arith.constant 60 : index
    %343 = memref.load %arg3[%c60] : memref<108xf32, #tpu.memory_space<smem>>
    %344 = vector.broadcast %343 : f32 to vector<8x128xf32>
    %345 = arith.mulf %344, %330 : vector<8x128xf32>
    %c64 = arith.constant 64 : index
    %346 = memref.load %arg3[%c64] : memref<108xf32, #tpu.memory_space<smem>>
    %347 = vector.broadcast %346 : f32 to vector<8x128xf32>
    %348 = arith.mulf %347, %336 : vector<8x128xf32>
    %349 = arith.addf %345, %348 : vector<8x128xf32>
    %c68 = arith.constant 68 : index
    %350 = memref.load %arg3[%c68] : memref<108xf32, #tpu.memory_space<smem>>
    %351 = vector.broadcast %350 : f32 to vector<8x128xf32>
    %352 = arith.mulf %351, %342 : vector<8x128xf32>
    %353 = arith.addf %349, %352 : vector<8x128xf32>
    %354 = arith.addf %286, %353 : vector<8x128xf32>
    %c61 = arith.constant 61 : index
    %355 = memref.load %arg3[%c61] : memref<108xf32, #tpu.memory_space<smem>>
    %356 = vector.broadcast %355 : f32 to vector<8x128xf32>
    %357 = arith.mulf %356, %330 : vector<8x128xf32>
    %c65 = arith.constant 65 : index
    %358 = memref.load %arg3[%c65] : memref<108xf32, #tpu.memory_space<smem>>
    %359 = vector.broadcast %358 : f32 to vector<8x128xf32>
    %360 = arith.mulf %359, %336 : vector<8x128xf32>
    %361 = arith.addf %357, %360 : vector<8x128xf32>
    %c69 = arith.constant 69 : index
    %362 = memref.load %arg3[%c69] : memref<108xf32, #tpu.memory_space<smem>>
    %363 = vector.broadcast %362 : f32 to vector<8x128xf32>
    %364 = arith.mulf %363, %342 : vector<8x128xf32>
    %365 = arith.addf %361, %364 : vector<8x128xf32>
    %366 = arith.addf %298, %365 : vector<8x128xf32>
    %c62 = arith.constant 62 : index
    %367 = memref.load %arg3[%c62] : memref<108xf32, #tpu.memory_space<smem>>
    %368 = vector.broadcast %367 : f32 to vector<8x128xf32>
    %369 = arith.mulf %368, %330 : vector<8x128xf32>
    %c66 = arith.constant 66 : index
    %370 = memref.load %arg3[%c66] : memref<108xf32, #tpu.memory_space<smem>>
    %371 = vector.broadcast %370 : f32 to vector<8x128xf32>
    %372 = arith.mulf %371, %336 : vector<8x128xf32>
    %373 = arith.addf %369, %372 : vector<8x128xf32>
    %c70 = arith.constant 70 : index
    %374 = memref.load %arg3[%c70] : memref<108xf32, #tpu.memory_space<smem>>
    %375 = vector.broadcast %374 : f32 to vector<8x128xf32>
    %376 = arith.mulf %375, %342 : vector<8x128xf32>
    %377 = arith.addf %373, %376 : vector<8x128xf32>
    %378 = arith.addf %310, %377 : vector<8x128xf32>
    %c63 = arith.constant 63 : index
    %379 = memref.load %arg3[%c63] : memref<108xf32, #tpu.memory_space<smem>>
    %380 = vector.broadcast %379 : f32 to vector<8x128xf32>
    %381 = arith.mulf %380, %330 : vector<8x128xf32>
    %c67 = arith.constant 67 : index
    %382 = memref.load %arg3[%c67] : memref<108xf32, #tpu.memory_space<smem>>
    %383 = vector.broadcast %382 : f32 to vector<8x128xf32>
    %384 = arith.mulf %383, %336 : vector<8x128xf32>
    %385 = arith.addf %381, %384 : vector<8x128xf32>
    %c71 = arith.constant 71 : index
    %386 = memref.load %arg3[%c71] : memref<108xf32, #tpu.memory_space<smem>>
    %387 = vector.broadcast %386 : f32 to vector<8x128xf32>
    %388 = arith.mulf %387, %342 : vector<8x128xf32>
    %389 = arith.addf %385, %388 : vector<8x128xf32>
    %390 = arith.addf %322, %389 : vector<8x128xf32>
    %c6_63 = arith.constant 6 : index
    %c0_64 = arith.constant 0 : index
    %c0_65 = arith.constant 0 : index
    %391 = vector.load %arg2[%c6_63, %c0_64, %c0_65] : memref<9x8x128xf32, #tpu.memory_space<vmem>>, vector<1x8x128xf32>
    %392 = vector.shape_cast %391 : vector<1x8x128xf32> to vector<8x128xf32>
    %c113_i32 = arith.constant 113 : i32
    %393 = tpu.dynamic_rotate %2 by %c113_i32 dim 1 : vector<8x128xf32>, i32 -> vector<8x128xf32>
    %c7_i32_66 = arith.constant 7 : i32
    %394 = tpu.dynamic_rotate %393 by %c7_i32_66 dim 0 : vector<8x128xf32>, i32 -> vector<8x128xf32>
    %c113_i32_67 = arith.constant 113 : i32
    %395 = vector.broadcast %c113_i32_67 : i32 to vector<8x128xi32>
    %396 = arith.cmpi slt, %0, %395 : vector<8x128xi32>
    %397 = arith.select %396, %393, %394 : vector<8x128xi1>, vector<8x128xf32>
    %398 = arith.mulf %397, %392 : vector<8x128xf32>
    %c113_i32_68 = arith.constant 113 : i32
    %399 = tpu.dynamic_rotate %4 by %c113_i32_68 dim 1 : vector<8x128xf32>, i32 -> vector<8x128xf32>
    %c7_i32_69 = arith.constant 7 : i32
    %400 = tpu.dynamic_rotate %399 by %c7_i32_69 dim 0 : vector<8x128xf32>, i32 -> vector<8x128xf32>
    %c113_i32_70 = arith.constant 113 : i32
    %401 = vector.broadcast %c113_i32_70 : i32 to vector<8x128xi32>
    %402 = arith.cmpi slt, %0, %401 : vector<8x128xi32>
    %403 = arith.select %402, %399, %400 : vector<8x128xi1>, vector<8x128xf32>
    %404 = arith.mulf %403, %392 : vector<8x128xf32>
    %c113_i32_71 = arith.constant 113 : i32
    %405 = tpu.dynamic_rotate %6 by %c113_i32_71 dim 1 : vector<8x128xf32>, i32 -> vector<8x128xf32>
    %c7_i32_72 = arith.constant 7 : i32
    %406 = tpu.dynamic_rotate %405 by %c7_i32_72 dim 0 : vector<8x128xf32>, i32 -> vector<8x128xf32>
    %c113_i32_73 = arith.constant 113 : i32
    %407 = vector.broadcast %c113_i32_73 : i32 to vector<8x128xi32>
    %408 = arith.cmpi slt, %0, %407 : vector<8x128xi32>
    %409 = arith.select %408, %405, %406 : vector<8x128xi1>, vector<8x128xf32>
    %410 = arith.mulf %409, %392 : vector<8x128xf32>
    %c72 = arith.constant 72 : index
    %411 = memref.load %arg3[%c72] : memref<108xf32, #tpu.memory_space<smem>>
    %412 = vector.broadcast %411 : f32 to vector<8x128xf32>
    %413 = arith.mulf %412, %398 : vector<8x128xf32>
    %c76 = arith.constant 76 : index
    %414 = memref.load %arg3[%c76] : memref<108xf32, #tpu.memory_space<smem>>
    %415 = vector.broadcast %414 : f32 to vector<8x128xf32>
    %416 = arith.mulf %415, %404 : vector<8x128xf32>
    %417 = arith.addf %413, %416 : vector<8x128xf32>
    %c80 = arith.constant 80 : index
    %418 = memref.load %arg3[%c80] : memref<108xf32, #tpu.memory_space<smem>>
    %419 = vector.broadcast %418 : f32 to vector<8x128xf32>
    %420 = arith.mulf %419, %410 : vector<8x128xf32>
    %421 = arith.addf %417, %420 : vector<8x128xf32>
    %422 = arith.addf %354, %421 : vector<8x128xf32>
    %c73 = arith.constant 73 : index
    %423 = memref.load %arg3[%c73] : memref<108xf32, #tpu.memory_space<smem>>
    %424 = vector.broadcast %423 : f32 to vector<8x128xf32>
    %425 = arith.mulf %424, %398 : vector<8x128xf32>
    %c77 = arith.constant 77 : index
    %426 = memref.load %arg3[%c77] : memref<108xf32, #tpu.memory_space<smem>>
    %427 = vector.broadcast %426 : f32 to vector<8x128xf32>
    %428 = arith.mulf %427, %404 : vector<8x128xf32>
    %429 = arith.addf %425, %428 : vector<8x128xf32>
    %c81 = arith.constant 81 : index
    %430 = memref.load %arg3[%c81] : memref<108xf32, #tpu.memory_space<smem>>
    %431 = vector.broadcast %430 : f32 to vector<8x128xf32>
    %432 = arith.mulf %431, %410 : vector<8x128xf32>
    %433 = arith.addf %429, %432 : vector<8x128xf32>
    %434 = arith.addf %366, %433 : vector<8x128xf32>
    %c74 = arith.constant 74 : index
    %435 = memref.load %arg3[%c74] : memref<108xf32, #tpu.memory_space<smem>>
    %436 = vector.broadcast %435 : f32 to vector<8x128xf32>
    %437 = arith.mulf %436, %398 : vector<8x128xf32>
    %c78 = arith.constant 78 : index
    %438 = memref.load %arg3[%c78] : memref<108xf32, #tpu.memory_space<smem>>
    %439 = vector.broadcast %438 : f32 to vector<8x128xf32>
    %440 = arith.mulf %439, %404 : vector<8x128xf32>
    %441 = arith.addf %437, %440 : vector<8x128xf32>
    %c82 = arith.constant 82 : index
    %442 = memref.load %arg3[%c82] : memref<108xf32, #tpu.memory_space<smem>>
    %443 = vector.broadcast %442 : f32 to vector<8x128xf32>
    %444 = arith.mulf %443, %410 : vector<8x128xf32>
    %445 = arith.addf %441, %444 : vector<8x128xf32>
    %446 = arith.addf %378, %445 : vector<8x128xf32>
    %c75 = arith.constant 75 : index
    %447 = memref.load %arg3[%c75] : memref<108xf32, #tpu.memory_space<smem>>
    %448 = vector.broadcast %447 : f32 to vector<8x128xf32>
    %449 = arith.mulf %448, %398 : vector<8x128xf32>
    %c79 = arith.constant 79 : index
    %450 = memref.load %arg3[%c79] : memref<108xf32, #tpu.memory_space<smem>>
    %451 = vector.broadcast %450 : f32 to vector<8x128xf32>
    %452 = arith.mulf %451, %404 : vector<8x128xf32>
    %453 = arith.addf %449, %452 : vector<8x128xf32>
    %c83 = arith.constant 83 : index
    %454 = memref.load %arg3[%c83] : memref<108xf32, #tpu.memory_space<smem>>
    %455 = vector.broadcast %454 : f32 to vector<8x128xf32>
    %456 = arith.mulf %455, %410 : vector<8x128xf32>
    %457 = arith.addf %453, %456 : vector<8x128xf32>
    %458 = arith.addf %390, %457 : vector<8x128xf32>
    %c7_74 = arith.constant 7 : index
    %c0_75 = arith.constant 0 : index
    %c0_76 = arith.constant 0 : index
    %459 = vector.load %arg2[%c7_74, %c0_75, %c0_76] : memref<9x8x128xf32, #tpu.memory_space<vmem>>, vector<1x8x128xf32>
    %460 = vector.shape_cast %459 : vector<1x8x128xf32> to vector<8x128xf32>
    %c112_i32 = arith.constant 112 : i32
    %461 = tpu.dynamic_rotate %2 by %c112_i32 dim 1 : vector<8x128xf32>, i32 -> vector<8x128xf32>
    %c7_i32_77 = arith.constant 7 : i32
    %462 = tpu.dynamic_rotate %461 by %c7_i32_77 dim 0 : vector<8x128xf32>, i32 -> vector<8x128xf32>
    %c112_i32_78 = arith.constant 112 : i32
    %463 = vector.broadcast %c112_i32_78 : i32 to vector<8x128xi32>
    %464 = arith.cmpi slt, %0, %463 : vector<8x128xi32>
    %465 = arith.select %464, %461, %462 : vector<8x128xi1>, vector<8x128xf32>
    %466 = arith.mulf %465, %460 : vector<8x128xf32>
    %c112_i32_79 = arith.constant 112 : i32
    %467 = tpu.dynamic_rotate %4 by %c112_i32_79 dim 1 : vector<8x128xf32>, i32 -> vector<8x128xf32>
    %c7_i32_80 = arith.constant 7 : i32
    %468 = tpu.dynamic_rotate %467 by %c7_i32_80 dim 0 : vector<8x128xf32>, i32 -> vector<8x128xf32>
    %c112_i32_81 = arith.constant 112 : i32
    %469 = vector.broadcast %c112_i32_81 : i32 to vector<8x128xi32>
    %470 = arith.cmpi slt, %0, %469 : vector<8x128xi32>
    %471 = arith.select %470, %467, %468 : vector<8x128xi1>, vector<8x128xf32>
    %472 = arith.mulf %471, %460 : vector<8x128xf32>
    %c112_i32_82 = arith.constant 112 : i32
    %473 = tpu.dynamic_rotate %6 by %c112_i32_82 dim 1 : vector<8x128xf32>, i32 -> vector<8x128xf32>
    %c7_i32_83 = arith.constant 7 : i32
    %474 = tpu.dynamic_rotate %473 by %c7_i32_83 dim 0 : vector<8x128xf32>, i32 -> vector<8x128xf32>
    %c112_i32_84 = arith.constant 112 : i32
    %475 = vector.broadcast %c112_i32_84 : i32 to vector<8x128xi32>
    %476 = arith.cmpi slt, %0, %475 : vector<8x128xi32>
    %477 = arith.select %476, %473, %474 : vector<8x128xi1>, vector<8x128xf32>
    %478 = arith.mulf %477, %460 : vector<8x128xf32>
    %c84 = arith.constant 84 : index
    %479 = memref.load %arg3[%c84] : memref<108xf32, #tpu.memory_space<smem>>
    %480 = vector.broadcast %479 : f32 to vector<8x128xf32>
    %481 = arith.mulf %480, %466 : vector<8x128xf32>
    %c88 = arith.constant 88 : index
    %482 = memref.load %arg3[%c88] : memref<108xf32, #tpu.memory_space<smem>>
    %483 = vector.broadcast %482 : f32 to vector<8x128xf32>
    %484 = arith.mulf %483, %472 : vector<8x128xf32>
    %485 = arith.addf %481, %484 : vector<8x128xf32>
    %c92 = arith.constant 92 : index
    %486 = memref.load %arg3[%c92] : memref<108xf32, #tpu.memory_space<smem>>
    %487 = vector.broadcast %486 : f32 to vector<8x128xf32>
    %488 = arith.mulf %487, %478 : vector<8x128xf32>
    %489 = arith.addf %485, %488 : vector<8x128xf32>
    %490 = arith.addf %422, %489 : vector<8x128xf32>
    %c85 = arith.constant 85 : index
    %491 = memref.load %arg3[%c85] : memref<108xf32, #tpu.memory_space<smem>>
    %492 = vector.broadcast %491 : f32 to vector<8x128xf32>
    %493 = arith.mulf %492, %466 : vector<8x128xf32>
    %c89 = arith.constant 89 : index
    %494 = memref.load %arg3[%c89] : memref<108xf32, #tpu.memory_space<smem>>
    %495 = vector.broadcast %494 : f32 to vector<8x128xf32>
    %496 = arith.mulf %495, %472 : vector<8x128xf32>
    %497 = arith.addf %493, %496 : vector<8x128xf32>
    %c93 = arith.constant 93 : index
    %498 = memref.load %arg3[%c93] : memref<108xf32, #tpu.memory_space<smem>>
    %499 = vector.broadcast %498 : f32 to vector<8x128xf32>
    %500 = arith.mulf %499, %478 : vector<8x128xf32>
    %501 = arith.addf %497, %500 : vector<8x128xf32>
    %502 = arith.addf %434, %501 : vector<8x128xf32>
    %c86 = arith.constant 86 : index
    %503 = memref.load %arg3[%c86] : memref<108xf32, #tpu.memory_space<smem>>
    %504 = vector.broadcast %503 : f32 to vector<8x128xf32>
    %505 = arith.mulf %504, %466 : vector<8x128xf32>
    %c90 = arith.constant 90 : index
    %506 = memref.load %arg3[%c90] : memref<108xf32, #tpu.memory_space<smem>>
    %507 = vector.broadcast %506 : f32 to vector<8x128xf32>
    %508 = arith.mulf %507, %472 : vector<8x128xf32>
    %509 = arith.addf %505, %508 : vector<8x128xf32>
    %c94 = arith.constant 94 : index
    %510 = memref.load %arg3[%c94] : memref<108xf32, #tpu.memory_space<smem>>
    %511 = vector.broadcast %510 : f32 to vector<8x128xf32>
    %512 = arith.mulf %511, %478 : vector<8x128xf32>
    %513 = arith.addf %509, %512 : vector<8x128xf32>
    %514 = arith.addf %446, %513 : vector<8x128xf32>
    %c87 = arith.constant 87 : index
    %515 = memref.load %arg3[%c87] : memref<108xf32, #tpu.memory_space<smem>>
    %516 = vector.broadcast %515 : f32 to vector<8x128xf32>
    %517 = arith.mulf %516, %466 : vector<8x128xf32>
    %c91 = arith.constant 91 : index
    %518 = memref.load %arg3[%c91] : memref<108xf32, #tpu.memory_space<smem>>
    %519 = vector.broadcast %518 : f32 to vector<8x128xf32>
    %520 = arith.mulf %519, %472 : vector<8x128xf32>
    %521 = arith.addf %517, %520 : vector<8x128xf32>
    %c95 = arith.constant 95 : index
    %522 = memref.load %arg3[%c95] : memref<108xf32, #tpu.memory_space<smem>>
    %523 = vector.broadcast %522 : f32 to vector<8x128xf32>
    %524 = arith.mulf %523, %478 : vector<8x128xf32>
    %525 = arith.addf %521, %524 : vector<8x128xf32>
    %526 = arith.addf %458, %525 : vector<8x128xf32>
    %c8_85 = arith.constant 8 : index
    %c0_86 = arith.constant 0 : index
    %c0_87 = arith.constant 0 : index
    %527 = vector.load %arg2[%c8_85, %c0_86, %c0_87] : memref<9x8x128xf32, #tpu.memory_space<vmem>>, vector<1x8x128xf32>
    %528 = vector.shape_cast %527 : vector<1x8x128xf32> to vector<8x128xf32>
    %c111_i32 = arith.constant 111 : i32
    %529 = tpu.dynamic_rotate %2 by %c111_i32 dim 1 : vector<8x128xf32>, i32 -> vector<8x128xf32>
    %c7_i32_88 = arith.constant 7 : i32
    %530 = tpu.dynamic_rotate %529 by %c7_i32_88 dim 0 : vector<8x128xf32>, i32 -> vector<8x128xf32>
    %c111_i32_89 = arith.constant 111 : i32
    %531 = vector.broadcast %c111_i32_89 : i32 to vector<8x128xi32>
    %532 = arith.cmpi slt, %0, %531 : vector<8x128xi32>
    %533 = arith.select %532, %529, %530 : vector<8x128xi1>, vector<8x128xf32>
    %534 = arith.mulf %533, %528 : vector<8x128xf32>
    %c111_i32_90 = arith.constant 111 : i32
    %535 = tpu.dynamic_rotate %4 by %c111_i32_90 dim 1 : vector<8x128xf32>, i32 -> vector<8x128xf32>
    %c7_i32_91 = arith.constant 7 : i32
    %536 = tpu.dynamic_rotate %535 by %c7_i32_91 dim 0 : vector<8x128xf32>, i32 -> vector<8x128xf32>
    %c111_i32_92 = arith.constant 111 : i32
    %537 = vector.broadcast %c111_i32_92 : i32 to vector<8x128xi32>
    %538 = arith.cmpi slt, %0, %537 : vector<8x128xi32>
    %539 = arith.select %538, %535, %536 : vector<8x128xi1>, vector<8x128xf32>
    %540 = arith.mulf %539, %528 : vector<8x128xf32>
    %c111_i32_93 = arith.constant 111 : i32
    %541 = tpu.dynamic_rotate %6 by %c111_i32_93 dim 1 : vector<8x128xf32>, i32 -> vector<8x128xf32>
    %c7_i32_94 = arith.constant 7 : i32
    %542 = tpu.dynamic_rotate %541 by %c7_i32_94 dim 0 : vector<8x128xf32>, i32 -> vector<8x128xf32>
    %c111_i32_95 = arith.constant 111 : i32
    %543 = vector.broadcast %c111_i32_95 : i32 to vector<8x128xi32>
    %544 = arith.cmpi slt, %0, %543 : vector<8x128xi32>
    %545 = arith.select %544, %541, %542 : vector<8x128xi1>, vector<8x128xf32>
    %546 = arith.mulf %545, %528 : vector<8x128xf32>
    %c96 = arith.constant 96 : index
    %547 = memref.load %arg3[%c96] : memref<108xf32, #tpu.memory_space<smem>>
    %548 = vector.broadcast %547 : f32 to vector<8x128xf32>
    %549 = arith.mulf %548, %534 : vector<8x128xf32>
    %c100 = arith.constant 100 : index
    %550 = memref.load %arg3[%c100] : memref<108xf32, #tpu.memory_space<smem>>
    %551 = vector.broadcast %550 : f32 to vector<8x128xf32>
    %552 = arith.mulf %551, %540 : vector<8x128xf32>
    %553 = arith.addf %549, %552 : vector<8x128xf32>
    %c104 = arith.constant 104 : index
    %554 = memref.load %arg3[%c104] : memref<108xf32, #tpu.memory_space<smem>>
    %555 = vector.broadcast %554 : f32 to vector<8x128xf32>
    %556 = arith.mulf %555, %546 : vector<8x128xf32>
    %557 = arith.addf %553, %556 : vector<8x128xf32>
    %558 = arith.addf %490, %557 : vector<8x128xf32>
    %c97 = arith.constant 97 : index
    %559 = memref.load %arg3[%c97] : memref<108xf32, #tpu.memory_space<smem>>
    %560 = vector.broadcast %559 : f32 to vector<8x128xf32>
    %561 = arith.mulf %560, %534 : vector<8x128xf32>
    %c101 = arith.constant 101 : index
    %562 = memref.load %arg3[%c101] : memref<108xf32, #tpu.memory_space<smem>>
    %563 = vector.broadcast %562 : f32 to vector<8x128xf32>
    %564 = arith.mulf %563, %540 : vector<8x128xf32>
    %565 = arith.addf %561, %564 : vector<8x128xf32>
    %c105 = arith.constant 105 : index
    %566 = memref.load %arg3[%c105] : memref<108xf32, #tpu.memory_space<smem>>
    %567 = vector.broadcast %566 : f32 to vector<8x128xf32>
    %568 = arith.mulf %567, %546 : vector<8x128xf32>
    %569 = arith.addf %565, %568 : vector<8x128xf32>
    %570 = arith.addf %502, %569 : vector<8x128xf32>
    %c98 = arith.constant 98 : index
    %571 = memref.load %arg3[%c98] : memref<108xf32, #tpu.memory_space<smem>>
    %572 = vector.broadcast %571 : f32 to vector<8x128xf32>
    %573 = arith.mulf %572, %534 : vector<8x128xf32>
    %c102 = arith.constant 102 : index
    %574 = memref.load %arg3[%c102] : memref<108xf32, #tpu.memory_space<smem>>
    %575 = vector.broadcast %574 : f32 to vector<8x128xf32>
    %576 = arith.mulf %575, %540 : vector<8x128xf32>
    %577 = arith.addf %573, %576 : vector<8x128xf32>
    %c106 = arith.constant 106 : index
    %578 = memref.load %arg3[%c106] : memref<108xf32, #tpu.memory_space<smem>>
    %579 = vector.broadcast %578 : f32 to vector<8x128xf32>
    %580 = arith.mulf %579, %546 : vector<8x128xf32>
    %581 = arith.addf %577, %580 : vector<8x128xf32>
    %582 = arith.addf %514, %581 : vector<8x128xf32>
    %c99 = arith.constant 99 : index
    %583 = memref.load %arg3[%c99] : memref<108xf32, #tpu.memory_space<smem>>
    %584 = vector.broadcast %583 : f32 to vector<8x128xf32>
    %585 = arith.mulf %584, %534 : vector<8x128xf32>
    %c103 = arith.constant 103 : index
    %586 = memref.load %arg3[%c103] : memref<108xf32, #tpu.memory_space<smem>>
    %587 = vector.broadcast %586 : f32 to vector<8x128xf32>
    %588 = arith.mulf %587, %540 : vector<8x128xf32>
    %589 = arith.addf %585, %588 : vector<8x128xf32>
    %c107 = arith.constant 107 : index
    %590 = memref.load %arg3[%c107] : memref<108xf32, #tpu.memory_space<smem>>
    %591 = vector.broadcast %590 : f32 to vector<8x128xf32>
    %592 = arith.mulf %591, %546 : vector<8x128xf32>
    %593 = arith.addf %589, %592 : vector<8x128xf32>
    %594 = arith.addf %526, %593 : vector<8x128xf32>
    %c0_96 = arith.constant 0 : index
    %595 = memref.load %arg4[%c0_96] : memref<4xf32, #tpu.memory_space<smem>>
    %596 = vector.broadcast %595 : f32 to vector<8x128xf32>
    %597 = arith.addf %558, %596 : vector<8x128xf32>
    %cst = arith.constant 0.000000e+00 : f32
    %598 = vector.broadcast %cst : f32 to vector<8x128xf32>
    %599 = arith.cmpf ogt, %597, %598 : vector<8x128xf32>
    %cst_97 = arith.constant 0.00999999977 : f32
    %600 = vector.broadcast %cst_97 : f32 to vector<8x128xf32>
    %601 = arith.mulf %600, %597 : vector<8x128xf32>
    %602 = arith.select %599, %597, %601 : vector<8x128xi1>, vector<8x128xf32>
    %c1_98 = arith.constant 1 : index
    %603 = memref.load %arg4[%c1_98] : memref<4xf32, #tpu.memory_space<smem>>
    %604 = vector.broadcast %603 : f32 to vector<8x128xf32>
    %605 = arith.addf %570, %604 : vector<8x128xf32>
    %cst_99 = arith.constant 0.000000e+00 : f32
    %606 = vector.broadcast %cst_99 : f32 to vector<8x128xf32>
    %607 = arith.cmpf ogt, %605, %606 : vector<8x128xf32>
    %cst_100 = arith.constant 0.00999999977 : f32
    %608 = vector.broadcast %cst_100 : f32 to vector<8x128xf32>
    %609 = arith.mulf %608, %605 : vector<8x128xf32>
    %610 = arith.select %607, %605, %609 : vector<8x128xi1>, vector<8x128xf32>
    %c2_101 = arith.constant 2 : index
    %611 = memref.load %arg4[%c2_101] : memref<4xf32, #tpu.memory_space<smem>>
    %612 = vector.broadcast %611 : f32 to vector<8x128xf32>
    %613 = arith.addf %582, %612 : vector<8x128xf32>
    %cst_102 = arith.constant 0.000000e+00 : f32
    %614 = vector.broadcast %cst_102 : f32 to vector<8x128xf32>
    %615 = arith.cmpf ogt, %613, %614 : vector<8x128xf32>
    %cst_103 = arith.constant 0.00999999977 : f32
    %616 = vector.broadcast %cst_103 : f32 to vector<8x128xf32>
    %617 = arith.mulf %616, %613 : vector<8x128xf32>
    %618 = arith.select %615, %613, %617 : vector<8x128xi1>, vector<8x128xf32>
    %c3_104 = arith.constant 3 : index
    %619 = memref.load %arg4[%c3_104] : memref<4xf32, #tpu.memory_space<smem>>
    %620 = vector.broadcast %619 : f32 to vector<8x128xf32>
    %621 = arith.addf %594, %620 : vector<8x128xf32>
    %cst_105 = arith.constant 0.000000e+00 : f32
    %622 = vector.broadcast %cst_105 : f32 to vector<8x128xf32>
    %623 = arith.cmpf ogt, %621, %622 : vector<8x128xf32>
    %cst_106 = arith.constant 0.00999999977 : f32
    %624 = vector.broadcast %cst_106 : f32 to vector<8x128xf32>
    %625 = arith.mulf %624, %621 : vector<8x128xf32>
    %626 = arith.select %623, %621, %625 : vector<8x128xi1>, vector<8x128xf32>
    %c0_107 = arith.constant 0 : index
    %c0_108 = arith.constant 0 : index
    %c0_109 = arith.constant 0 : index
    %627 = vector.load %arg2[%c0_107, %c0_108, %c0_109] : memref<9x8x128xf32, #tpu.memory_space<vmem>>, vector<1x8x128xf32>
    %628 = vector.shape_cast %627 : vector<1x8x128xf32> to vector<8x128xf32>
    %c17_i32_110 = arith.constant 17 : i32
    %629 = tpu.dynamic_rotate %602 by %c17_i32_110 dim 1 : vector<8x128xf32>, i32 -> vector<8x128xf32>
    %c1_i32_111 = arith.constant 1 : i32
    %630 = tpu.dynamic_rotate %629 by %c1_i32_111 dim 0 : vector<8x128xf32>, i32 -> vector<8x128xf32>
    %c17_i32_112 = arith.constant 17 : i32
    %631 = vector.broadcast %c17_i32_112 : i32 to vector<8x128xi32>
    %632 = arith.cmpi sge, %0, %631 : vector<8x128xi32>
    %633 = arith.select %632, %629, %630 : vector<8x128xi1>, vector<8x128xf32>
    %634 = arith.mulf %633, %628 : vector<8x128xf32>
    %c17_i32_113 = arith.constant 17 : i32
    %635 = tpu.dynamic_rotate %610 by %c17_i32_113 dim 1 : vector<8x128xf32>, i32 -> vector<8x128xf32>
    %c1_i32_114 = arith.constant 1 : i32
    %636 = tpu.dynamic_rotate %635 by %c1_i32_114 dim 0 : vector<8x128xf32>, i32 -> vector<8x128xf32>
    %c17_i32_115 = arith.constant 17 : i32
    %637 = vector.broadcast %c17_i32_115 : i32 to vector<8x128xi32>
    %638 = arith.cmpi sge, %0, %637 : vector<8x128xi32>
    %639 = arith.select %638, %635, %636 : vector<8x128xi1>, vector<8x128xf32>
    %640 = arith.mulf %639, %628 : vector<8x128xf32>
    %c17_i32_116 = arith.constant 17 : i32
    %641 = tpu.dynamic_rotate %618 by %c17_i32_116 dim 1 : vector<8x128xf32>, i32 -> vector<8x128xf32>
    %c1_i32_117 = arith.constant 1 : i32
    %642 = tpu.dynamic_rotate %641 by %c1_i32_117 dim 0 : vector<8x128xf32>, i32 -> vector<8x128xf32>
    %c17_i32_118 = arith.constant 17 : i32
    %643 = vector.broadcast %c17_i32_118 : i32 to vector<8x128xi32>
    %644 = arith.cmpi sge, %0, %643 : vector<8x128xi32>
    %645 = arith.select %644, %641, %642 : vector<8x128xi1>, vector<8x128xf32>
    %646 = arith.mulf %645, %628 : vector<8x128xf32>
    %c17_i32_119 = arith.constant 17 : i32
    %647 = tpu.dynamic_rotate %626 by %c17_i32_119 dim 1 : vector<8x128xf32>, i32 -> vector<8x128xf32>
    %c1_i32_120 = arith.constant 1 : i32
    %648 = tpu.dynamic_rotate %647 by %c1_i32_120 dim 0 : vector<8x128xf32>, i32 -> vector<8x128xf32>
    %c17_i32_121 = arith.constant 17 : i32
    %649 = vector.broadcast %c17_i32_121 : i32 to vector<8x128xi32>
    %650 = arith.cmpi sge, %0, %649 : vector<8x128xi32>
    %651 = arith.select %650, %647, %648 : vector<8x128xi1>, vector<8x128xf32>
    %652 = arith.mulf %651, %628 : vector<8x128xf32>
    %c0_122 = arith.constant 0 : index
    %653 = memref.load %arg5[%c0_122] : memref<144xf32, #tpu.memory_space<smem>>
    %654 = vector.broadcast %653 : f32 to vector<8x128xf32>
    %655 = arith.mulf %654, %634 : vector<8x128xf32>
    %c4_123 = arith.constant 4 : index
    %656 = memref.load %arg5[%c4_123] : memref<144xf32, #tpu.memory_space<smem>>
    %657 = vector.broadcast %656 : f32 to vector<8x128xf32>
    %658 = arith.mulf %657, %640 : vector<8x128xf32>
    %659 = arith.addf %655, %658 : vector<8x128xf32>
    %c8_124 = arith.constant 8 : index
    %660 = memref.load %arg5[%c8_124] : memref<144xf32, #tpu.memory_space<smem>>
    %661 = vector.broadcast %660 : f32 to vector<8x128xf32>
    %662 = arith.mulf %661, %646 : vector<8x128xf32>
    %663 = arith.addf %659, %662 : vector<8x128xf32>
    %c12_125 = arith.constant 12 : index
    %664 = memref.load %arg5[%c12_125] : memref<144xf32, #tpu.memory_space<smem>>
    %665 = vector.broadcast %664 : f32 to vector<8x128xf32>
    %666 = arith.mulf %665, %652 : vector<8x128xf32>
    %667 = arith.addf %663, %666 : vector<8x128xf32>
    %c1_126 = arith.constant 1 : index
    %668 = memref.load %arg5[%c1_126] : memref<144xf32, #tpu.memory_space<smem>>
    %669 = vector.broadcast %668 : f32 to vector<8x128xf32>
    %670 = arith.mulf %669, %634 : vector<8x128xf32>
    %c5_127 = arith.constant 5 : index
    %671 = memref.load %arg5[%c5_127] : memref<144xf32, #tpu.memory_space<smem>>
    %672 = vector.broadcast %671 : f32 to vector<8x128xf32>
    %673 = arith.mulf %672, %640 : vector<8x128xf32>
    %674 = arith.addf %670, %673 : vector<8x128xf32>
    %c9_128 = arith.constant 9 : index
    %675 = memref.load %arg5[%c9_128] : memref<144xf32, #tpu.memory_space<smem>>
    %676 = vector.broadcast %675 : f32 to vector<8x128xf32>
    %677 = arith.mulf %676, %646 : vector<8x128xf32>
    %678 = arith.addf %674, %677 : vector<8x128xf32>
    %c13_129 = arith.constant 13 : index
    %679 = memref.load %arg5[%c13_129] : memref<144xf32, #tpu.memory_space<smem>>
    %680 = vector.broadcast %679 : f32 to vector<8x128xf32>
    %681 = arith.mulf %680, %652 : vector<8x128xf32>
    %682 = arith.addf %678, %681 : vector<8x128xf32>
    %c2_130 = arith.constant 2 : index
    %683 = memref.load %arg5[%c2_130] : memref<144xf32, #tpu.memory_space<smem>>
    %684 = vector.broadcast %683 : f32 to vector<8x128xf32>
    %685 = arith.mulf %684, %634 : vector<8x128xf32>
    %c6_131 = arith.constant 6 : index
    %686 = memref.load %arg5[%c6_131] : memref<144xf32, #tpu.memory_space<smem>>
    %687 = vector.broadcast %686 : f32 to vector<8x128xf32>
    %688 = arith.mulf %687, %640 : vector<8x128xf32>
    %689 = arith.addf %685, %688 : vector<8x128xf32>
    %c10_132 = arith.constant 10 : index
    %690 = memref.load %arg5[%c10_132] : memref<144xf32, #tpu.memory_space<smem>>
    %691 = vector.broadcast %690 : f32 to vector<8x128xf32>
    %692 = arith.mulf %691, %646 : vector<8x128xf32>
    %693 = arith.addf %689, %692 : vector<8x128xf32>
    %c14_133 = arith.constant 14 : index
    %694 = memref.load %arg5[%c14_133] : memref<144xf32, #tpu.memory_space<smem>>
    %695 = vector.broadcast %694 : f32 to vector<8x128xf32>
    %696 = arith.mulf %695, %652 : vector<8x128xf32>
    %697 = arith.addf %693, %696 : vector<8x128xf32>
    %c3_134 = arith.constant 3 : index
    %698 = memref.load %arg5[%c3_134] : memref<144xf32, #tpu.memory_space<smem>>
    %699 = vector.broadcast %698 : f32 to vector<8x128xf32>
    %700 = arith.mulf %699, %634 : vector<8x128xf32>
    %c7_135 = arith.constant 7 : index
    %701 = memref.load %arg5[%c7_135] : memref<144xf32, #tpu.memory_space<smem>>
    %702 = vector.broadcast %701 : f32 to vector<8x128xf32>
    %703 = arith.mulf %702, %640 : vector<8x128xf32>
    %704 = arith.addf %700, %703 : vector<8x128xf32>
    %c11_136 = arith.constant 11 : index
    %705 = memref.load %arg5[%c11_136] : memref<144xf32, #tpu.memory_space<smem>>
    %706 = vector.broadcast %705 : f32 to vector<8x128xf32>
    %707 = arith.mulf %706, %646 : vector<8x128xf32>
    %708 = arith.addf %704, %707 : vector<8x128xf32>
    %c15_137 = arith.constant 15 : index
    %709 = memref.load %arg5[%c15_137] : memref<144xf32, #tpu.memory_space<smem>>
    %710 = vector.broadcast %709 : f32 to vector<8x128xf32>
    %711 = arith.mulf %710, %652 : vector<8x128xf32>
    %712 = arith.addf %708, %711 : vector<8x128xf32>
    %c1_138 = arith.constant 1 : index
    %c0_139 = arith.constant 0 : index
    %c0_140 = arith.constant 0 : index
    %713 = vector.load %arg2[%c1_138, %c0_139, %c0_140] : memref<9x8x128xf32, #tpu.memory_space<vmem>>, vector<1x8x128xf32>
    %714 = vector.shape_cast %713 : vector<1x8x128xf32> to vector<8x128xf32>
    %c16_i32_141 = arith.constant 16 : i32
    %715 = tpu.dynamic_rotate %602 by %c16_i32_141 dim 1 : vector<8x128xf32>, i32 -> vector<8x128xf32>
    %c1_i32_142 = arith.constant 1 : i32
    %716 = tpu.dynamic_rotate %715 by %c1_i32_142 dim 0 : vector<8x128xf32>, i32 -> vector<8x128xf32>
    %c16_i32_143 = arith.constant 16 : i32
    %717 = vector.broadcast %c16_i32_143 : i32 to vector<8x128xi32>
    %718 = arith.cmpi sge, %0, %717 : vector<8x128xi32>
    %719 = arith.select %718, %715, %716 : vector<8x128xi1>, vector<8x128xf32>
    %720 = arith.mulf %719, %714 : vector<8x128xf32>
    %c16_i32_144 = arith.constant 16 : i32
    %721 = tpu.dynamic_rotate %610 by %c16_i32_144 dim 1 : vector<8x128xf32>, i32 -> vector<8x128xf32>
    %c1_i32_145 = arith.constant 1 : i32
    %722 = tpu.dynamic_rotate %721 by %c1_i32_145 dim 0 : vector<8x128xf32>, i32 -> vector<8x128xf32>
    %c16_i32_146 = arith.constant 16 : i32
    %723 = vector.broadcast %c16_i32_146 : i32 to vector<8x128xi32>
    %724 = arith.cmpi sge, %0, %723 : vector<8x128xi32>
    %725 = arith.select %724, %721, %722 : vector<8x128xi1>, vector<8x128xf32>
    %726 = arith.mulf %725, %714 : vector<8x128xf32>
    %c16_i32_147 = arith.constant 16 : i32
    %727 = tpu.dynamic_rotate %618 by %c16_i32_147 dim 1 : vector<8x128xf32>, i32 -> vector<8x128xf32>
    %c1_i32_148 = arith.constant 1 : i32
    %728 = tpu.dynamic_rotate %727 by %c1_i32_148 dim 0 : vector<8x128xf32>, i32 -> vector<8x128xf32>
    %c16_i32_149 = arith.constant 16 : i32
    %729 = vector.broadcast %c16_i32_149 : i32 to vector<8x128xi32>
    %730 = arith.cmpi sge, %0, %729 : vector<8x128xi32>
    %731 = arith.select %730, %727, %728 : vector<8x128xi1>, vector<8x128xf32>
    %732 = arith.mulf %731, %714 : vector<8x128xf32>
    %c16_i32_150 = arith.constant 16 : i32
    %733 = tpu.dynamic_rotate %626 by %c16_i32_150 dim 1 : vector<8x128xf32>, i32 -> vector<8x128xf32>
    %c1_i32_151 = arith.constant 1 : i32
    %734 = tpu.dynamic_rotate %733 by %c1_i32_151 dim 0 : vector<8x128xf32>, i32 -> vector<8x128xf32>
    %c16_i32_152 = arith.constant 16 : i32
    %735 = vector.broadcast %c16_i32_152 : i32 to vector<8x128xi32>
    %736 = arith.cmpi sge, %0, %735 : vector<8x128xi32>
    %737 = arith.select %736, %733, %734 : vector<8x128xi1>, vector<8x128xf32>
    %738 = arith.mulf %737, %714 : vector<8x128xf32>
    %c16_153 = arith.constant 16 : index
    %739 = memref.load %arg5[%c16_153] : memref<144xf32, #tpu.memory_space<smem>>
    %740 = vector.broadcast %739 : f32 to vector<8x128xf32>
    %741 = arith.mulf %740, %720 : vector<8x128xf32>
    %c20_154 = arith.constant 20 : index
    %742 = memref.load %arg5[%c20_154] : memref<144xf32, #tpu.memory_space<smem>>
    %743 = vector.broadcast %742 : f32 to vector<8x128xf32>
    %744 = arith.mulf %743, %726 : vector<8x128xf32>
    %745 = arith.addf %741, %744 : vector<8x128xf32>
    %c24_155 = arith.constant 24 : index
    %746 = memref.load %arg5[%c24_155] : memref<144xf32, #tpu.memory_space<smem>>
    %747 = vector.broadcast %746 : f32 to vector<8x128xf32>
    %748 = arith.mulf %747, %732 : vector<8x128xf32>
    %749 = arith.addf %745, %748 : vector<8x128xf32>
    %c28_156 = arith.constant 28 : index
    %750 = memref.load %arg5[%c28_156] : memref<144xf32, #tpu.memory_space<smem>>
    %751 = vector.broadcast %750 : f32 to vector<8x128xf32>
    %752 = arith.mulf %751, %738 : vector<8x128xf32>
    %753 = arith.addf %749, %752 : vector<8x128xf32>
    %754 = arith.addf %667, %753 : vector<8x128xf32>
    %c17_157 = arith.constant 17 : index
    %755 = memref.load %arg5[%c17_157] : memref<144xf32, #tpu.memory_space<smem>>
    %756 = vector.broadcast %755 : f32 to vector<8x128xf32>
    %757 = arith.mulf %756, %720 : vector<8x128xf32>
    %c21_158 = arith.constant 21 : index
    %758 = memref.load %arg5[%c21_158] : memref<144xf32, #tpu.memory_space<smem>>
    %759 = vector.broadcast %758 : f32 to vector<8x128xf32>
    %760 = arith.mulf %759, %726 : vector<8x128xf32>
    %761 = arith.addf %757, %760 : vector<8x128xf32>
    %c25_159 = arith.constant 25 : index
    %762 = memref.load %arg5[%c25_159] : memref<144xf32, #tpu.memory_space<smem>>
    %763 = vector.broadcast %762 : f32 to vector<8x128xf32>
    %764 = arith.mulf %763, %732 : vector<8x128xf32>
    %765 = arith.addf %761, %764 : vector<8x128xf32>
    %c29_160 = arith.constant 29 : index
    %766 = memref.load %arg5[%c29_160] : memref<144xf32, #tpu.memory_space<smem>>
    %767 = vector.broadcast %766 : f32 to vector<8x128xf32>
    %768 = arith.mulf %767, %738 : vector<8x128xf32>
    %769 = arith.addf %765, %768 : vector<8x128xf32>
    %770 = arith.addf %682, %769 : vector<8x128xf32>
    %c18_161 = arith.constant 18 : index
    %771 = memref.load %arg5[%c18_161] : memref<144xf32, #tpu.memory_space<smem>>
    %772 = vector.broadcast %771 : f32 to vector<8x128xf32>
    %773 = arith.mulf %772, %720 : vector<8x128xf32>
    %c22_162 = arith.constant 22 : index
    %774 = memref.load %arg5[%c22_162] : memref<144xf32, #tpu.memory_space<smem>>
    %775 = vector.broadcast %774 : f32 to vector<8x128xf32>
    %776 = arith.mulf %775, %726 : vector<8x128xf32>
    %777 = arith.addf %773, %776 : vector<8x128xf32>
    %c26_163 = arith.constant 26 : index
    %778 = memref.load %arg5[%c26_163] : memref<144xf32, #tpu.memory_space<smem>>
    %779 = vector.broadcast %778 : f32 to vector<8x128xf32>
    %780 = arith.mulf %779, %732 : vector<8x128xf32>
    %781 = arith.addf %777, %780 : vector<8x128xf32>
    %c30_164 = arith.constant 30 : index
    %782 = memref.load %arg5[%c30_164] : memref<144xf32, #tpu.memory_space<smem>>
    %783 = vector.broadcast %782 : f32 to vector<8x128xf32>
    %784 = arith.mulf %783, %738 : vector<8x128xf32>
    %785 = arith.addf %781, %784 : vector<8x128xf32>
    %786 = arith.addf %697, %785 : vector<8x128xf32>
    %c19_165 = arith.constant 19 : index
    %787 = memref.load %arg5[%c19_165] : memref<144xf32, #tpu.memory_space<smem>>
    %788 = vector.broadcast %787 : f32 to vector<8x128xf32>
    %789 = arith.mulf %788, %720 : vector<8x128xf32>
    %c23_166 = arith.constant 23 : index
    %790 = memref.load %arg5[%c23_166] : memref<144xf32, #tpu.memory_space<smem>>
    %791 = vector.broadcast %790 : f32 to vector<8x128xf32>
    %792 = arith.mulf %791, %726 : vector<8x128xf32>
    %793 = arith.addf %789, %792 : vector<8x128xf32>
    %c27_167 = arith.constant 27 : index
    %794 = memref.load %arg5[%c27_167] : memref<144xf32, #tpu.memory_space<smem>>
    %795 = vector.broadcast %794 : f32 to vector<8x128xf32>
    %796 = arith.mulf %795, %732 : vector<8x128xf32>
    %797 = arith.addf %793, %796 : vector<8x128xf32>
    %c31_168 = arith.constant 31 : index
    %798 = memref.load %arg5[%c31_168] : memref<144xf32, #tpu.memory_space<smem>>
    %799 = vector.broadcast %798 : f32 to vector<8x128xf32>
    %800 = arith.mulf %799, %738 : vector<8x128xf32>
    %801 = arith.addf %797, %800 : vector<8x128xf32>
    %802 = arith.addf %712, %801 : vector<8x128xf32>
    %c2_169 = arith.constant 2 : index
    %c0_170 = arith.constant 0 : index
    %c0_171 = arith.constant 0 : index
    %803 = vector.load %arg2[%c2_169, %c0_170, %c0_171] : memref<9x8x128xf32, #tpu.memory_space<vmem>>, vector<1x8x128xf32>
    %804 = vector.shape_cast %803 : vector<1x8x128xf32> to vector<8x128xf32>
    %c15_i32_172 = arith.constant 15 : i32
    %805 = tpu.dynamic_rotate %602 by %c15_i32_172 dim 1 : vector<8x128xf32>, i32 -> vector<8x128xf32>
    %c1_i32_173 = arith.constant 1 : i32
    %806 = tpu.dynamic_rotate %805 by %c1_i32_173 dim 0 : vector<8x128xf32>, i32 -> vector<8x128xf32>
    %c15_i32_174 = arith.constant 15 : i32
    %807 = vector.broadcast %c15_i32_174 : i32 to vector<8x128xi32>
    %808 = arith.cmpi sge, %0, %807 : vector<8x128xi32>
    %809 = arith.select %808, %805, %806 : vector<8x128xi1>, vector<8x128xf32>
    %810 = arith.mulf %809, %804 : vector<8x128xf32>
    %c15_i32_175 = arith.constant 15 : i32
    %811 = tpu.dynamic_rotate %610 by %c15_i32_175 dim 1 : vector<8x128xf32>, i32 -> vector<8x128xf32>
    %c1_i32_176 = arith.constant 1 : i32
    %812 = tpu.dynamic_rotate %811 by %c1_i32_176 dim 0 : vector<8x128xf32>, i32 -> vector<8x128xf32>
    %c15_i32_177 = arith.constant 15 : i32
    %813 = vector.broadcast %c15_i32_177 : i32 to vector<8x128xi32>
    %814 = arith.cmpi sge, %0, %813 : vector<8x128xi32>
    %815 = arith.select %814, %811, %812 : vector<8x128xi1>, vector<8x128xf32>
    %816 = arith.mulf %815, %804 : vector<8x128xf32>
    %c15_i32_178 = arith.constant 15 : i32
    %817 = tpu.dynamic_rotate %618 by %c15_i32_178 dim 1 : vector<8x128xf32>, i32 -> vector<8x128xf32>
    %c1_i32_179 = arith.constant 1 : i32
    %818 = tpu.dynamic_rotate %817 by %c1_i32_179 dim 0 : vector<8x128xf32>, i32 -> vector<8x128xf32>
    %c15_i32_180 = arith.constant 15 : i32
    %819 = vector.broadcast %c15_i32_180 : i32 to vector<8x128xi32>
    %820 = arith.cmpi sge, %0, %819 : vector<8x128xi32>
    %821 = arith.select %820, %817, %818 : vector<8x128xi1>, vector<8x128xf32>
    %822 = arith.mulf %821, %804 : vector<8x128xf32>
    %c15_i32_181 = arith.constant 15 : i32
    %823 = tpu.dynamic_rotate %626 by %c15_i32_181 dim 1 : vector<8x128xf32>, i32 -> vector<8x128xf32>
    %c1_i32_182 = arith.constant 1 : i32
    %824 = tpu.dynamic_rotate %823 by %c1_i32_182 dim 0 : vector<8x128xf32>, i32 -> vector<8x128xf32>
    %c15_i32_183 = arith.constant 15 : i32
    %825 = vector.broadcast %c15_i32_183 : i32 to vector<8x128xi32>
    %826 = arith.cmpi sge, %0, %825 : vector<8x128xi32>
    %827 = arith.select %826, %823, %824 : vector<8x128xi1>, vector<8x128xf32>
    %828 = arith.mulf %827, %804 : vector<8x128xf32>
    %c32_184 = arith.constant 32 : index
    %829 = memref.load %arg5[%c32_184] : memref<144xf32, #tpu.memory_space<smem>>
    %830 = vector.broadcast %829 : f32 to vector<8x128xf32>
    %831 = arith.mulf %830, %810 : vector<8x128xf32>
    %c36_185 = arith.constant 36 : index
    %832 = memref.load %arg5[%c36_185] : memref<144xf32, #tpu.memory_space<smem>>
    %833 = vector.broadcast %832 : f32 to vector<8x128xf32>
    %834 = arith.mulf %833, %816 : vector<8x128xf32>
    %835 = arith.addf %831, %834 : vector<8x128xf32>
    %c40_186 = arith.constant 40 : index
    %836 = memref.load %arg5[%c40_186] : memref<144xf32, #tpu.memory_space<smem>>
    %837 = vector.broadcast %836 : f32 to vector<8x128xf32>
    %838 = arith.mulf %837, %822 : vector<8x128xf32>
    %839 = arith.addf %835, %838 : vector<8x128xf32>
    %c44_187 = arith.constant 44 : index
    %840 = memref.load %arg5[%c44_187] : memref<144xf32, #tpu.memory_space<smem>>
    %841 = vector.broadcast %840 : f32 to vector<8x128xf32>
    %842 = arith.mulf %841, %828 : vector<8x128xf32>
    %843 = arith.addf %839, %842 : vector<8x128xf32>
    %844 = arith.addf %754, %843 : vector<8x128xf32>
    %c33_188 = arith.constant 33 : index
    %845 = memref.load %arg5[%c33_188] : memref<144xf32, #tpu.memory_space<smem>>
    %846 = vector.broadcast %845 : f32 to vector<8x128xf32>
    %847 = arith.mulf %846, %810 : vector<8x128xf32>
    %c37_189 = arith.constant 37 : index
    %848 = memref.load %arg5[%c37_189] : memref<144xf32, #tpu.memory_space<smem>>
    %849 = vector.broadcast %848 : f32 to vector<8x128xf32>
    %850 = arith.mulf %849, %816 : vector<8x128xf32>
    %851 = arith.addf %847, %850 : vector<8x128xf32>
    %c41_190 = arith.constant 41 : index
    %852 = memref.load %arg5[%c41_190] : memref<144xf32, #tpu.memory_space<smem>>
    %853 = vector.broadcast %852 : f32 to vector<8x128xf32>
    %854 = arith.mulf %853, %822 : vector<8x128xf32>
    %855 = arith.addf %851, %854 : vector<8x128xf32>
    %c45_191 = arith.constant 45 : index
    %856 = memref.load %arg5[%c45_191] : memref<144xf32, #tpu.memory_space<smem>>
    %857 = vector.broadcast %856 : f32 to vector<8x128xf32>
    %858 = arith.mulf %857, %828 : vector<8x128xf32>
    %859 = arith.addf %855, %858 : vector<8x128xf32>
    %860 = arith.addf %770, %859 : vector<8x128xf32>
    %c34_192 = arith.constant 34 : index
    %861 = memref.load %arg5[%c34_192] : memref<144xf32, #tpu.memory_space<smem>>
    %862 = vector.broadcast %861 : f32 to vector<8x128xf32>
    %863 = arith.mulf %862, %810 : vector<8x128xf32>
    %c38_193 = arith.constant 38 : index
    %864 = memref.load %arg5[%c38_193] : memref<144xf32, #tpu.memory_space<smem>>
    %865 = vector.broadcast %864 : f32 to vector<8x128xf32>
    %866 = arith.mulf %865, %816 : vector<8x128xf32>
    %867 = arith.addf %863, %866 : vector<8x128xf32>
    %c42_194 = arith.constant 42 : index
    %868 = memref.load %arg5[%c42_194] : memref<144xf32, #tpu.memory_space<smem>>
    %869 = vector.broadcast %868 : f32 to vector<8x128xf32>
    %870 = arith.mulf %869, %822 : vector<8x128xf32>
    %871 = arith.addf %867, %870 : vector<8x128xf32>
    %c46_195 = arith.constant 46 : index
    %872 = memref.load %arg5[%c46_195] : memref<144xf32, #tpu.memory_space<smem>>
    %873 = vector.broadcast %872 : f32 to vector<8x128xf32>
    %874 = arith.mulf %873, %828 : vector<8x128xf32>
    %875 = arith.addf %871, %874 : vector<8x128xf32>
    %876 = arith.addf %786, %875 : vector<8x128xf32>
    %c35_196 = arith.constant 35 : index
    %877 = memref.load %arg5[%c35_196] : memref<144xf32, #tpu.memory_space<smem>>
    %878 = vector.broadcast %877 : f32 to vector<8x128xf32>
    %879 = arith.mulf %878, %810 : vector<8x128xf32>
    %c39_197 = arith.constant 39 : index
    %880 = memref.load %arg5[%c39_197] : memref<144xf32, #tpu.memory_space<smem>>
    %881 = vector.broadcast %880 : f32 to vector<8x128xf32>
    %882 = arith.mulf %881, %816 : vector<8x128xf32>
    %883 = arith.addf %879, %882 : vector<8x128xf32>
    %c43_198 = arith.constant 43 : index
    %884 = memref.load %arg5[%c43_198] : memref<144xf32, #tpu.memory_space<smem>>
    %885 = vector.broadcast %884 : f32 to vector<8x128xf32>
    %886 = arith.mulf %885, %822 : vector<8x128xf32>
    %887 = arith.addf %883, %886 : vector<8x128xf32>
    %c47_199 = arith.constant 47 : index
    %888 = memref.load %arg5[%c47_199] : memref<144xf32, #tpu.memory_space<smem>>
    %889 = vector.broadcast %888 : f32 to vector<8x128xf32>
    %890 = arith.mulf %889, %828 : vector<8x128xf32>
    %891 = arith.addf %887, %890 : vector<8x128xf32>
    %892 = arith.addf %802, %891 : vector<8x128xf32>
    %c3_200 = arith.constant 3 : index
    %c0_201 = arith.constant 0 : index
    %c0_202 = arith.constant 0 : index
    %893 = vector.load %arg2[%c3_200, %c0_201, %c0_202] : memref<9x8x128xf32, #tpu.memory_space<vmem>>, vector<1x8x128xf32>
    %894 = vector.shape_cast %893 : vector<1x8x128xf32> to vector<8x128xf32>
    %c1_i32_203 = arith.constant 1 : i32
    %895 = tpu.dynamic_rotate %602 by %c1_i32_203 dim 1 : vector<8x128xf32>, i32 -> vector<8x128xf32>
    %c1_i32_204 = arith.constant 1 : i32
    %896 = tpu.dynamic_rotate %895 by %c1_i32_204 dim 0 : vector<8x128xf32>, i32 -> vector<8x128xf32>
    %c1_i32_205 = arith.constant 1 : i32
    %897 = vector.broadcast %c1_i32_205 : i32 to vector<8x128xi32>
    %898 = arith.cmpi sge, %0, %897 : vector<8x128xi32>
    %899 = arith.select %898, %895, %896 : vector<8x128xi1>, vector<8x128xf32>
    %900 = arith.mulf %899, %894 : vector<8x128xf32>
    %c1_i32_206 = arith.constant 1 : i32
    %901 = tpu.dynamic_rotate %610 by %c1_i32_206 dim 1 : vector<8x128xf32>, i32 -> vector<8x128xf32>
    %c1_i32_207 = arith.constant 1 : i32
    %902 = tpu.dynamic_rotate %901 by %c1_i32_207 dim 0 : vector<8x128xf32>, i32 -> vector<8x128xf32>
    %c1_i32_208 = arith.constant 1 : i32
    %903 = vector.broadcast %c1_i32_208 : i32 to vector<8x128xi32>
    %904 = arith.cmpi sge, %0, %903 : vector<8x128xi32>
    %905 = arith.select %904, %901, %902 : vector<8x128xi1>, vector<8x128xf32>
    %906 = arith.mulf %905, %894 : vector<8x128xf32>
    %c1_i32_209 = arith.constant 1 : i32
    %907 = tpu.dynamic_rotate %618 by %c1_i32_209 dim 1 : vector<8x128xf32>, i32 -> vector<8x128xf32>
    %c1_i32_210 = arith.constant 1 : i32
    %908 = tpu.dynamic_rotate %907 by %c1_i32_210 dim 0 : vector<8x128xf32>, i32 -> vector<8x128xf32>
    %c1_i32_211 = arith.constant 1 : i32
    %909 = vector.broadcast %c1_i32_211 : i32 to vector<8x128xi32>
    %910 = arith.cmpi sge, %0, %909 : vector<8x128xi32>
    %911 = arith.select %910, %907, %908 : vector<8x128xi1>, vector<8x128xf32>
    %912 = arith.mulf %911, %894 : vector<8x128xf32>
    %c1_i32_212 = arith.constant 1 : i32
    %913 = tpu.dynamic_rotate %626 by %c1_i32_212 dim 1 : vector<8x128xf32>, i32 -> vector<8x128xf32>
    %c1_i32_213 = arith.constant 1 : i32
    %914 = tpu.dynamic_rotate %913 by %c1_i32_213 dim 0 : vector<8x128xf32>, i32 -> vector<8x128xf32>
    %c1_i32_214 = arith.constant 1 : i32
    %915 = vector.broadcast %c1_i32_214 : i32 to vector<8x128xi32>
    %916 = arith.cmpi sge, %0, %915 : vector<8x128xi32>
    %917 = arith.select %916, %913, %914 : vector<8x128xi1>, vector<8x128xf32>
    %918 = arith.mulf %917, %894 : vector<8x128xf32>
    %c48_215 = arith.constant 48 : index
    %919 = memref.load %arg5[%c48_215] : memref<144xf32, #tpu.memory_space<smem>>
    %920 = vector.broadcast %919 : f32 to vector<8x128xf32>
    %921 = arith.mulf %920, %900 : vector<8x128xf32>
    %c52_216 = arith.constant 52 : index
    %922 = memref.load %arg5[%c52_216] : memref<144xf32, #tpu.memory_space<smem>>
    %923 = vector.broadcast %922 : f32 to vector<8x128xf32>
    %924 = arith.mulf %923, %906 : vector<8x128xf32>
    %925 = arith.addf %921, %924 : vector<8x128xf32>
    %c56_217 = arith.constant 56 : index
    %926 = memref.load %arg5[%c56_217] : memref<144xf32, #tpu.memory_space<smem>>
    %927 = vector.broadcast %926 : f32 to vector<8x128xf32>
    %928 = arith.mulf %927, %912 : vector<8x128xf32>
    %929 = arith.addf %925, %928 : vector<8x128xf32>
    %c60_218 = arith.constant 60 : index
    %930 = memref.load %arg5[%c60_218] : memref<144xf32, #tpu.memory_space<smem>>
    %931 = vector.broadcast %930 : f32 to vector<8x128xf32>
    %932 = arith.mulf %931, %918 : vector<8x128xf32>
    %933 = arith.addf %929, %932 : vector<8x128xf32>
    %934 = arith.addf %844, %933 : vector<8x128xf32>
    %c49_219 = arith.constant 49 : index
    %935 = memref.load %arg5[%c49_219] : memref<144xf32, #tpu.memory_space<smem>>
    %936 = vector.broadcast %935 : f32 to vector<8x128xf32>
    %937 = arith.mulf %936, %900 : vector<8x128xf32>
    %c53_220 = arith.constant 53 : index
    %938 = memref.load %arg5[%c53_220] : memref<144xf32, #tpu.memory_space<smem>>
    %939 = vector.broadcast %938 : f32 to vector<8x128xf32>
    %940 = arith.mulf %939, %906 : vector<8x128xf32>
    %941 = arith.addf %937, %940 : vector<8x128xf32>
    %c57_221 = arith.constant 57 : index
    %942 = memref.load %arg5[%c57_221] : memref<144xf32, #tpu.memory_space<smem>>
    %943 = vector.broadcast %942 : f32 to vector<8x128xf32>
    %944 = arith.mulf %943, %912 : vector<8x128xf32>
    %945 = arith.addf %941, %944 : vector<8x128xf32>
    %c61_222 = arith.constant 61 : index
    %946 = memref.load %arg5[%c61_222] : memref<144xf32, #tpu.memory_space<smem>>
    %947 = vector.broadcast %946 : f32 to vector<8x128xf32>
    %948 = arith.mulf %947, %918 : vector<8x128xf32>
    %949 = arith.addf %945, %948 : vector<8x128xf32>
    %950 = arith.addf %860, %949 : vector<8x128xf32>
    %c50_223 = arith.constant 50 : index
    %951 = memref.load %arg5[%c50_223] : memref<144xf32, #tpu.memory_space<smem>>
    %952 = vector.broadcast %951 : f32 to vector<8x128xf32>
    %953 = arith.mulf %952, %900 : vector<8x128xf32>
    %c54_224 = arith.constant 54 : index
    %954 = memref.load %arg5[%c54_224] : memref<144xf32, #tpu.memory_space<smem>>
    %955 = vector.broadcast %954 : f32 to vector<8x128xf32>
    %956 = arith.mulf %955, %906 : vector<8x128xf32>
    %957 = arith.addf %953, %956 : vector<8x128xf32>
    %c58_225 = arith.constant 58 : index
    %958 = memref.load %arg5[%c58_225] : memref<144xf32, #tpu.memory_space<smem>>
    %959 = vector.broadcast %958 : f32 to vector<8x128xf32>
    %960 = arith.mulf %959, %912 : vector<8x128xf32>
    %961 = arith.addf %957, %960 : vector<8x128xf32>
    %c62_226 = arith.constant 62 : index
    %962 = memref.load %arg5[%c62_226] : memref<144xf32, #tpu.memory_space<smem>>
    %963 = vector.broadcast %962 : f32 to vector<8x128xf32>
    %964 = arith.mulf %963, %918 : vector<8x128xf32>
    %965 = arith.addf %961, %964 : vector<8x128xf32>
    %966 = arith.addf %876, %965 : vector<8x128xf32>
    %c51_227 = arith.constant 51 : index
    %967 = memref.load %arg5[%c51_227] : memref<144xf32, #tpu.memory_space<smem>>
    %968 = vector.broadcast %967 : f32 to vector<8x128xf32>
    %969 = arith.mulf %968, %900 : vector<8x128xf32>
    %c55_228 = arith.constant 55 : index
    %970 = memref.load %arg5[%c55_228] : memref<144xf32, #tpu.memory_space<smem>>
    %971 = vector.broadcast %970 : f32 to vector<8x128xf32>
    %972 = arith.mulf %971, %906 : vector<8x128xf32>
    %973 = arith.addf %969, %972 : vector<8x128xf32>
    %c59_229 = arith.constant 59 : index
    %974 = memref.load %arg5[%c59_229] : memref<144xf32, #tpu.memory_space<smem>>
    %975 = vector.broadcast %974 : f32 to vector<8x128xf32>
    %976 = arith.mulf %975, %912 : vector<8x128xf32>
    %977 = arith.addf %973, %976 : vector<8x128xf32>
    %c63_230 = arith.constant 63 : index
    %978 = memref.load %arg5[%c63_230] : memref<144xf32, #tpu.memory_space<smem>>
    %979 = vector.broadcast %978 : f32 to vector<8x128xf32>
    %980 = arith.mulf %979, %918 : vector<8x128xf32>
    %981 = arith.addf %977, %980 : vector<8x128xf32>
    %982 = arith.addf %892, %981 : vector<8x128xf32>
    %c64_231 = arith.constant 64 : index
    %983 = memref.load %arg5[%c64_231] : memref<144xf32, #tpu.memory_space<smem>>
    %984 = vector.broadcast %983 : f32 to vector<8x128xf32>
    %985 = arith.mulf %984, %602 : vector<8x128xf32>
    %c68_232 = arith.constant 68 : index
    %986 = memref.load %arg5[%c68_232] : memref<144xf32, #tpu.memory_space<smem>>
    %987 = vector.broadcast %986 : f32 to vector<8x128xf32>
    %988 = arith.mulf %987, %610 : vector<8x128xf32>
    %989 = arith.addf %985, %988 : vector<8x128xf32>
    %c72_233 = arith.constant 72 : index
    %990 = memref.load %arg5[%c72_233] : memref<144xf32, #tpu.memory_space<smem>>
    %991 = vector.broadcast %990 : f32 to vector<8x128xf32>
    %992 = arith.mulf %991, %618 : vector<8x128xf32>
    %993 = arith.addf %989, %992 : vector<8x128xf32>
    %c76_234 = arith.constant 76 : index
    %994 = memref.load %arg5[%c76_234] : memref<144xf32, #tpu.memory_space<smem>>
    %995 = vector.broadcast %994 : f32 to vector<8x128xf32>
    %996 = arith.mulf %995, %626 : vector<8x128xf32>
    %997 = arith.addf %993, %996 : vector<8x128xf32>
    %998 = arith.addf %934, %997 : vector<8x128xf32>
    %c65_235 = arith.constant 65 : index
    %999 = memref.load %arg5[%c65_235] : memref<144xf32, #tpu.memory_space<smem>>
    %1000 = vector.broadcast %999 : f32 to vector<8x128xf32>
    %1001 = arith.mulf %1000, %602 : vector<8x128xf32>
    %c69_236 = arith.constant 69 : index
    %1002 = memref.load %arg5[%c69_236] : memref<144xf32, #tpu.memory_space<smem>>
    %1003 = vector.broadcast %1002 : f32 to vector<8x128xf32>
    %1004 = arith.mulf %1003, %610 : vector<8x128xf32>
    %1005 = arith.addf %1001, %1004 : vector<8x128xf32>
    %c73_237 = arith.constant 73 : index
    %1006 = memref.load %arg5[%c73_237] : memref<144xf32, #tpu.memory_space<smem>>
    %1007 = vector.broadcast %1006 : f32 to vector<8x128xf32>
    %1008 = arith.mulf %1007, %618 : vector<8x128xf32>
    %1009 = arith.addf %1005, %1008 : vector<8x128xf32>
    %c77_238 = arith.constant 77 : index
    %1010 = memref.load %arg5[%c77_238] : memref<144xf32, #tpu.memory_space<smem>>
    %1011 = vector.broadcast %1010 : f32 to vector<8x128xf32>
    %1012 = arith.mulf %1011, %626 : vector<8x128xf32>
    %1013 = arith.addf %1009, %1012 : vector<8x128xf32>
    %1014 = arith.addf %950, %1013 : vector<8x128xf32>
    %c66_239 = arith.constant 66 : index
    %1015 = memref.load %arg5[%c66_239] : memref<144xf32, #tpu.memory_space<smem>>
    %1016 = vector.broadcast %1015 : f32 to vector<8x128xf32>
    %1017 = arith.mulf %1016, %602 : vector<8x128xf32>
    %c70_240 = arith.constant 70 : index
    %1018 = memref.load %arg5[%c70_240] : memref<144xf32, #tpu.memory_space<smem>>
    %1019 = vector.broadcast %1018 : f32 to vector<8x128xf32>
    %1020 = arith.mulf %1019, %610 : vector<8x128xf32>
    %1021 = arith.addf %1017, %1020 : vector<8x128xf32>
    %c74_241 = arith.constant 74 : index
    %1022 = memref.load %arg5[%c74_241] : memref<144xf32, #tpu.memory_space<smem>>
    %1023 = vector.broadcast %1022 : f32 to vector<8x128xf32>
    %1024 = arith.mulf %1023, %618 : vector<8x128xf32>
    %1025 = arith.addf %1021, %1024 : vector<8x128xf32>
    %c78_242 = arith.constant 78 : index
    %1026 = memref.load %arg5[%c78_242] : memref<144xf32, #tpu.memory_space<smem>>
    %1027 = vector.broadcast %1026 : f32 to vector<8x128xf32>
    %1028 = arith.mulf %1027, %626 : vector<8x128xf32>
    %1029 = arith.addf %1025, %1028 : vector<8x128xf32>
    %1030 = arith.addf %966, %1029 : vector<8x128xf32>
    %c67_243 = arith.constant 67 : index
    %1031 = memref.load %arg5[%c67_243] : memref<144xf32, #tpu.memory_space<smem>>
    %1032 = vector.broadcast %1031 : f32 to vector<8x128xf32>
    %1033 = arith.mulf %1032, %602 : vector<8x128xf32>
    %c71_244 = arith.constant 71 : index
    %1034 = memref.load %arg5[%c71_244] : memref<144xf32, #tpu.memory_space<smem>>
    %1035 = vector.broadcast %1034 : f32 to vector<8x128xf32>
    %1036 = arith.mulf %1035, %610 : vector<8x128xf32>
    %1037 = arith.addf %1033, %1036 : vector<8x128xf32>
    %c75_245 = arith.constant 75 : index
    %1038 = memref.load %arg5[%c75_245] : memref<144xf32, #tpu.memory_space<smem>>
    %1039 = vector.broadcast %1038 : f32 to vector<8x128xf32>
    %1040 = arith.mulf %1039, %618 : vector<8x128xf32>
    %1041 = arith.addf %1037, %1040 : vector<8x128xf32>
    %c79_246 = arith.constant 79 : index
    %1042 = memref.load %arg5[%c79_246] : memref<144xf32, #tpu.memory_space<smem>>
    %1043 = vector.broadcast %1042 : f32 to vector<8x128xf32>
    %1044 = arith.mulf %1043, %626 : vector<8x128xf32>
    %1045 = arith.addf %1041, %1044 : vector<8x128xf32>
    %1046 = arith.addf %982, %1045 : vector<8x128xf32>
    %c5_247 = arith.constant 5 : index
    %c0_248 = arith.constant 0 : index
    %c0_249 = arith.constant 0 : index
    %1047 = vector.load %arg2[%c5_247, %c0_248, %c0_249] : memref<9x8x128xf32, #tpu.memory_space<vmem>>, vector<1x8x128xf32>
    %1048 = vector.shape_cast %1047 : vector<1x8x128xf32> to vector<8x128xf32>
    %c127_i32_250 = arith.constant 127 : i32
    %1049 = tpu.dynamic_rotate %602 by %c127_i32_250 dim 1 : vector<8x128xf32>, i32 -> vector<8x128xf32>
    %c7_i32_251 = arith.constant 7 : i32
    %1050 = tpu.dynamic_rotate %1049 by %c7_i32_251 dim 0 : vector<8x128xf32>, i32 -> vector<8x128xf32>
    %c127_i32_252 = arith.constant 127 : i32
    %1051 = vector.broadcast %c127_i32_252 : i32 to vector<8x128xi32>
    %1052 = arith.cmpi slt, %0, %1051 : vector<8x128xi32>
    %1053 = arith.select %1052, %1049, %1050 : vector<8x128xi1>, vector<8x128xf32>
    %1054 = arith.mulf %1053, %1048 : vector<8x128xf32>
    %c127_i32_253 = arith.constant 127 : i32
    %1055 = tpu.dynamic_rotate %610 by %c127_i32_253 dim 1 : vector<8x128xf32>, i32 -> vector<8x128xf32>
    %c7_i32_254 = arith.constant 7 : i32
    %1056 = tpu.dynamic_rotate %1055 by %c7_i32_254 dim 0 : vector<8x128xf32>, i32 -> vector<8x128xf32>
    %c127_i32_255 = arith.constant 127 : i32
    %1057 = vector.broadcast %c127_i32_255 : i32 to vector<8x128xi32>
    %1058 = arith.cmpi slt, %0, %1057 : vector<8x128xi32>
    %1059 = arith.select %1058, %1055, %1056 : vector<8x128xi1>, vector<8x128xf32>
    %1060 = arith.mulf %1059, %1048 : vector<8x128xf32>
    %c127_i32_256 = arith.constant 127 : i32
    %1061 = tpu.dynamic_rotate %618 by %c127_i32_256 dim 1 : vector<8x128xf32>, i32 -> vector<8x128xf32>
    %c7_i32_257 = arith.constant 7 : i32
    %1062 = tpu.dynamic_rotate %1061 by %c7_i32_257 dim 0 : vector<8x128xf32>, i32 -> vector<8x128xf32>
    %c127_i32_258 = arith.constant 127 : i32
    %1063 = vector.broadcast %c127_i32_258 : i32 to vector<8x128xi32>
    %1064 = arith.cmpi slt, %0, %1063 : vector<8x128xi32>
    %1065 = arith.select %1064, %1061, %1062 : vector<8x128xi1>, vector<8x128xf32>
    %1066 = arith.mulf %1065, %1048 : vector<8x128xf32>
    %c127_i32_259 = arith.constant 127 : i32
    %1067 = tpu.dynamic_rotate %626 by %c127_i32_259 dim 1 : vector<8x128xf32>, i32 -> vector<8x128xf32>
    %c7_i32_260 = arith.constant 7 : i32
    %1068 = tpu.dynamic_rotate %1067 by %c7_i32_260 dim 0 : vector<8x128xf32>, i32 -> vector<8x128xf32>
    %c127_i32_261 = arith.constant 127 : i32
    %1069 = vector.broadcast %c127_i32_261 : i32 to vector<8x128xi32>
    %1070 = arith.cmpi slt, %0, %1069 : vector<8x128xi32>
    %1071 = arith.select %1070, %1067, %1068 : vector<8x128xi1>, vector<8x128xf32>
    %1072 = arith.mulf %1071, %1048 : vector<8x128xf32>
    %c80_262 = arith.constant 80 : index
    %1073 = memref.load %arg5[%c80_262] : memref<144xf32, #tpu.memory_space<smem>>
    %1074 = vector.broadcast %1073 : f32 to vector<8x128xf32>
    %1075 = arith.mulf %1074, %1054 : vector<8x128xf32>
    %c84_263 = arith.constant 84 : index
    %1076 = memref.load %arg5[%c84_263] : memref<144xf32, #tpu.memory_space<smem>>
    %1077 = vector.broadcast %1076 : f32 to vector<8x128xf32>
    %1078 = arith.mulf %1077, %1060 : vector<8x128xf32>
    %1079 = arith.addf %1075, %1078 : vector<8x128xf32>
    %c88_264 = arith.constant 88 : index
    %1080 = memref.load %arg5[%c88_264] : memref<144xf32, #tpu.memory_space<smem>>
    %1081 = vector.broadcast %1080 : f32 to vector<8x128xf32>
    %1082 = arith.mulf %1081, %1066 : vector<8x128xf32>
    %1083 = arith.addf %1079, %1082 : vector<8x128xf32>
    %c92_265 = arith.constant 92 : index
    %1084 = memref.load %arg5[%c92_265] : memref<144xf32, #tpu.memory_space<smem>>
    %1085 = vector.broadcast %1084 : f32 to vector<8x128xf32>
    %1086 = arith.mulf %1085, %1072 : vector<8x128xf32>
    %1087 = arith.addf %1083, %1086 : vector<8x128xf32>
    %1088 = arith.addf %998, %1087 : vector<8x128xf32>
    %c81_266 = arith.constant 81 : index
    %1089 = memref.load %arg5[%c81_266] : memref<144xf32, #tpu.memory_space<smem>>
    %1090 = vector.broadcast %1089 : f32 to vector<8x128xf32>
    %1091 = arith.mulf %1090, %1054 : vector<8x128xf32>
    %c85_267 = arith.constant 85 : index
    %1092 = memref.load %arg5[%c85_267] : memref<144xf32, #tpu.memory_space<smem>>
    %1093 = vector.broadcast %1092 : f32 to vector<8x128xf32>
    %1094 = arith.mulf %1093, %1060 : vector<8x128xf32>
    %1095 = arith.addf %1091, %1094 : vector<8x128xf32>
    %c89_268 = arith.constant 89 : index
    %1096 = memref.load %arg5[%c89_268] : memref<144xf32, #tpu.memory_space<smem>>
    %1097 = vector.broadcast %1096 : f32 to vector<8x128xf32>
    %1098 = arith.mulf %1097, %1066 : vector<8x128xf32>
    %1099 = arith.addf %1095, %1098 : vector<8x128xf32>
    %c93_269 = arith.constant 93 : index
    %1100 = memref.load %arg5[%c93_269] : memref<144xf32, #tpu.memory_space<smem>>
    %1101 = vector.broadcast %1100 : f32 to vector<8x128xf32>
    %1102 = arith.mulf %1101, %1072 : vector<8x128xf32>
    %1103 = arith.addf %1099, %1102 : vector<8x128xf32>
    %1104 = arith.addf %1014, %1103 : vector<8x128xf32>
    %c82_270 = arith.constant 82 : index
    %1105 = memref.load %arg5[%c82_270] : memref<144xf32, #tpu.memory_space<smem>>
    %1106 = vector.broadcast %1105 : f32 to vector<8x128xf32>
    %1107 = arith.mulf %1106, %1054 : vector<8x128xf32>
    %c86_271 = arith.constant 86 : index
    %1108 = memref.load %arg5[%c86_271] : memref<144xf32, #tpu.memory_space<smem>>
    %1109 = vector.broadcast %1108 : f32 to vector<8x128xf32>
    %1110 = arith.mulf %1109, %1060 : vector<8x128xf32>
    %1111 = arith.addf %1107, %1110 : vector<8x128xf32>
    %c90_272 = arith.constant 90 : index
    %1112 = memref.load %arg5[%c90_272] : memref<144xf32, #tpu.memory_space<smem>>
    %1113 = vector.broadcast %1112 : f32 to vector<8x128xf32>
    %1114 = arith.mulf %1113, %1066 : vector<8x128xf32>
    %1115 = arith.addf %1111, %1114 : vector<8x128xf32>
    %c94_273 = arith.constant 94 : index
    %1116 = memref.load %arg5[%c94_273] : memref<144xf32, #tpu.memory_space<smem>>
    %1117 = vector.broadcast %1116 : f32 to vector<8x128xf32>
    %1118 = arith.mulf %1117, %1072 : vector<8x128xf32>
    %1119 = arith.addf %1115, %1118 : vector<8x128xf32>
    %1120 = arith.addf %1030, %1119 : vector<8x128xf32>
    %c83_274 = arith.constant 83 : index
    %1121 = memref.load %arg5[%c83_274] : memref<144xf32, #tpu.memory_space<smem>>
    %1122 = vector.broadcast %1121 : f32 to vector<8x128xf32>
    %1123 = arith.mulf %1122, %1054 : vector<8x128xf32>
    %c87_275 = arith.constant 87 : index
    %1124 = memref.load %arg5[%c87_275] : memref<144xf32, #tpu.memory_space<smem>>
    %1125 = vector.broadcast %1124 : f32 to vector<8x128xf32>
    %1126 = arith.mulf %1125, %1060 : vector<8x128xf32>
    %1127 = arith.addf %1123, %1126 : vector<8x128xf32>
    %c91_276 = arith.constant 91 : index
    %1128 = memref.load %arg5[%c91_276] : memref<144xf32, #tpu.memory_space<smem>>
    %1129 = vector.broadcast %1128 : f32 to vector<8x128xf32>
    %1130 = arith.mulf %1129, %1066 : vector<8x128xf32>
    %1131 = arith.addf %1127, %1130 : vector<8x128xf32>
    %c95_277 = arith.constant 95 : index
    %1132 = memref.load %arg5[%c95_277] : memref<144xf32, #tpu.memory_space<smem>>
    %1133 = vector.broadcast %1132 : f32 to vector<8x128xf32>
    %1134 = arith.mulf %1133, %1072 : vector<8x128xf32>
    %1135 = arith.addf %1131, %1134 : vector<8x128xf32>
    %1136 = arith.addf %1046, %1135 : vector<8x128xf32>
    %c6_278 = arith.constant 6 : index
    %c0_279 = arith.constant 0 : index
    %c0_280 = arith.constant 0 : index
    %1137 = vector.load %arg2[%c6_278, %c0_279, %c0_280] : memref<9x8x128xf32, #tpu.memory_space<vmem>>, vector<1x8x128xf32>
    %1138 = vector.shape_cast %1137 : vector<1x8x128xf32> to vector<8x128xf32>
    %c113_i32_281 = arith.constant 113 : i32
    %1139 = tpu.dynamic_rotate %602 by %c113_i32_281 dim 1 : vector<8x128xf32>, i32 -> vector<8x128xf32>
    %c7_i32_282 = arith.constant 7 : i32
    %1140 = tpu.dynamic_rotate %1139 by %c7_i32_282 dim 0 : vector<8x128xf32>, i32 -> vector<8x128xf32>
    %c113_i32_283 = arith.constant 113 : i32
    %1141 = vector.broadcast %c113_i32_283 : i32 to vector<8x128xi32>
    %1142 = arith.cmpi slt, %0, %1141 : vector<8x128xi32>
    %1143 = arith.select %1142, %1139, %1140 : vector<8x128xi1>, vector<8x128xf32>
    %1144 = arith.mulf %1143, %1138 : vector<8x128xf32>
    %c113_i32_284 = arith.constant 113 : i32
    %1145 = tpu.dynamic_rotate %610 by %c113_i32_284 dim 1 : vector<8x128xf32>, i32 -> vector<8x128xf32>
    %c7_i32_285 = arith.constant 7 : i32
    %1146 = tpu.dynamic_rotate %1145 by %c7_i32_285 dim 0 : vector<8x128xf32>, i32 -> vector<8x128xf32>
    %c113_i32_286 = arith.constant 113 : i32
    %1147 = vector.broadcast %c113_i32_286 : i32 to vector<8x128xi32>
    %1148 = arith.cmpi slt, %0, %1147 : vector<8x128xi32>
    %1149 = arith.select %1148, %1145, %1146 : vector<8x128xi1>, vector<8x128xf32>
    %1150 = arith.mulf %1149, %1138 : vector<8x128xf32>
    %c113_i32_287 = arith.constant 113 : i32
    %1151 = tpu.dynamic_rotate %618 by %c113_i32_287 dim 1 : vector<8x128xf32>, i32 -> vector<8x128xf32>
    %c7_i32_288 = arith.constant 7 : i32
    %1152 = tpu.dynamic_rotate %1151 by %c7_i32_288 dim 0 : vector<8x128xf32>, i32 -> vector<8x128xf32>
    %c113_i32_289 = arith.constant 113 : i32
    %1153 = vector.broadcast %c113_i32_289 : i32 to vector<8x128xi32>
    %1154 = arith.cmpi slt, %0, %1153 : vector<8x128xi32>
    %1155 = arith.select %1154, %1151, %1152 : vector<8x128xi1>, vector<8x128xf32>
    %1156 = arith.mulf %1155, %1138 : vector<8x128xf32>
    %c113_i32_290 = arith.constant 113 : i32
    %1157 = tpu.dynamic_rotate %626 by %c113_i32_290 dim 1 : vector<8x128xf32>, i32 -> vector<8x128xf32>
    %c7_i32_291 = arith.constant 7 : i32
    %1158 = tpu.dynamic_rotate %1157 by %c7_i32_291 dim 0 : vector<8x128xf32>, i32 -> vector<8x128xf32>
    %c113_i32_292 = arith.constant 113 : i32
    %1159 = vector.broadcast %c113_i32_292 : i32 to vector<8x128xi32>
    %1160 = arith.cmpi slt, %0, %1159 : vector<8x128xi32>
    %1161 = arith.select %1160, %1157, %1158 : vector<8x128xi1>, vector<8x128xf32>
    %1162 = arith.mulf %1161, %1138 : vector<8x128xf32>
    %c96_293 = arith.constant 96 : index
    %1163 = memref.load %arg5[%c96_293] : memref<144xf32, #tpu.memory_space<smem>>
    %1164 = vector.broadcast %1163 : f32 to vector<8x128xf32>
    %1165 = arith.mulf %1164, %1144 : vector<8x128xf32>
    %c100_294 = arith.constant 100 : index
    %1166 = memref.load %arg5[%c100_294] : memref<144xf32, #tpu.memory_space<smem>>
    %1167 = vector.broadcast %1166 : f32 to vector<8x128xf32>
    %1168 = arith.mulf %1167, %1150 : vector<8x128xf32>
    %1169 = arith.addf %1165, %1168 : vector<8x128xf32>
    %c104_295 = arith.constant 104 : index
    %1170 = memref.load %arg5[%c104_295] : memref<144xf32, #tpu.memory_space<smem>>
    %1171 = vector.broadcast %1170 : f32 to vector<8x128xf32>
    %1172 = arith.mulf %1171, %1156 : vector<8x128xf32>
    %1173 = arith.addf %1169, %1172 : vector<8x128xf32>
    %c108 = arith.constant 108 : index
    %1174 = memref.load %arg5[%c108] : memref<144xf32, #tpu.memory_space<smem>>
    %1175 = vector.broadcast %1174 : f32 to vector<8x128xf32>
    %1176 = arith.mulf %1175, %1162 : vector<8x128xf32>
    %1177 = arith.addf %1173, %1176 : vector<8x128xf32>
    %1178 = arith.addf %1088, %1177 : vector<8x128xf32>
    %c97_296 = arith.constant 97 : index
    %1179 = memref.load %arg5[%c97_296] : memref<144xf32, #tpu.memory_space<smem>>
    %1180 = vector.broadcast %1179 : f32 to vector<8x128xf32>
    %1181 = arith.mulf %1180, %1144 : vector<8x128xf32>
    %c101_297 = arith.constant 101 : index
    %1182 = memref.load %arg5[%c101_297] : memref<144xf32, #tpu.memory_space<smem>>
    %1183 = vector.broadcast %1182 : f32 to vector<8x128xf32>
    %1184 = arith.mulf %1183, %1150 : vector<8x128xf32>
    %1185 = arith.addf %1181, %1184 : vector<8x128xf32>
    %c105_298 = arith.constant 105 : index
    %1186 = memref.load %arg5[%c105_298] : memref<144xf32, #tpu.memory_space<smem>>
    %1187 = vector.broadcast %1186 : f32 to vector<8x128xf32>
    %1188 = arith.mulf %1187, %1156 : vector<8x128xf32>
    %1189 = arith.addf %1185, %1188 : vector<8x128xf32>
    %c109 = arith.constant 109 : index
    %1190 = memref.load %arg5[%c109] : memref<144xf32, #tpu.memory_space<smem>>
    %1191 = vector.broadcast %1190 : f32 to vector<8x128xf32>
    %1192 = arith.mulf %1191, %1162 : vector<8x128xf32>
    %1193 = arith.addf %1189, %1192 : vector<8x128xf32>
    %1194 = arith.addf %1104, %1193 : vector<8x128xf32>
    %c98_299 = arith.constant 98 : index
    %1195 = memref.load %arg5[%c98_299] : memref<144xf32, #tpu.memory_space<smem>>
    %1196 = vector.broadcast %1195 : f32 to vector<8x128xf32>
    %1197 = arith.mulf %1196, %1144 : vector<8x128xf32>
    %c102_300 = arith.constant 102 : index
    %1198 = memref.load %arg5[%c102_300] : memref<144xf32, #tpu.memory_space<smem>>
    %1199 = vector.broadcast %1198 : f32 to vector<8x128xf32>
    %1200 = arith.mulf %1199, %1150 : vector<8x128xf32>
    %1201 = arith.addf %1197, %1200 : vector<8x128xf32>
    %c106_301 = arith.constant 106 : index
    %1202 = memref.load %arg5[%c106_301] : memref<144xf32, #tpu.memory_space<smem>>
    %1203 = vector.broadcast %1202 : f32 to vector<8x128xf32>
    %1204 = arith.mulf %1203, %1156 : vector<8x128xf32>
    %1205 = arith.addf %1201, %1204 : vector<8x128xf32>
    %c110 = arith.constant 110 : index
    %1206 = memref.load %arg5[%c110] : memref<144xf32, #tpu.memory_space<smem>>
    %1207 = vector.broadcast %1206 : f32 to vector<8x128xf32>
    %1208 = arith.mulf %1207, %1162 : vector<8x128xf32>
    %1209 = arith.addf %1205, %1208 : vector<8x128xf32>
    %1210 = arith.addf %1120, %1209 : vector<8x128xf32>
    %c99_302 = arith.constant 99 : index
    %1211 = memref.load %arg5[%c99_302] : memref<144xf32, #tpu.memory_space<smem>>
    %1212 = vector.broadcast %1211 : f32 to vector<8x128xf32>
    %1213 = arith.mulf %1212, %1144 : vector<8x128xf32>
    %c103_303 = arith.constant 103 : index
    %1214 = memref.load %arg5[%c103_303] : memref<144xf32, #tpu.memory_space<smem>>
    %1215 = vector.broadcast %1214 : f32 to vector<8x128xf32>
    %1216 = arith.mulf %1215, %1150 : vector<8x128xf32>
    %1217 = arith.addf %1213, %1216 : vector<8x128xf32>
    %c107_304 = arith.constant 107 : index
    %1218 = memref.load %arg5[%c107_304] : memref<144xf32, #tpu.memory_space<smem>>
    %1219 = vector.broadcast %1218 : f32 to vector<8x128xf32>
    %1220 = arith.mulf %1219, %1156 : vector<8x128xf32>
    %1221 = arith.addf %1217, %1220 : vector<8x128xf32>
    %c111 = arith.constant 111 : index
    %1222 = memref.load %arg5[%c111] : memref<144xf32, #tpu.memory_space<smem>>
    %1223 = vector.broadcast %1222 : f32 to vector<8x128xf32>
    %1224 = arith.mulf %1223, %1162 : vector<8x128xf32>
    %1225 = arith.addf %1221, %1224 : vector<8x128xf32>
    %1226 = arith.addf %1136, %1225 : vector<8x128xf32>
    %c7_305 = arith.constant 7 : index
    %c0_306 = arith.constant 0 : index
    %c0_307 = arith.constant 0 : index
    %1227 = vector.load %arg2[%c7_305, %c0_306, %c0_307] : memref<9x8x128xf32, #tpu.memory_space<vmem>>, vector<1x8x128xf32>
    %1228 = vector.shape_cast %1227 : vector<1x8x128xf32> to vector<8x128xf32>
    %c112_i32_308 = arith.constant 112 : i32
    %1229 = tpu.dynamic_rotate %602 by %c112_i32_308 dim 1 : vector<8x128xf32>, i32 -> vector<8x128xf32>
    %c7_i32_309 = arith.constant 7 : i32
    %1230 = tpu.dynamic_rotate %1229 by %c7_i32_309 dim 0 : vector<8x128xf32>, i32 -> vector<8x128xf32>
    %c112_i32_310 = arith.constant 112 : i32
    %1231 = vector.broadcast %c112_i32_310 : i32 to vector<8x128xi32>
    %1232 = arith.cmpi slt, %0, %1231 : vector<8x128xi32>
    %1233 = arith.select %1232, %1229, %1230 : vector<8x128xi1>, vector<8x128xf32>
    %1234 = arith.mulf %1233, %1228 : vector<8x128xf32>
    %c112_i32_311 = arith.constant 112 : i32
    %1235 = tpu.dynamic_rotate %610 by %c112_i32_311 dim 1 : vector<8x128xf32>, i32 -> vector<8x128xf32>
    %c7_i32_312 = arith.constant 7 : i32
    %1236 = tpu.dynamic_rotate %1235 by %c7_i32_312 dim 0 : vector<8x128xf32>, i32 -> vector<8x128xf32>
    %c112_i32_313 = arith.constant 112 : i32
    %1237 = vector.broadcast %c112_i32_313 : i32 to vector<8x128xi32>
    %1238 = arith.cmpi slt, %0, %1237 : vector<8x128xi32>
    %1239 = arith.select %1238, %1235, %1236 : vector<8x128xi1>, vector<8x128xf32>
    %1240 = arith.mulf %1239, %1228 : vector<8x128xf32>
    %c112_i32_314 = arith.constant 112 : i32
    %1241 = tpu.dynamic_rotate %618 by %c112_i32_314 dim 1 : vector<8x128xf32>, i32 -> vector<8x128xf32>
    %c7_i32_315 = arith.constant 7 : i32
    %1242 = tpu.dynamic_rotate %1241 by %c7_i32_315 dim 0 : vector<8x128xf32>, i32 -> vector<8x128xf32>
    %c112_i32_316 = arith.constant 112 : i32
    %1243 = vector.broadcast %c112_i32_316 : i32 to vector<8x128xi32>
    %1244 = arith.cmpi slt, %0, %1243 : vector<8x128xi32>
    %1245 = arith.select %1244, %1241, %1242 : vector<8x128xi1>, vector<8x128xf32>
    %1246 = arith.mulf %1245, %1228 : vector<8x128xf32>
    %c112_i32_317 = arith.constant 112 : i32
    %1247 = tpu.dynamic_rotate %626 by %c112_i32_317 dim 1 : vector<8x128xf32>, i32 -> vector<8x128xf32>
    %c7_i32_318 = arith.constant 7 : i32
    %1248 = tpu.dynamic_rotate %1247 by %c7_i32_318 dim 0 : vector<8x128xf32>, i32 -> vector<8x128xf32>
    %c112_i32_319 = arith.constant 112 : i32
    %1249 = vector.broadcast %c112_i32_319 : i32 to vector<8x128xi32>
    %1250 = arith.cmpi slt, %0, %1249 : vector<8x128xi32>
    %1251 = arith.select %1250, %1247, %1248 : vector<8x128xi1>, vector<8x128xf32>
    %1252 = arith.mulf %1251, %1228 : vector<8x128xf32>
    %c112 = arith.constant 112 : index
    %1253 = memref.load %arg5[%c112] : memref<144xf32, #tpu.memory_space<smem>>
    %1254 = vector.broadcast %1253 : f32 to vector<8x128xf32>
    %1255 = arith.mulf %1254, %1234 : vector<8x128xf32>
    %c116 = arith.constant 116 : index
    %1256 = memref.load %arg5[%c116] : memref<144xf32, #tpu.memory_space<smem>>
    %1257 = vector.broadcast %1256 : f32 to vector<8x128xf32>
    %1258 = arith.mulf %1257, %1240 : vector<8x128xf32>
    %1259 = arith.addf %1255, %1258 : vector<8x128xf32>
    %c120 = arith.constant 120 : index
    %1260 = memref.load %arg5[%c120] : memref<144xf32, #tpu.memory_space<smem>>
    %1261 = vector.broadcast %1260 : f32 to vector<8x128xf32>
    %1262 = arith.mulf %1261, %1246 : vector<8x128xf32>
    %1263 = arith.addf %1259, %1262 : vector<8x128xf32>
    %c124 = arith.constant 124 : index
    %1264 = memref.load %arg5[%c124] : memref<144xf32, #tpu.memory_space<smem>>
    %1265 = vector.broadcast %1264 : f32 to vector<8x128xf32>
    %1266 = arith.mulf %1265, %1252 : vector<8x128xf32>
    %1267 = arith.addf %1263, %1266 : vector<8x128xf32>
    %1268 = arith.addf %1178, %1267 : vector<8x128xf32>
    %c113 = arith.constant 113 : index
    %1269 = memref.load %arg5[%c113] : memref<144xf32, #tpu.memory_space<smem>>
    %1270 = vector.broadcast %1269 : f32 to vector<8x128xf32>
    %1271 = arith.mulf %1270, %1234 : vector<8x128xf32>
    %c117 = arith.constant 117 : index
    %1272 = memref.load %arg5[%c117] : memref<144xf32, #tpu.memory_space<smem>>
    %1273 = vector.broadcast %1272 : f32 to vector<8x128xf32>
    %1274 = arith.mulf %1273, %1240 : vector<8x128xf32>
    %1275 = arith.addf %1271, %1274 : vector<8x128xf32>
    %c121 = arith.constant 121 : index
    %1276 = memref.load %arg5[%c121] : memref<144xf32, #tpu.memory_space<smem>>
    %1277 = vector.broadcast %1276 : f32 to vector<8x128xf32>
    %1278 = arith.mulf %1277, %1246 : vector<8x128xf32>
    %1279 = arith.addf %1275, %1278 : vector<8x128xf32>
    %c125 = arith.constant 125 : index
    %1280 = memref.load %arg5[%c125] : memref<144xf32, #tpu.memory_space<smem>>
    %1281 = vector.broadcast %1280 : f32 to vector<8x128xf32>
    %1282 = arith.mulf %1281, %1252 : vector<8x128xf32>
    %1283 = arith.addf %1279, %1282 : vector<8x128xf32>
    %1284 = arith.addf %1194, %1283 : vector<8x128xf32>
    %c114 = arith.constant 114 : index
    %1285 = memref.load %arg5[%c114] : memref<144xf32, #tpu.memory_space<smem>>
    %1286 = vector.broadcast %1285 : f32 to vector<8x128xf32>
    %1287 = arith.mulf %1286, %1234 : vector<8x128xf32>
    %c118 = arith.constant 118 : index
    %1288 = memref.load %arg5[%c118] : memref<144xf32, #tpu.memory_space<smem>>
    %1289 = vector.broadcast %1288 : f32 to vector<8x128xf32>
    %1290 = arith.mulf %1289, %1240 : vector<8x128xf32>
    %1291 = arith.addf %1287, %1290 : vector<8x128xf32>
    %c122 = arith.constant 122 : index
    %1292 = memref.load %arg5[%c122] : memref<144xf32, #tpu.memory_space<smem>>
    %1293 = vector.broadcast %1292 : f32 to vector<8x128xf32>
    %1294 = arith.mulf %1293, %1246 : vector<8x128xf32>
    %1295 = arith.addf %1291, %1294 : vector<8x128xf32>
    %c126 = arith.constant 126 : index
    %1296 = memref.load %arg5[%c126] : memref<144xf32, #tpu.memory_space<smem>>
    %1297 = vector.broadcast %1296 : f32 to vector<8x128xf32>
    %1298 = arith.mulf %1297, %1252 : vector<8x128xf32>
    %1299 = arith.addf %1295, %1298 : vector<8x128xf32>
    %1300 = arith.addf %1210, %1299 : vector<8x128xf32>
    %c115 = arith.constant 115 : index
    %1301 = memref.load %arg5[%c115] : memref<144xf32, #tpu.memory_space<smem>>
    %1302 = vector.broadcast %1301 : f32 to vector<8x128xf32>
    %1303 = arith.mulf %1302, %1234 : vector<8x128xf32>
    %c119 = arith.constant 119 : index
    %1304 = memref.load %arg5[%c119] : memref<144xf32, #tpu.memory_space<smem>>
    %1305 = vector.broadcast %1304 : f32 to vector<8x128xf32>
    %1306 = arith.mulf %1305, %1240 : vector<8x128xf32>
    %1307 = arith.addf %1303, %1306 : vector<8x128xf32>
    %c123 = arith.constant 123 : index
    %1308 = memref.load %arg5[%c123] : memref<144xf32, #tpu.memory_space<smem>>
    %1309 = vector.broadcast %1308 : f32 to vector<8x128xf32>
    %1310 = arith.mulf %1309, %1246 : vector<8x128xf32>
    %1311 = arith.addf %1307, %1310 : vector<8x128xf32>
    %c127 = arith.constant 127 : index
    %1312 = memref.load %arg5[%c127] : memref<144xf32, #tpu.memory_space<smem>>
    %1313 = vector.broadcast %1312 : f32 to vector<8x128xf32>
    %1314 = arith.mulf %1313, %1252 : vector<8x128xf32>
    %1315 = arith.addf %1311, %1314 : vector<8x128xf32>
    %1316 = arith.addf %1226, %1315 : vector<8x128xf32>
    %c8_320 = arith.constant 8 : index
    %c0_321 = arith.constant 0 : index
    %c0_322 = arith.constant 0 : index
    %1317 = vector.load %arg2[%c8_320, %c0_321, %c0_322] : memref<9x8x128xf32, #tpu.memory_space<vmem>>, vector<1x8x128xf32>
    %1318 = vector.shape_cast %1317 : vector<1x8x128xf32> to vector<8x128xf32>
    %c111_i32_323 = arith.constant 111 : i32
    %1319 = tpu.dynamic_rotate %602 by %c111_i32_323 dim 1 : vector<8x128xf32>, i32 -> vector<8x128xf32>
    %c7_i32_324 = arith.constant 7 : i32
    %1320 = tpu.dynamic_rotate %1319 by %c7_i32_324 dim 0 : vector<8x128xf32>, i32 -> vector<8x128xf32>
    %c111_i32_325 = arith.constant 111 : i32
    %1321 = vector.broadcast %c111_i32_325 : i32 to vector<8x128xi32>
    %1322 = arith.cmpi slt, %0, %1321 : vector<8x128xi32>
    %1323 = arith.select %1322, %1319, %1320 : vector<8x128xi1>, vector<8x128xf32>
    %1324 = arith.mulf %1323, %1318 : vector<8x128xf32>
    %c111_i32_326 = arith.constant 111 : i32
    %1325 = tpu.dynamic_rotate %610 by %c111_i32_326 dim 1 : vector<8x128xf32>, i32 -> vector<8x128xf32>
    %c7_i32_327 = arith.constant 7 : i32
    %1326 = tpu.dynamic_rotate %1325 by %c7_i32_327 dim 0 : vector<8x128xf32>, i32 -> vector<8x128xf32>
    %c111_i32_328 = arith.constant 111 : i32
    %1327 = vector.broadcast %c111_i32_328 : i32 to vector<8x128xi32>
    %1328 = arith.cmpi slt, %0, %1327 : vector<8x128xi32>
    %1329 = arith.select %1328, %1325, %1326 : vector<8x128xi1>, vector<8x128xf32>
    %1330 = arith.mulf %1329, %1318 : vector<8x128xf32>
    %c111_i32_329 = arith.constant 111 : i32
    %1331 = tpu.dynamic_rotate %618 by %c111_i32_329 dim 1 : vector<8x128xf32>, i32 -> vector<8x128xf32>
    %c7_i32_330 = arith.constant 7 : i32
    %1332 = tpu.dynamic_rotate %1331 by %c7_i32_330 dim 0 : vector<8x128xf32>, i32 -> vector<8x128xf32>
    %c111_i32_331 = arith.constant 111 : i32
    %1333 = vector.broadcast %c111_i32_331 : i32 to vector<8x128xi32>
    %1334 = arith.cmpi slt, %0, %1333 : vector<8x128xi32>
    %1335 = arith.select %1334, %1331, %1332 : vector<8x128xi1>, vector<8x128xf32>
    %1336 = arith.mulf %1335, %1318 : vector<8x128xf32>
    %c111_i32_332 = arith.constant 111 : i32
    %1337 = tpu.dynamic_rotate %626 by %c111_i32_332 dim 1 : vector<8x128xf32>, i32 -> vector<8x128xf32>
    %c7_i32_333 = arith.constant 7 : i32
    %1338 = tpu.dynamic_rotate %1337 by %c7_i32_333 dim 0 : vector<8x128xf32>, i32 -> vector<8x128xf32>
    %c111_i32_334 = arith.constant 111 : i32
    %1339 = vector.broadcast %c111_i32_334 : i32 to vector<8x128xi32>
    %1340 = arith.cmpi slt, %0, %1339 : vector<8x128xi32>
    %1341 = arith.select %1340, %1337, %1338 : vector<8x128xi1>, vector<8x128xf32>
    %1342 = arith.mulf %1341, %1318 : vector<8x128xf32>
    %c128 = arith.constant 128 : index
    %1343 = memref.load %arg5[%c128] : memref<144xf32, #tpu.memory_space<smem>>
    %1344 = vector.broadcast %1343 : f32 to vector<8x128xf32>
    %1345 = arith.mulf %1344, %1324 : vector<8x128xf32>
    %c132 = arith.constant 132 : index
    %1346 = memref.load %arg5[%c132] : memref<144xf32, #tpu.memory_space<smem>>
    %1347 = vector.broadcast %1346 : f32 to vector<8x128xf32>
    %1348 = arith.mulf %1347, %1330 : vector<8x128xf32>
    %1349 = arith.addf %1345, %1348 : vector<8x128xf32>
    %c136 = arith.constant 136 : index
    %1350 = memref.load %arg5[%c136] : memref<144xf32, #tpu.memory_space<smem>>
    %1351 = vector.broadcast %1350 : f32 to vector<8x128xf32>
    %1352 = arith.mulf %1351, %1336 : vector<8x128xf32>
    %1353 = arith.addf %1349, %1352 : vector<8x128xf32>
    %c140 = arith.constant 140 : index
    %1354 = memref.load %arg5[%c140] : memref<144xf32, #tpu.memory_space<smem>>
    %1355 = vector.broadcast %1354 : f32 to vector<8x128xf32>
    %1356 = arith.mulf %1355, %1342 : vector<8x128xf32>
    %1357 = arith.addf %1353, %1356 : vector<8x128xf32>
    %1358 = arith.addf %1268, %1357 : vector<8x128xf32>
    %c129 = arith.constant 129 : index
    %1359 = memref.load %arg5[%c129] : memref<144xf32, #tpu.memory_space<smem>>
    %1360 = vector.broadcast %1359 : f32 to vector<8x128xf32>
    %1361 = arith.mulf %1360, %1324 : vector<8x128xf32>
    %c133 = arith.constant 133 : index
    %1362 = memref.load %arg5[%c133] : memref<144xf32, #tpu.memory_space<smem>>
    %1363 = vector.broadcast %1362 : f32 to vector<8x128xf32>
    %1364 = arith.mulf %1363, %1330 : vector<8x128xf32>
    %1365 = arith.addf %1361, %1364 : vector<8x128xf32>
    %c137 = arith.constant 137 : index
    %1366 = memref.load %arg5[%c137] : memref<144xf32, #tpu.memory_space<smem>>
    %1367 = vector.broadcast %1366 : f32 to vector<8x128xf32>
    %1368 = arith.mulf %1367, %1336 : vector<8x128xf32>
    %1369 = arith.addf %1365, %1368 : vector<8x128xf32>
    %c141 = arith.constant 141 : index
    %1370 = memref.load %arg5[%c141] : memref<144xf32, #tpu.memory_space<smem>>
    %1371 = vector.broadcast %1370 : f32 to vector<8x128xf32>
    %1372 = arith.mulf %1371, %1342 : vector<8x128xf32>
    %1373 = arith.addf %1369, %1372 : vector<8x128xf32>
    %1374 = arith.addf %1284, %1373 : vector<8x128xf32>
    %c130 = arith.constant 130 : index
    %1375 = memref.load %arg5[%c130] : memref<144xf32, #tpu.memory_space<smem>>
    %1376 = vector.broadcast %1375 : f32 to vector<8x128xf32>
    %1377 = arith.mulf %1376, %1324 : vector<8x128xf32>
    %c134 = arith.constant 134 : index
    %1378 = memref.load %arg5[%c134] : memref<144xf32, #tpu.memory_space<smem>>
    %1379 = vector.broadcast %1378 : f32 to vector<8x128xf32>
    %1380 = arith.mulf %1379, %1330 : vector<8x128xf32>
    %1381 = arith.addf %1377, %1380 : vector<8x128xf32>
    %c138 = arith.constant 138 : index
    %1382 = memref.load %arg5[%c138] : memref<144xf32, #tpu.memory_space<smem>>
    %1383 = vector.broadcast %1382 : f32 to vector<8x128xf32>
    %1384 = arith.mulf %1383, %1336 : vector<8x128xf32>
    %1385 = arith.addf %1381, %1384 : vector<8x128xf32>
    %c142 = arith.constant 142 : index
    %1386 = memref.load %arg5[%c142] : memref<144xf32, #tpu.memory_space<smem>>
    %1387 = vector.broadcast %1386 : f32 to vector<8x128xf32>
    %1388 = arith.mulf %1387, %1342 : vector<8x128xf32>
    %1389 = arith.addf %1385, %1388 : vector<8x128xf32>
    %1390 = arith.addf %1300, %1389 : vector<8x128xf32>
    %c131 = arith.constant 131 : index
    %1391 = memref.load %arg5[%c131] : memref<144xf32, #tpu.memory_space<smem>>
    %1392 = vector.broadcast %1391 : f32 to vector<8x128xf32>
    %1393 = arith.mulf %1392, %1324 : vector<8x128xf32>
    %c135 = arith.constant 135 : index
    %1394 = memref.load %arg5[%c135] : memref<144xf32, #tpu.memory_space<smem>>
    %1395 = vector.broadcast %1394 : f32 to vector<8x128xf32>
    %1396 = arith.mulf %1395, %1330 : vector<8x128xf32>
    %1397 = arith.addf %1393, %1396 : vector<8x128xf32>
    %c139 = arith.constant 139 : index
    %1398 = memref.load %arg5[%c139] : memref<144xf32, #tpu.memory_space<smem>>
    %1399 = vector.broadcast %1398 : f32 to vector<8x128xf32>
    %1400 = arith.mulf %1399, %1336 : vector<8x128xf32>
    %1401 = arith.addf %1397, %1400 : vector<8x128xf32>
    %c143 = arith.constant 143 : index
    %1402 = memref.load %arg5[%c143] : memref<144xf32, #tpu.memory_space<smem>>
    %1403 = vector.broadcast %1402 : f32 to vector<8x128xf32>
    %1404 = arith.mulf %1403, %1342 : vector<8x128xf32>
    %1405 = arith.addf %1401, %1404 : vector<8x128xf32>
    %1406 = arith.addf %1316, %1405 : vector<8x128xf32>
    %c0_335 = arith.constant 0 : index
    %1407 = memref.load %arg6[%c0_335] : memref<4xf32, #tpu.memory_space<smem>>
    %1408 = vector.broadcast %1407 : f32 to vector<8x128xf32>
    %1409 = arith.addf %1358, %1408 : vector<8x128xf32>
    %cst_336 = arith.constant 0.000000e+00 : f32
    %1410 = vector.broadcast %cst_336 : f32 to vector<8x128xf32>
    %1411 = arith.cmpf ogt, %1409, %1410 : vector<8x128xf32>
    %cst_337 = arith.constant 0.00999999977 : f32
    %1412 = vector.broadcast %cst_337 : f32 to vector<8x128xf32>
    %1413 = arith.mulf %1412, %1409 : vector<8x128xf32>
    %1414 = arith.select %1411, %1409, %1413 : vector<8x128xi1>, vector<8x128xf32>
    %c1_338 = arith.constant 1 : index
    %1415 = memref.load %arg6[%c1_338] : memref<4xf32, #tpu.memory_space<smem>>
    %1416 = vector.broadcast %1415 : f32 to vector<8x128xf32>
    %1417 = arith.addf %1374, %1416 : vector<8x128xf32>
    %cst_339 = arith.constant 0.000000e+00 : f32
    %1418 = vector.broadcast %cst_339 : f32 to vector<8x128xf32>
    %1419 = arith.cmpf ogt, %1417, %1418 : vector<8x128xf32>
    %cst_340 = arith.constant 0.00999999977 : f32
    %1420 = vector.broadcast %cst_340 : f32 to vector<8x128xf32>
    %1421 = arith.mulf %1420, %1417 : vector<8x128xf32>
    %1422 = arith.select %1419, %1417, %1421 : vector<8x128xi1>, vector<8x128xf32>
    %c2_341 = arith.constant 2 : index
    %1423 = memref.load %arg6[%c2_341] : memref<4xf32, #tpu.memory_space<smem>>
    %1424 = vector.broadcast %1423 : f32 to vector<8x128xf32>
    %1425 = arith.addf %1390, %1424 : vector<8x128xf32>
    %cst_342 = arith.constant 0.000000e+00 : f32
    %1426 = vector.broadcast %cst_342 : f32 to vector<8x128xf32>
    %1427 = arith.cmpf ogt, %1425, %1426 : vector<8x128xf32>
    %cst_343 = arith.constant 0.00999999977 : f32
    %1428 = vector.broadcast %cst_343 : f32 to vector<8x128xf32>
    %1429 = arith.mulf %1428, %1425 : vector<8x128xf32>
    %1430 = arith.select %1427, %1425, %1429 : vector<8x128xi1>, vector<8x128xf32>
    %c3_344 = arith.constant 3 : index
    %1431 = memref.load %arg6[%c3_344] : memref<4xf32, #tpu.memory_space<smem>>
    %1432 = vector.broadcast %1431 : f32 to vector<8x128xf32>
    %1433 = arith.addf %1406, %1432 : vector<8x128xf32>
    %cst_345 = arith.constant 0.000000e+00 : f32
    %1434 = vector.broadcast %cst_345 : f32 to vector<8x128xf32>
    %1435 = arith.cmpf ogt, %1433, %1434 : vector<8x128xf32>
    %cst_346 = arith.constant 0.00999999977 : f32
    %1436 = vector.broadcast %cst_346 : f32 to vector<8x128xf32>
    %1437 = arith.mulf %1436, %1433 : vector<8x128xf32>
    %1438 = arith.select %1435, %1433, %1437 : vector<8x128xi1>, vector<8x128xf32>
    %c0_347 = arith.constant 0 : index
    %c0_348 = arith.constant 0 : index
    %c0_349 = arith.constant 0 : index
    %1439 = vector.load %arg7[%c0_347, %c0_348, %c0_349] : memref<4x8x128xf32, #tpu.memory_space<vmem>>, vector<1x8x128xf32>
    %1440 = vector.shape_cast %1439 : vector<1x8x128xf32> to vector<8x128xf32>
    %1441 = vector.shape_cast %1414 : vector<8x128xf32> to vector<1x8x128xf32>
    tpu.vector_store %arg7[%c0_347, %c0_348, %c0_349], %1441 {strides = array<i32>} : memref<4x8x128xf32, #tpu.memory_space<vmem>>, vector<1x8x128xf32>,
    %c1_350 = arith.constant 1 : index
    %c0_351 = arith.constant 0 : index
    %c0_352 = arith.constant 0 : index
    %1442 = vector.load %arg7[%c1_350, %c0_351, %c0_352] : memref<4x8x128xf32, #tpu.memory_space<vmem>>, vector<1x8x128xf32>
    %1443 = vector.shape_cast %1442 : vector<1x8x128xf32> to vector<8x128xf32>
    %1444 = vector.shape_cast %1422 : vector<8x128xf32> to vector<1x8x128xf32>
    tpu.vector_store %arg7[%c1_350, %c0_351, %c0_352], %1444 {strides = array<i32>} : memref<4x8x128xf32, #tpu.memory_space<vmem>>, vector<1x8x128xf32>,
    %c2_353 = arith.constant 2 : index
    %c0_354 = arith.constant 0 : index
    %c0_355 = arith.constant 0 : index
    %1445 = vector.load %arg7[%c2_353, %c0_354, %c0_355] : memref<4x8x128xf32, #tpu.memory_space<vmem>>, vector<1x8x128xf32>
    %1446 = vector.shape_cast %1445 : vector<1x8x128xf32> to vector<8x128xf32>
    %1447 = vector.shape_cast %1430 : vector<8x128xf32> to vector<1x8x128xf32>
    tpu.vector_store %arg7[%c2_353, %c0_354, %c0_355], %1447 {strides = array<i32>} : memref<4x8x128xf32, #tpu.memory_space<vmem>>, vector<1x8x128xf32>,
    %c3_356 = arith.constant 3 : index
    %c0_357 = arith.constant 0 : index
    %c0_358 = arith.constant 0 : index
    %1448 = vector.load %arg7[%c3_356, %c0_357, %c0_358] : memref<4x8x128xf32, #tpu.memory_space<vmem>>, vector<1x8x128xf32>
    %1449 = vector.shape_cast %1448 : vector<1x8x128xf32> to vector<8x128xf32>
    %1450 = vector.shape_cast %1438 : vector<8x128xf32> to vector<1x8x128xf32>
    tpu.vector_store %arg7[%c3_356, %c0_357, %c0_358], %1450 {strides = array<i32>} : memref<4x8x128xf32, #tpu.memory_space<vmem>>, vector<1x8x128xf32>,
    return
  }
  func.func @transform_0(%arg0: i32) -> (i32, i32, i32) {
    %c0_i32 = arith.constant 0 : i32
    %c0_i32_0 = arith.constant 0 : i32
    %c0_i32_1 = arith.constant 0 : i32
    %c0_i32_2 = arith.constant 0 : i32
    return %c0_i32, %c0_i32_0, %c0_i32_1 : i32, i32, i32
  }
  func.func @transform_1(%arg0: i32) -> (i32, i32, i32) {
    %c0_i32 = arith.constant 0 : i32
    %c0_i32_0 = arith.constant 0 : i32
    %c0_i32_1 = arith.constant 0 : i32
    %c0_i32_2 = arith.constant 0 : i32
    return %c0_i32, %c0_i32_0, %c0_i32_1 : i32, i32, i32
  }
  func.func @transform_2(%arg0: i32) -> i32 {
    %c0_i32 = arith.constant 0 : i32
    %c0_i32_0 = arith.constant 0 : i32
    return %c0_i32 : i32
  }
  func.func @transform_3(%arg0: i32) -> i32 {
    %c0_i32 = arith.constant 0 : i32
    %c0_i32_0 = arith.constant 0 : i32
    return %c0_i32 : i32
  }
  func.func @transform_4(%arg0: i32) -> i32 {
    %c0_i32 = arith.constant 0 : i32
    %c0_i32_0 = arith.constant 0 : i32
    return %c0_i32 : i32
  }
  func.func @transform_5(%arg0: i32) -> i32 {
    %c0_i32 = arith.constant 0 : i32
    %c0_i32_0 = arith.constant 0 : i32
    return %c0_i32 : i32
  }
  func.func @transform_6(%arg0: i32) -> (i32, i32, i32) {
    %c0_i32 = arith.constant 0 : i32
    %c0_i32_0 = arith.constant 0 : i32
    %c0_i32_1 = arith.constant 0 : i32
    %c0_i32_2 = arith.constant 0 : i32
    return %c0_i32, %c0_i32_0, %c0_i32_1 : i32, i32, i32
  }
}

</mosaic_0001>

<llo_original>
// kernel: standard_conv2d_forward.1
$region0: #{standard_conv2d_forward.1}
  #allocation0 [shape = 'u32[]', space=smem, size = 0x4, offset = 0x4, fixed_abs, tag = 'smem constant byte address 0x4 - core index']
  #allocation1 [shape = 'u32[72,128]{1,0:T(1,128)}', space=vmem, size = 0x9000, scoped, tag = 'internal scratch']
  %s0 = inlined_call_operand.vmem [shape: f32[3,8,128], index: 0, kind: input, shape index: {}]
  %s1 = inlined_call_operand.vmem [shape: f32[9,8,128], index: 1, kind: input, shape index: {}]
  %s2 = inlined_call_operand.vmem [shape: f32[108], index: 2, kind: input, shape index: {}]
  %s3 = inlined_call_operand.vmem [shape: f32[4], index: 3, kind: input, shape index: {}]
  %s4 = inlined_call_operand.vmem [shape: f32[144], index: 4, kind: input, shape index: {}]
  %s5 = inlined_call_operand.vmem [shape: f32[4], index: 5, kind: input, shape index: {}]
  %s6 = inlined_call_operand.vmem [shape: f32[4,8,128], index: 6, kind: output, shape index: {}]
  %s7 = sld [smem:[#allocation0]]
  $region50: #{standard_conv2d_forward.1} parent=0
    _
  %s9 = ssub.s32 1, %s7
  %s10 = scalar_select 0, %s9, %s7
  $region1: #{standard_conv2d_forward.1} parent=0
    #allocation2 [shape = 'u8[512]{0}', space=smem, size = 0x200, scoped, tag = 'input window, operand 2, single buffered']
    #allocation3 [shape = 's32[1]{0}', space=sflag, size = 0x4, scoped, tag = 'scoped memory for standard_conv2d_forward.1']
    #allocation4 [shape = 'u8[512]{0}', space=smem, size = 0x200, scoped, tag = 'input window, operand 3, single buffered']
    #allocation5 [shape = 's32[1]{0}', space=sflag, size = 0x4, scoped, tag = 'scoped memory for standard_conv2d_forward.1']
    #allocation6 [shape = 'u8[1024]{0}', space=smem, size = 0x400, scoped, tag = 'input window, operand 4, single buffered']
    #allocation7 [shape = 'u8[512]{0}', space=smem, size = 0x200, scoped, tag = 'input window, operand 5, single buffered']
    #allocation8 [shape = 's32[1]{0}', space=sflag, size = 0x4, scoped, tag = 'scoped memory for standard_conv2d_forward.1']
    %11 = vsyncpa [#allocation3], 0
    %12 = vsyncpa [#allocation5], 0
    %13 = vsyncpa [#allocation8], 0
    // Predicated region
    $region2: #{standard_conv2d_forward.1} parent=1 // pred_check
      _
    $region3: #{standard_conv2d_forward.1} parent=1 // pred_check_branch
      %15 = sbr.rel (0) target = $region5
    $region4: #{standard_conv2d_forward.1} parent=1 // pred_region
      _
    $region5: #{standard_conv2d_forward.1} parent=1 // pred_fallthru
      _
    // Predicated region
    $region6: #{standard_conv2d_forward.1} parent=1 // pred_check
      _
    $region7: #{standard_conv2d_forward.1} parent=1 // pred_check_branch
      %17 = sbr.rel (0) target = $region9
    $region8: #{standard_conv2d_forward.1} parent=1 // pred_region
      _
    $region9: #{standard_conv2d_forward.1} parent=1 // pred_fallthru
      _
    // Predicated region
    $region10: #{standard_conv2d_forward.1} parent=1 // pred_check
      _
    $region11: #{standard_conv2d_forward.1} parent=1 // pred_check_branch
      %19 = sbr.rel (0) target = $region13
    $region12: #{standard_conv2d_forward.1} parent=1 // pred_region
      %21 = vsyncadd [#allocation3], 0
      %s23 = sshll.u32 %s2, 4
      %s24 = int_to_ptr.vmem [resolvable:$true] %s23
      %26 = dma.vmem_to_smem %s24, 16, [#allocation2], [#allocation3]
    $region13: #{standard_conv2d_forward.1} parent=1 // pred_fallthru
      _
    // Predicated region
    $region14: #{standard_conv2d_forward.1} parent=1 // pred_check
      _
    $region15: #{standard_conv2d_forward.1} parent=1 // pred_check_branch
      %28 = sbr.rel (0) target = $region17
    $region16: #{standard_conv2d_forward.1} parent=1 // pred_region
      %30 = vsyncadd [#allocation5], 0
      %s32 = sshll.u32 %s3, 4
      %s33 = int_to_ptr.vmem [resolvable:$true] %s32
      %35 = dma.vmem_to_smem %s33, 16, [#allocation4], [#allocation5]
    $region17: #{standard_conv2d_forward.1} parent=1 // pred_fallthru
      _
    // Predicated region
    $region18: #{standard_conv2d_forward.1} parent=1 // pred_check
      _
    $region19: #{standard_conv2d_forward.1} parent=1 // pred_check_branch
      %37 = sbr.rel (0) target = $region21
    $region20: #{standard_conv2d_forward.1} parent=1 // pred_region
      %39 = vsyncadd [#allocation5], 0
      %s41 = sshll.u32 %s4, 4
      %s42 = int_to_ptr.vmem [resolvable:$true] %s41
      %44 = dma.vmem_to_smem %s42, 32, [#allocation6], [#allocation5]
    $region21: #{standard_conv2d_forward.1} parent=1 // pred_fallthru
      _
    // Predicated region
    $region22: #{standard_conv2d_forward.1} parent=1 // pred_check
      _
    $region23: #{standard_conv2d_forward.1} parent=1 // pred_check_branch
      %46 = sbr.rel (0) target = $region25
    $region24: #{standard_conv2d_forward.1} parent=1 // pred_region
      %48 = vsyncadd [#allocation8], 0
      %s50 = sshll.u32 %s5, 4
      %s51 = int_to_ptr.vmem [resolvable:$true] %s50
      %53 = dma.vmem_to_smem %s51, 16, [#allocation7], [#allocation8]
    $region25: #{standard_conv2d_forward.1} parent=1 // pred_fallthru
      _
    // Predicated region
    $region26: #{standard_conv2d_forward.1} parent=1 // pred_check
      _
    $region27: #{standard_conv2d_forward.1} parent=1 // pred_check_branch
      %55 = sbr.rel (0) target = $region29
    $region28: #{standard_conv2d_forward.1} parent=1 // pred_region
      %57 = dma.done [#allocation3], 16
    $region29: #{standard_conv2d_forward.1} parent=1 // pred_fallthru
      _
    // Predicated region
    $region30: #{standard_conv2d_forward.1} parent=1 // pred_check
      _
    $region31: #{standard_conv2d_forward.1} parent=1 // pred_check_branch
      %59 = sbr.rel (0) target = $region33
    $region32: #{standard_conv2d_forward.1} parent=1 // pred_region
      %61 = dma.done [#allocation5], 16
    $region33: #{standard_conv2d_forward.1} parent=1 // pred_fallthru
      _
    // Predicated region
    $region34: #{standard_conv2d_forward.1} parent=1 // pred_check
      _
    $region35: #{standard_conv2d_forward.1} parent=1 // pred_check_branch
      %63 = sbr.rel (0) target = $region37
    $region36: #{standard_conv2d_forward.1} parent=1 // pred_region
      %65 = dma.done [#allocation5], 32
    $region37: #{standard_conv2d_forward.1} parent=1 // pred_fallthru
      _
    // Predicated region
    $region38: #{standard_conv2d_forward.1} parent=1 // pred_check
      _
    $region39: #{standard_conv2d_forward.1} parent=1 // pred_check_branch
      %67 = sbr.rel (0) target = $region41
    $region40: #{standard_conv2d_forward.1} parent=1 // pred_region
      %69 = dma.done [#allocation8], 16
    $region41: #{standard_conv2d_forward.1} parent=1 // pred_fallthru
      _
    %70 = sfence
    %v71 = vlaneseq
    %v72 = vand.u32 %v71, 127
    %v73 = vld [vmem:[%s0] sm:$0xff]
    %s74 = scalar_lea.vmem %s0, 8
    %v75 = vld [vmem:[%s74] sm:$0xff]
    %s76 = scalar_lea.vmem %s0, 16
    %v77 = vld [vmem:[%s76] sm:$0xff]
    %v78 = vld [vmem:[%s1] sm:$0xff]
    %79 = vrot.lane.b32.xlu0 %v73, 17
    %v80 = vpop.permute.xlu0 %79
    %v81 = vrot.slane %v80, 7
    %vm82 = vcmp.ge.s32.totalorder %v72, 17
    %v83 = vsel %vm82, %v80, %v81
    %v84 = vmul.f32 %v83, %v78
    %85 = vrot.lane.b32.xlu0 %v75, 17
    %v86 = vpop.permute.xlu0 %85
    %v87 = vrot.slane %v86, 7
    %v88 = vsel %vm82, %v86, %v87
    %v89 = vmul.f32 %v88, %v78
    %90 = vrot.lane.b32.xlu0 %v77, 17
    %v91 = vpop.permute.xlu0 %90
    %v92 = vrot.slane %v91, 7
    %v93 = vsel %vm82, %v91, %v92
    %v94 = vmul.f32 %v93, %v78
    %s95 = sld [smem:[#allocation2]]
    %v96 = vstv %s95
    %v97 = vmul.f32 %v96, %v84
    %s98 = sld [smem:[#allocation2 + $0x4]]
    %v99 = vstv %s98
    %v100 = vmul.f32 %v99, %v89
    %v101 = vadd.f32 %v97, %v100
    %s102 = sld [smem:[#allocation2 + $0x8]]
    %v103 = vstv %s102
    %v104 = vmul.f32 %v103, %v94
    %v105 = vadd.f32 %v101, %v104
    %s106 = sld [smem:[#allocation2 + $0x1]]
    %v107 = vstv %s106
    %v108 = vmul.f32 %v107, %v84
    %s109 = sld [smem:[#allocation2 + $0x5]]
    %v110 = vstv %s109
    %v111 = vmul.f32 %v110, %v89
    %v112 = vadd.f32 %v108, %v111
    %s113 = sld [smem:[#allocation2 + $0x9]]
    %v114 = vstv %s113
    %v115 = vmul.f32 %v114, %v94
    %v116 = vadd.f32 %v112, %v115
    %s117 = sld [smem:[#allocation2 + $0x2]]
    %v118 = vstv %s117
    %v119 = vmul.f32 %v118, %v84
    %s120 = sld [smem:[#allocation2 + $0x6]]
    %v121 = vstv %s120
    %v122 = vmul.f32 %v121, %v89
    %v123 = vadd.f32 %v119, %v122
    %s124 = sld [smem:[#allocation2 + $0xa]]
    %v125 = vstv %s124
    %v126 = vmul.f32 %v125, %v94
    %v127 = vadd.f32 %v123, %v126
    %s128 = sld [smem:[#allocation2 + $0x3]]
    %v129 = vstv %s128
    %v130 = vmul.f32 %v129, %v84
    %s131 = sld [smem:[#allocation2 + $0x7]]
    %v132 = vstv %s131
    %v133 = vmul.f32 %v132, %v89
    %v134 = vadd.f32 %v130, %v133
    %s135 = sld [smem:[#allocation2 + $0xb]]
    %v136 = vstv %s135
    %v137 = vmul.f32 %v136, %v94
    %v138 = vadd.f32 %v134, %v137
    %s139 = scalar_lea.vmem %s1, 8
    %v140 = vld [vmem:[%s139] sm:$0xff]
    %141 = vrot.lane.b32.xlu0 %v73, 16
    %v142 = vpop.permute.xlu0 %141
    %v143 = vrot.slane %v142, 7
    %vm144 = vcmp.ge.s32.totalorder %v72, 16
    %v145 = vsel %vm144, %v142, %v143
    %v146 = vmul.f32 %v145, %v140
    %147 = vrot.lane.b32.xlu0 %v75, 16
    %v148 = vpop.permute.xlu0 %147
    %v149 = vrot.slane %v148, 7
    %v150 = vsel %vm144, %v148, %v149
    %v151 = vmul.f32 %v150, %v140
    %152 = vrot.lane.b32.xlu0 %v77, 16
    %v153 = vpop.permute.xlu0 %152
    %v154 = vrot.slane %v153, 7
    %v155 = vsel %vm144, %v153, %v154
    %v156 = vmul.f32 %v155, %v140
    %s157 = sld [smem:[#allocation2 + $0xc]]
    %v158 = vstv %s157
    %v159 = vmul.f32 %v158, %v146
    %s160 = sld [smem:[#allocation2 + $0x10]]
    %v161 = vstv %s160
    %v162 = vmul.f32 %v161, %v151
    %v163 = vadd.f32 %v159, %v162
    %s164 = sld [smem:[#allocation2 + $0x14]]
    %v165 = vstv %s164
    %v166 = vmul.f32 %v165, %v156
    %v167 = vadd.f32 %v163, %v166
    %v168 = vadd.f32 %v105, %v167
    %s169 = sld [smem:[#allocation2 + $0xd]]
    %v170 = vstv %s169
    %v171 = vmul.f32 %v170, %v146
    %s172 = sld [smem:[#allocation2 + $0x11]]
    %v173 = vstv %s172
    %v174 = vmul.f32 %v173, %v151
    %v175 = vadd.f32 %v171, %v174
    %s176 = sld [smem:[#allocation2 + $0x15]]
    %v177 = vstv %s176
    %v178 = vmul.f32 %v177, %v156
    %v179 = vadd.f32 %v175, %v178
    %v180 = vadd.f32 %v116, %v179
    %s181 = sld [smem:[#allocation2 + $0xe]]
    %v182 = vstv %s181
    %v183 = vmul.f32 %v182, %v146
    %s184 = sld [smem:[#allocation2 + $0x12]]
    %v185 = vstv %s184
    %v186 = vmul.f32 %v185, %v151
    %v187 = vadd.f32 %v183, %v186
    %s188 = sld [smem:[#allocation2 + $0x16]]
    %v189 = vstv %s188
    %v190 = vmul.f32 %v189, %v156
    %v191 = vadd.f32 %v187, %v190
    %v192 = vadd.f32 %v127, %v191
    %s193 = sld [smem:[#allocation2 + $0xf]]
    %v194 = vstv %s193
    %v195 = vmul.f32 %v194, %v146
    %s196 = sld [smem:[#allocation2 + $0x13]]
    %v197 = vstv %s196
    %v198 = vmul.f32 %v197, %v151
    %v199 = vadd.f32 %v195, %v198
    %s200 = sld [smem:[#allocation2 + $0x17]]
    %v201 = vstv %s200
    %v202 = vmul.f32 %v201, %v156
    %v203 = vadd.f32 %v199, %v202
    %v204 = vadd.f32 %v138, %v203
    %s205 = scalar_lea.vmem %s1, 16
    %v206 = vld [vmem:[%s205] sm:$0xff]
    %207 = vrot.lane.b32.xlu0 %v73, 15
    %v208 = vpop.permute.xlu0 %207
    %v209 = vrot.slane %v208, 7
    %vm210 = vcmp.ge.s32.totalorder %v72, 15
    %v211 = vsel %vm210, %v208, %v209
    %v212 = vmul.f32 %v211, %v206
    %213 = vrot.lane.b32.xlu0 %v75, 15
    %v214 = vpop.permute.xlu0 %213
    %v215 = vrot.slane %v214, 7
    %v216 = vsel %vm210, %v214, %v215
    %v217 = vmul.f32 %v216, %v206
    %218 = vrot.lane.b32.xlu0 %v77, 15
    %v219 = vpop.permute.xlu0 %218
    %v220 = vrot.slane %v219, 7
    %v221 = vsel %vm210, %v219, %v220
    %v222 = vmul.f32 %v221, %v206
    %s223 = sld [smem:[#allocation2 + $0x18]]
    %v224 = vstv %s223
    %v225 = vmul.f32 %v224, %v212
    %s226 = sld [smem:[#allocation2 + $0x1c]]
    %v227 = vstv %s226
    %v228 = vmul.f32 %v227, %v217
    %v229 = vadd.f32 %v225, %v228
    %s230 = sld [smem:[#allocation2 + $0x20]]
    %v231 = vstv %s230
    %v232 = vmul.f32 %v231, %v222
    %v233 = vadd.f32 %v229, %v232
    %v234 = vadd.f32 %v168, %v233
    %s235 = sld [smem:[#allocation2 + $0x19]]
    %v236 = vstv %s235
    %v237 = vmul.f32 %v236, %v212
    %s238 = sld [smem:[#allocation2 + $0x1d]]
    %v239 = vstv %s238
    %v240 = vmul.f32 %v239, %v217
    %v241 = vadd.f32 %v237, %v240
    %s242 = sld [smem:[#allocation2 + $0x21]]
    %v243 = vstv %s242
    %v244 = vmul.f32 %v243, %v222
    %v245 = vadd.f32 %v241, %v244
    %v246 = vadd.f32 %v180, %v245
    %s247 = sld [smem:[#allocation2 + $0x1a]]
    %v248 = vstv %s247
    %v249 = vmul.f32 %v248, %v212
    %s250 = sld [smem:[#allocation2 + $0x1e]]
    %v251 = vstv %s250
    %v252 = vmul.f32 %v251, %v217
    %v253 = vadd.f32 %v249, %v252
    %s254 = sld [smem:[#allocation2 + $0x22]]
    %v255 = vstv %s254
    %v256 = vmul.f32 %v255, %v222
    %v257 = vadd.f32 %v253, %v256
    %v258 = vadd.f32 %v192, %v257
    %s259 = sld [smem:[#allocation2 + $0x1b]]
    %v260 = vstv %s259
    %v261 = vmul.f32 %v260, %v212
    %s262 = sld [smem:[#allocation2 + $0x1f]]
    %v263 = vstv %s262
    %v264 = vmul.f32 %v263, %v217
    %v265 = vadd.f32 %v261, %v264
    %s266 = sld [smem:[#allocation2 + $0x23]]
    %v267 = vstv %s266
    %v268 = vmul.f32 %v267, %v222
    %v269 = vadd.f32 %v265, %v268
    %v270 = vadd.f32 %v204, %v269
    %s271 = scalar_lea.vmem %s1, 24
    %v272 = vld [vmem:[%s271] sm:$0xff]
    %273 = vrot.lane.b32.xlu0 %v73, 1
    %v274 = vpop.permute.xlu0 %273
    %v275 = vrot.slane %v274, 7
    %vm276 = vcmp.ge.s32.totalorder %v72, 1
    %v277 = vsel %vm276, %v274, %v275
    %v278 = vmul.f32 %v277, %v272
    %279 = vrot.lane.b32.xlu0 %v75, 1
    %v280 = vpop.permute.xlu0 %279
    %v281 = vrot.slane %v280, 7
    %v282 = vsel %vm276, %v280, %v281
    %v283 = vmul.f32 %v282, %v272
    %284 = vrot.lane.b32.xlu0 %v77, 1
    %v285 = vpop.permute.xlu0 %284
    %v286 = vrot.slane %v285, 7
    %v287 = vsel %vm276, %v285, %v286
    %v288 = vmul.f32 %v287, %v272
    %s289 = sld [smem:[#allocation2 + $0x24]]
    %v290 = vstv %s289
    %v291 = vmul.f32 %v290, %v278
    %s292 = sld [smem:[#allocation2 + $0x28]]
    %v293 = vstv %s292
    %v294 = vmul.f32 %v293, %v283
    %v295 = vadd.f32 %v291, %v294
    %s296 = sld [smem:[#allocation2 + $0x2c]]
    %v297 = vstv %s296
    %v298 = vmul.f32 %v297, %v288
    %v299 = vadd.f32 %v295, %v298
    %v300 = vadd.f32 %v234, %v299
    %s301 = sld [smem:[#allocation2 + $0x25]]
    %v302 = vstv %s301
    %v303 = vmul.f32 %v302, %v278
    %s304 = sld [smem:[#allocation2 + $0x29]]
    %v305 = vstv %s304
    %v306 = vmul.f32 %v305, %v283
    %v307 = vadd.f32 %v303, %v306
    %s308 = sld [smem:[#allocation2 + $0x2d]]
    %v309 = vstv %s308
    %v310 = vmul.f32 %v309, %v288
    %v311 = vadd.f32 %v307, %v310
    %v312 = vadd.f32 %v246, %v311
    %s313 = sld [smem:[#allocation2 + $0x26]]
    %v314 = vstv %s313
    %v315 = vmul.f32 %v314, %v278
    %s316 = sld [smem:[#allocation2 + $0x2a]]
    %v317 = vstv %s316
    %v318 = vmul.f32 %v317, %v283
    %v319 = vadd.f32 %v315, %v318
    %s320 = sld [smem:[#allocation2 + $0x2e]]
    %v321 = vstv %s320
    %v322 = vmul.f32 %v321, %v288
    %v323 = vadd.f32 %v319, %v322
    %v324 = vadd.f32 %v258, %v323
    %s325 = sld [smem:[#allocation2 + $0x27]]
    %v326 = vstv %s325
    %v327 = vmul.f32 %v326, %v278
    %s328 = sld [smem:[#allocation2 + $0x2b]]
    %v329 = vstv %s328
    %v330 = vmul.f32 %v329, %v283
    %v331 = vadd.f32 %v327, %v330
    %s332 = sld [smem:[#allocation2 + $0x2f]]
    %v333 = vstv %s332
    %v334 = vmul.f32 %v333, %v288
    %v335 = vadd.f32 %v331, %v334
    %v336 = vadd.f32 %v270, %v335
    %s337 = sld [smem:[#allocation2 + $0x30]]
    %v338 = vstv %s337
    %v339 = vmul.f32 %v338, %v73
    %s340 = sld [smem:[#allocation2 + $0x34]]
    %v341 = vstv %s340
    %v342 = vmul.f32 %v341, %v75
    %v343 = vadd.f32 %v339, %v342
    %s344 = sld [smem:[#allocation2 + $0x38]]
    %v345 = vstv %s344
    %v346 = vmul.f32 %v345, %v77
    %v347 = vadd.f32 %v343, %v346
    %v348 = vadd.f32 %v300, %v347
    %s349 = sld [smem:[#allocation2 + $0x31]]
    %v350 = vstv %s349
    %v351 = vmul.f32 %v350, %v73
    %s352 = sld [smem:[#allocation2 + $0x35]]
    %v353 = vstv %s352
    %v354 = vmul.f32 %v353, %v75
    %v355 = vadd.f32 %v351, %v354
    %s356 = sld [smem:[#allocation2 + $0x39]]
    %v357 = vstv %s356
    %v358 = vmul.f32 %v357, %v77
    %v359 = vadd.f32 %v355, %v358
    %v360 = vadd.f32 %v312, %v359
    %s361 = sld [smem:[#allocation2 + $0x32]]
    %v362 = vstv %s361
    %v363 = vmul.f32 %v362, %v73
    %s364 = sld [smem:[#allocation2 + $0x36]]
    %v365 = vstv %s364
    %v366 = vmul.f32 %v365, %v75
    %v367 = vadd.f32 %v363, %v366
    %s368 = sld [smem:[#allocation2 + $0x3a]]
    %v369 = vstv %s368
    %v370 = vmul.f32 %v369, %v77
    %v371 = vadd.f32 %v367, %v370
    %v372 = vadd.f32 %v324, %v371
    %s373 = sld [smem:[#allocation2 + $0x33]]
    %v374 = vstv %s373
    %v375 = vmul.f32 %v374, %v73
    %s376 = sld [smem:[#allocation2 + $0x37]]
    %v377 = vstv %s376
    %v378 = vmul.f32 %v377, %v75
    %v379 = vadd.f32 %v375, %v378
    %s380 = sld [smem:[#allocation2 + $0x3b]]
    %v381 = vstv %s380
    %v382 = vmul.f32 %v381, %v77
    %v383 = vadd.f32 %v379, %v382
    %v384 = vadd.f32 %v336, %v383
    %s385 = scalar_lea.vmem %s1, 40
    %v386 = vld [vmem:[%s385] sm:$0xff]
    %387 = vrot.lane.b32.xlu0 %v73, 127
    %v388 = vpop.permute.xlu0 %387
    %v389 = vrot.slane %v388, 1
    %vm390 = vcmp.lt.s32.totalorder %v72, 127
    %v391 = vsel %vm390, %v388, %v389
    %v392 = vmul.f32 %v391, %v386
    %393 = vrot.lane.b32.xlu0 %v75, 127
    %v394 = vpop.permute.xlu0 %393
    %v395 = vrot.slane %v394, 1
    %v396 = vsel %vm390, %v394, %v395
    %v397 = vmul.f32 %v396, %v386
    %398 = vrot.lane.b32.xlu0 %v77, 127
    %v399 = vpop.permute.xlu0 %398
    %v400 = vrot.slane %v399, 1
    %v401 = vsel %vm390, %v399, %v400
    %v402 = vmul.f32 %v401, %v386
    %s403 = sld [smem:[#allocation2 + $0x3c]]
    %v404 = vstv %s403
    %v405 = vmul.f32 %v404, %v392
    %s406 = sld [smem:[#allocation2 + $0x40]]
    %v407 = vstv %s406
    %v408 = vmul.f32 %v407, %v397
    %v409 = vadd.f32 %v405, %v408
    %s410 = sld [smem:[#allocation2 + $0x44]]
    %v411 = vstv %s410
    %v412 = vmul.f32 %v411, %v402
    %v413 = vadd.f32 %v409, %v412
    %v414 = vadd.f32 %v348, %v413
    %s415 = sld [smem:[#allocation2 + $0x3d]]
    %v416 = vstv %s415
    %v417 = vmul.f32 %v416, %v392
    %s418 = sld [smem:[#allocation2 + $0x41]]
    %v419 = vstv %s418
    %v420 = vmul.f32 %v419, %v397
    %v421 = vadd.f32 %v417, %v420
    %s422 = sld [smem:[#allocation2 + $0x45]]
    %v423 = vstv %s422
    %v424 = vmul.f32 %v423, %v402
    %v425 = vadd.f32 %v421, %v424
    %v426 = vadd.f32 %v360, %v425
    %s427 = sld [smem:[#allocation2 + $0x3e]]
    %v428 = vstv %s427
    %v429 = vmul.f32 %v428, %v392
    %s430 = sld [smem:[#allocation2 + $0x42]]
    %v431 = vstv %s430
    %v432 = vmul.f32 %v431, %v397
    %v433 = vadd.f32 %v429, %v432
    %s434 = sld [smem:[#allocation2 + $0x46]]
    %v435 = vstv %s434
    %v436 = vmul.f32 %v435, %v402
    %v437 = vadd.f32 %v433, %v436
    %v438 = vadd.f32 %v372, %v437
    %s439 = sld [smem:[#allocation2 + $0x3f]]
    %v440 = vstv %s439
    %v441 = vmul.f32 %v440, %v392
    %s442 = sld [smem:[#allocation2 + $0x43]]
    %v443 = vstv %s442
    %v444 = vmul.f32 %v443, %v397
    %v445 = vadd.f32 %v441, %v444
    %s446 = sld [smem:[#allocation2 + $0x47]]
    %v447 = vstv %s446
    %v448 = vmul.f32 %v447, %v402
    %v449 = vadd.f32 %v445, %v448
    %v450 = vadd.f32 %v384, %v449
    %s451 = scalar_lea.vmem %s1, 48
    %v452 = vld [vmem:[%s451] sm:$0xff]
    %453 = vrot.lane.b32.xlu0 %v73, 113
    %v454 = vpop.permute.xlu0 %453
    %v455 = vrot.slane %v454, 1
    %vm456 = vcmp.lt.s32.totalorder %v72, 113
    %v457 = vsel %vm456, %v454, %v455
    %v458 = vmul.f32 %v457, %v452
    %459 = vrot.lane.b32.xlu0 %v75, 113
    %v460 = vpop.permute.xlu0 %459
    %v461 = vrot.slane %v460, 1
    %v462 = vsel %vm456, %v460, %v461
    %v463 = vmul.f32 %v462, %v452
    %464 = vrot.lane.b32.xlu0 %v77, 113
    %v465 = vpop.permute.xlu0 %464
    %v466 = vrot.slane %v465, 1
    %v467 = vsel %vm456, %v465, %v466
    %v468 = vmul.f32 %v467, %v452
    %s469 = sld [smem:[#allocation2 + $0x48]]
    %v470 = vstv %s469
    %v471 = vmul.f32 %v470, %v458
    %s472 = sld [smem:[#allocation2 + $0x4c]]
    %v473 = vstv %s472
    %v474 = vmul.f32 %v473, %v463
    %v475 = vadd.f32 %v471, %v474
    %s476 = sld [smem:[#allocation2 + $0x50]]
    %v477 = vstv %s476
    %v478 = vmul.f32 %v477, %v468
    %v479 = vadd.f32 %v475, %v478
    %v480 = vadd.f32 %v414, %v479
    %s481 = sld [smem:[#allocation2 + $0x49]]
    %v482 = vstv %s481
    %v483 = vmul.f32 %v482, %v458
    %s484 = sld [smem:[#allocation2 + $0x4d]]
    %v485 = vstv %s484
    %v486 = vmul.f32 %v485, %v463
    %v487 = vadd.f32 %v483, %v486
    %s488 = sld [smem:[#allocation2 + $0x51]]
    %v489 = vstv %s488
    %v490 = vmul.f32 %v489, %v468
    %v491 = vadd.f32 %v487, %v490
    %v492 = vadd.f32 %v426, %v491
    %s493 = sld [smem:[#allocation2 + $0x4a]]
    %v494 = vstv %s493
    %v495 = vmul.f32 %v494, %v458
    %s496 = sld [smem:[#allocation2 + $0x4e]]
    %v497 = vstv %s496
    %v498 = vmul.f32 %v497, %v463
    %v499 = vadd.f32 %v495, %v498
    %s500 = sld [smem:[#allocation2 + $0x52]]
    %v501 = vstv %s500
    %v502 = vmul.f32 %v501, %v468
    %v503 = vadd.f32 %v499, %v502
    %v504 = vadd.f32 %v438, %v503
    %s505 = sld [smem:[#allocation2 + $0x4b]]
    %v506 = vstv %s505
    %v507 = vmul.f32 %v506, %v458
    %s508 = sld [smem:[#allocation2 + $0x4f]]
    %v509 = vstv %s508
    %v510 = vmul.f32 %v509, %v463
    %v511 = vadd.f32 %v507, %v510
    %s512 = sld [smem:[#allocation2 + $0x53]]
    %v513 = vstv %s512
    %v514 = vmul.f32 %v513, %v468
    %v515 = vadd.f32 %v511, %v514
    %v516 = vadd.f32 %v450, %v515
    %s517 = scalar_lea.vmem %s1, 56
    %v518 = vld [vmem:[%s517] sm:$0xff]
    %519 = vrot.lane.b32.xlu0 %v73, 112
    %v520 = vpop.permute.xlu0 %519
    %v521 = vrot.slane %v520, 1
    %vm522 = vcmp.lt.s32.totalorder %v72, 112
    %v523 = vsel %vm522, %v520, %v521
    %v524 = vmul.f32 %v523, %v518
    %525 = vrot.lane.b32.xlu0 %v75, 112
    %v526 = vpop.permute.xlu0 %525
    %v527 = vrot.slane %v526, 1
    %v528 = vsel %vm522, %v526, %v527
    %v529 = vmul.f32 %v528, %v518
    %530 = vrot.lane.b32.xlu0 %v77, 112
    %v531 = vpop.permute.xlu0 %530
    %v532 = vrot.slane %v531, 1
    %v533 = vsel %vm522, %v531, %v532
    %v534 = vmul.f32 %v533, %v518
    %s535 = sld [smem:[#allocation2 + $0x54]]
    %v536 = vstv %s535
    %v537 = vmul.f32 %v536, %v524
    %s538 = sld [smem:[#allocation2 + $0x58]]
    %v539 = vstv %s538
    %v540 = vmul.f32 %v539, %v529
    %v541 = vadd.f32 %v537, %v540
    %s542 = sld [smem:[#allocation2 + $0x5c]]
    %v543 = vstv %s542
    %v544 = vmul.f32 %v543, %v534
    %v545 = vadd.f32 %v541, %v544
    %v546 = vadd.f32 %v480, %v545
    %s547 = sld [smem:[#allocation2 + $0x55]]
    %v548 = vstv %s547
    %v549 = vmul.f32 %v548, %v524
    %s550 = sld [smem:[#allocation2 + $0x59]]
    %v551 = vstv %s550
    %v552 = vmul.f32 %v551, %v529
    %v553 = vadd.f32 %v549, %v552
    %s554 = sld [smem:[#allocation2 + $0x5d]]
    %v555 = vstv %s554
    %v556 = vmul.f32 %v555, %v534
    %v557 = vadd.f32 %v553, %v556
    %v558 = vadd.f32 %v492, %v557
    %s559 = sld [smem:[#allocation2 + $0x56]]
    %v560 = vstv %s559
    %v561 = vmul.f32 %v560, %v524
    %s562 = sld [smem:[#allocation2 + $0x5a]]
    %v563 = vstv %s562
    %v564 = vmul.f32 %v563, %v529
    %v565 = vadd.f32 %v561, %v564
    %s566 = sld [smem:[#allocation2 + $0x5e]]
    %v567 = vstv %s566
    %v568 = vmul.f32 %v567, %v534
    %v569 = vadd.f32 %v565, %v568
    %v570 = vadd.f32 %v504, %v569
    %s571 = sld [smem:[#allocation2 + $0x57]]
    %v572 = vstv %s571
    %v573 = vmul.f32 %v572, %v524
    %s574 = sld [smem:[#allocation2 + $0x5b]]
    %v575 = vstv %s574
    %v576 = vmul.f32 %v575, %v529
    %v577 = vadd.f32 %v573, %v576
    %s578 = sld [smem:[#allocation2 + $0x5f]]
    %v579 = vstv %s578
    %v580 = vmul.f32 %v579, %v534
    %v581 = vadd.f32 %v577, %v580
    %v582 = vadd.f32 %v516, %v581
    %s583 = scalar_lea.vmem %s1, 64
    %v584 = vld [vmem:[%s583] sm:$0xff]
    %585 = vrot.lane.b32.xlu0 %v73, 111
    %v586 = vpop.permute.xlu0 %585
    %v587 = vrot.slane %v586, 1
    %vm588 = vcmp.lt.s32.totalorder %v72, 111
    %v589 = vsel %vm588, %v586, %v587
    %v590 = vmul.f32 %v589, %v584
    %591 = vrot.lane.b32.xlu0 %v75, 111
    %v592 = vpop.permute.xlu0 %591
    %v593 = vrot.slane %v592, 1
    %v594 = vsel %vm588, %v592, %v593
    %v595 = vmul.f32 %v594, %v584
    %596 = vrot.lane.b32.xlu0 %v77, 111
    %v597 = vpop.permute.xlu0 %596
    %v598 = vrot.slane %v597, 1
    %v599 = vsel %vm588, %v597, %v598
    %v600 = vmul.f32 %v599, %v584
    %s601 = sld [smem:[#allocation2 + $0x60]]
    %v602 = vstv %s601
    %v603 = vmul.f32 %v602, %v590
    %s604 = sld [smem:[#allocation2 + $0x64]]
    %v605 = vstv %s604
    %v606 = vmul.f32 %v605, %v595
    %v607 = vadd.f32 %v603, %v606
    %s608 = sld [smem:[#allocation2 + $0x68]]
    %v609 = vstv %s608
    %v610 = vmul.f32 %v609, %v600
    %v611 = vadd.f32 %v607, %v610
    %v612 = vadd.f32 %v546, %v611
    %s613 = sld [smem:[#allocation2 + $0x61]]
    %v614 = vstv %s613
    %v615 = vmul.f32 %v614, %v590
    %s616 = sld [smem:[#allocation2 + $0x65]]
    %v617 = vstv %s616
    %v618 = vmul.f32 %v617, %v595
    %v619 = vadd.f32 %v615, %v618
    %s620 = sld [smem:[#allocation2 + $0x69]]
    %v621 = vstv %s620
    %v622 = vmul.f32 %v621, %v600
    %v623 = vadd.f32 %v619, %v622
    %v624 = vadd.f32 %v558, %v623
    %s625 = sld [smem:[#allocation2 + $0x62]]
    %v626 = vstv %s625
    %v627 = vmul.f32 %v626, %v590
    %s628 = sld [smem:[#allocation2 + $0x66]]
    %v629 = vstv %s628
    %v630 = vmul.f32 %v629, %v595
    %v631 = vadd.f32 %v627, %v630
    %s632 = sld [smem:[#allocation2 + $0x6a]]
    %v633 = vstv %s632
    %v634 = vmul.f32 %v633, %v600
    %v635 = vadd.f32 %v631, %v634
    %v636 = vadd.f32 %v570, %v635
    %s637 = sld [smem:[#allocation2 + $0x63]]
    %v638 = vstv %s637
    %v639 = vmul.f32 %v638, %v590
    %s640 = sld [smem:[#allocation2 + $0x67]]
    %v641 = vstv %s640
    %v642 = vmul.f32 %v641, %v595
    %v643 = vadd.f32 %v639, %v642
    %s644 = sld [smem:[#allocation2 + $0x6b]]
    %v645 = vstv %s644
    %v646 = vmul.f32 %v645, %v600
    %v647 = vadd.f32 %v643, %v646
    %v648 = vadd.f32 %v582, %v647
    %s649 = sld [smem:[#allocation4]]
    %v650 = vstv %s649
    %v651 = vadd.f32 %v612, %v650
    %vm652 = vcmp.gt.f32.partialorder %v651, 0.0
    %v653 = vmul.f32 %v651, 0.01
    %v654 = vsel %vm652, %v651, %v653
    %s655 = sld [smem:[#allocation4 + $0x1]]
    %v656 = vstv %s655
    %v657 = vadd.f32 %v624, %v656
    %vm658 = vcmp.gt.f32.partialorder %v657, 0.0
    %v659 = vmul.f32 %v657, 0.01
    %v660 = vsel %vm658, %v657, %v659
    %s661 = sld [smem:[#allocation4 + $0x2]]
    %v662 = vstv %s661
    %v663 = vadd.f32 %v636, %v662
    %vm664 = vcmp.gt.f32.partialorder %v663, 0.0
    %v665 = vmul.f32 %v663, 0.01
    %v666 = vsel %vm664, %v663, %v665
    %s667 = sld [smem:[#allocation4 + $0x3]]
    %v668 = vstv %s667
    %v669 = vadd.f32 %v648, %v668
    %vm670 = vcmp.gt.f32.partialorder %v669, 0.0
    %v671 = vmul.f32 %v669, 0.01
    %v672 = vsel %vm670, %v669, %v671
    %673 = vrot.lane.b32.xlu0 %v654, 17
    %v674 = vpop.permute.xlu0 %673
    %v675 = vrot.slane %v674, 7
    %v676 = vsel %vm82, %v674, %v675
    %v677 = vmul.f32 %v676, %v78
    %678 = vrot.lane.b32.xlu0 %v660, 17
    %v679 = vpop.permute.xlu0 %678
    %v680 = vrot.slane %v679, 7
    %v681 = vsel %vm82, %v679, %v680
    %v682 = vmul.f32 %v681, %v78
    %683 = vrot.lane.b32.xlu0 %v666, 17
    %v684 = vpop.permute.xlu0 %683
    %v685 = vrot.slane %v684, 7
    %v686 = vsel %vm82, %v684, %v685
    %v687 = vmul.f32 %v686, %v78
    %688 = vrot.lane.b32.xlu0 %v672, 17
    %v689 = vpop.permute.xlu0 %688
    %v690 = vrot.slane %v689, 7
    %v691 = vsel %vm82, %v689, %v690
    %v692 = vmul.f32 %v691, %v78
    %s693 = sld [smem:[#allocation6]]
    %v694 = vstv %s693
    %v695 = vmul.f32 %v694, %v677
    %s696 = sld [smem:[#allocation6 + $0x4]]
    %v697 = vstv %s696
    %v698 = vmul.f32 %v697, %v682
    %v699 = vadd.f32 %v695, %v698
    %s700 = sld [smem:[#allocation6 + $0x8]]
    %v701 = vstv %s700
    %v702 = vmul.f32 %v701, %v687
    %v703 = vadd.f32 %v699, %v702
    %s704 = sld [smem:[#allocation6 + $0xc]]
    %v705 = vstv %s704
    %v706 = vmul.f32 %v705, %v692
    %v707 = vadd.f32 %v703, %v706
    %s708 = sld [smem:[#allocation6 + $0x1]]
    %v709 = vstv %s708
    %v710 = vmul.f32 %v709, %v677
    %s711 = sld [smem:[#allocation6 + $0x5]]
    %v712 = vstv %s711
    %v713 = vmul.f32 %v712, %v682
    %v714 = vadd.f32 %v710, %v713
    %s715 = sld [smem:[#allocation6 + $0x9]]
    %v716 = vstv %s715
    %v717 = vmul.f32 %v716, %v687
    %v718 = vadd.f32 %v714, %v717
    %s719 = sld [smem:[#allocation6 + $0xd]]
    %v720 = vstv %s719
    %v721 = vmul.f32 %v720, %v692
    %v722 = vadd.f32 %v718, %v721
    %s723 = sld [smem:[#allocation6 + $0x2]]
    %v724 = vstv %s723
    %v725 = vmul.f32 %v724, %v677
    %s726 = sld [smem:[#allocation6 + $0x6]]
    %v727 = vstv %s726
    %v728 = vmul.f32 %v727, %v682
    %v729 = vadd.f32 %v725, %v728
    %s730 = sld [smem:[#allocation6 + $0xa]]
    %v731 = vstv %s730
    %v732 = vmul.f32 %v731, %v687
    %v733 = vadd.f32 %v729, %v732
    %s734 = sld [smem:[#allocation6 + $0xe]]
    %v735 = vstv %s734
    %v736 = vmul.f32 %v735, %v692
    %v737 = vadd.f32 %v733, %v736
    %s738 = sld [smem:[#allocation6 + $0x3]]
    %v739 = vstv %s738
    %v740 = vmul.f32 %v739, %v677
    %s741 = sld [smem:[#allocation6 + $0x7]]
    %v742 = vstv %s741
    %v743 = vmul.f32 %v742, %v682
    %v744 = vadd.f32 %v740, %v743
    %s745 = sld [smem:[#allocation6 + $0xb]]
    %v746 = vstv %s745
    %v747 = vmul.f32 %v746, %v687
    %v748 = vadd.f32 %v744, %v747
    %s749 = sld [smem:[#allocation6 + $0xf]]
    %v750 = vstv %s749
    %v751 = vmul.f32 %v750, %v692
    %v752 = vadd.f32 %v748, %v751
    %753 = vrot.lane.b32.xlu0 %v654, 16
    %v754 = vpop.permute.xlu0 %753
    %v755 = vrot.slane %v754, 7
    %v756 = vsel %vm144, %v754, %v755
    %v757 = vmul.f32 %v756, %v140
    %758 = vrot.lane.b32.xlu0 %v660, 16
    %v759 = vpop.permute.xlu0 %758
    %v760 = vrot.slane %v759, 7
    %v761 = vsel %vm144, %v759, %v760
    %v762 = vmul.f32 %v761, %v140
    %763 = vrot.lane.b32.xlu0 %v666, 16
    %v764 = vpop.permute.xlu0 %763
    %v765 = vrot.slane %v764, 7
    %v766 = vsel %vm144, %v764, %v765
    %v767 = vmul.f32 %v766, %v140
    %768 = vrot.lane.b32.xlu0 %v672, 16
    %v769 = vpop.permute.xlu0 %768
    %v770 = vrot.slane %v769, 7
    %v771 = vsel %vm144, %v769, %v770
    %v772 = vmul.f32 %v771, %v140
    %s773 = sld [smem:[#allocation6 + $0x10]]
    %v774 = vstv %s773
    %v775 = vmul.f32 %v774, %v757
    %s776 = sld [smem:[#allocation6 + $0x14]]
    %v777 = vstv %s776
    %v778 = vmul.f32 %v777, %v762
    %v779 = vadd.f32 %v775, %v778
    %s780 = sld [smem:[#allocation6 + $0x18]]
    %v781 = vstv %s780
    %v782 = vmul.f32 %v781, %v767
    %v783 = vadd.f32 %v779, %v782
    %s784 = sld [smem:[#allocation6 + $0x1c]]
    %v785 = vstv %s784
    %v786 = vmul.f32 %v785, %v772
    %v787 = vadd.f32 %v783, %v786
    %v788 = vadd.f32 %v707, %v787
    %s789 = sld [smem:[#allocation6 + $0x11]]
    %v790 = vstv %s789
    %v791 = vmul.f32 %v790, %v757
    %s792 = sld [smem:[#allocation6 + $0x15]]
    %v793 = vstv %s792
    %v794 = vmul.f32 %v793, %v762
    %v795 = vadd.f32 %v791, %v794
    %s796 = sld [smem:[#allocation6 + $0x19]]
    %v797 = vstv %s796
    %v798 = vmul.f32 %v797, %v767
    %v799 = vadd.f32 %v795, %v798
    %s800 = sld [smem:[#allocation6 + $0x1d]]
    %v801 = vstv %s800
    %v802 = vmul.f32 %v801, %v772
    %v803 = vadd.f32 %v799, %v802
    %v804 = vadd.f32 %v722, %v803
    %s805 = sld [smem:[#allocation6 + $0x12]]
    %v806 = vstv %s805
    %v807 = vmul.f32 %v806, %v757
    %s808 = sld [smem:[#allocation6 + $0x16]]
    %v809 = vstv %s808
    %v810 = vmul.f32 %v809, %v762
    %v811 = vadd.f32 %v807, %v810
    %s812 = sld [smem:[#allocation6 + $0x1a]]
    %v813 = vstv %s812
    %v814 = vmul.f32 %v813, %v767
    %v815 = vadd.f32 %v811, %v814
    %s816 = sld [smem:[#allocation6 + $0x1e]]
    %v817 = vstv %s816
    %v818 = vmul.f32 %v817, %v772
    %v819 = vadd.f32 %v815, %v818
    %v820 = vadd.f32 %v737, %v819
    %s821 = sld [smem:[#allocation6 + $0x13]]
    %v822 = vstv %s821
    %v823 = vmul.f32 %v822, %v757
    %s824 = sld [smem:[#allocation6 + $0x17]]
    %v825 = vstv %s824
    %v826 = vmul.f32 %v825, %v762
    %v827 = vadd.f32 %v823, %v826
    %s828 = sld [smem:[#allocation6 + $0x1b]]
    %v829 = vstv %s828
    %v830 = vmul.f32 %v829, %v767
    %v831 = vadd.f32 %v827, %v830
    %s832 = sld [smem:[#allocation6 + $0x1f]]
    %v833 = vstv %s832
    %v834 = vmul.f32 %v833, %v772
    %v835 = vadd.f32 %v831, %v834
    %v836 = vadd.f32 %v752, %v835
    %837 = vrot.lane.b32.xlu0 %v654, 15
    %v838 = vpop.permute.xlu0 %837
    %v839 = vrot.slane %v838, 7
    %v840 = vsel %vm210, %v838, %v839
    %v841 = vmul.f32 %v840, %v206
    %842 = vrot.lane.b32.xlu0 %v660, 15
    %v843 = vpop.permute.xlu0 %842
    %v844 = vrot.slane %v843, 7
    %v845 = vsel %vm210, %v843, %v844
    %v846 = vmul.f32 %v845, %v206
    %847 = vrot.lane.b32.xlu0 %v666, 15
    %v848 = vpop.permute.xlu0 %847
    %v849 = vrot.slane %v848, 7
    %v850 = vsel %vm210, %v848, %v849
    %v851 = vmul.f32 %v850, %v206
    %852 = vrot.lane.b32.xlu0 %v672, 15
    %v853 = vpop.permute.xlu0 %852
    %v854 = vrot.slane %v853, 7
    %v855 = vsel %vm210, %v853, %v854
    %v856 = vmul.f32 %v855, %v206
    %s857 = sld [smem:[#allocation6 + $0x20]]
    %v858 = vstv %s857
    %v859 = vmul.f32 %v858, %v841
    %s860 = sld [smem:[#allocation6 + $0x24]]
    %v861 = vstv %s860
    %v862 = vmul.f32 %v861, %v846
    %v863 = vadd.f32 %v859, %v862
    %s864 = sld [smem:[#allocation6 + $0x28]]
    %v865 = vstv %s864
    %v866 = vmul.f32 %v865, %v851
    %v867 = vadd.f32 %v863, %v866
    %s868 = sld [smem:[#allocation6 + $0x2c]]
    %v869 = vstv %s868
    %v870 = vmul.f32 %v869, %v856
    %v871 = vadd.f32 %v867, %v870
    %v872 = vadd.f32 %v788, %v871
    %s873 = sld [smem:[#allocation6 + $0x21]]
    %v874 = vstv %s873
    %v875 = vmul.f32 %v874, %v841
    %s876 = sld [smem:[#allocation6 + $0x25]]
    %v877 = vstv %s876
    %v878 = vmul.f32 %v877, %v846
    %v879 = vadd.f32 %v875, %v878
    %s880 = sld [smem:[#allocation6 + $0x29]]
    %v881 = vstv %s880
    %v882 = vmul.f32 %v881, %v851
    %v883 = vadd.f32 %v879, %v882
    %s884 = sld [smem:[#allocation6 + $0x2d]]
    %v885 = vstv %s884
    %v886 = vmul.f32 %v885, %v856
    %v887 = vadd.f32 %v883, %v886
    %v888 = vadd.f32 %v804, %v887
    %s889 = sld [smem:[#allocation6 + $0x22]]
    %v890 = vstv %s889
    %v891 = vmul.f32 %v890, %v841
    %s892 = sld [smem:[#allocation6 + $0x26]]
    %v893 = vstv %s892
    %v894 = vmul.f32 %v893, %v846
    %v895 = vadd.f32 %v891, %v894
    %s896 = sld [smem:[#allocation6 + $0x2a]]
    %v897 = vstv %s896
    %v898 = vmul.f32 %v897, %v851
    %v899 = vadd.f32 %v895, %v898
    %s900 = sld [smem:[#allocation6 + $0x2e]]
    %v901 = vstv %s900
    %v902 = vmul.f32 %v901, %v856
    %v903 = vadd.f32 %v899, %v902
    %v904 = vadd.f32 %v820, %v903
    %s905 = sld [smem:[#allocation6 + $0x23]]
    %v906 = vstv %s905
    %v907 = vmul.f32 %v906, %v841
    %s908 = sld [smem:[#allocation6 + $0x27]]
    %v909 = vstv %s908
    %v910 = vmul.f32 %v909, %v846
    %v911 = vadd.f32 %v907, %v910
    %s912 = sld [smem:[#allocation6 + $0x2b]]
    %v913 = vstv %s912
    %v914 = vmul.f32 %v913, %v851
    %v915 = vadd.f32 %v911, %v914
    %s916 = sld [smem:[#allocation6 + $0x2f]]
    %v917 = vstv %s916
    %v918 = vmul.f32 %v917, %v856
    %v919 = vadd.f32 %v915, %v918
    %v920 = vadd.f32 %v836, %v919
    %921 = vrot.lane.b32.xlu0 %v654, 1
    %v922 = vpop.permute.xlu0 %921
    %v923 = vrot.slane %v922, 7
    %v924 = vsel %vm276, %v922, %v923
    %v925 = vmul.f32 %v924, %v272
    %926 = vrot.lane.b32.xlu0 %v660, 1
    %v927 = vpop.permute.xlu0 %926
    %v928 = vrot.slane %v927, 7
    %v929 = vsel %vm276, %v927, %v928
    %v930 = vmul.f32 %v929, %v272
    %931 = vrot.lane.b32.xlu0 %v666, 1
    %v932 = vpop.permute.xlu0 %931
    %v933 = vrot.slane %v932, 7
    %v934 = vsel %vm276, %v932, %v933
    %v935 = vmul.f32 %v934, %v272
    %936 = vrot.lane.b32.xlu0 %v672, 1
    %v937 = vpop.permute.xlu0 %936
    %v938 = vrot.slane %v937, 7
    %v939 = vsel %vm276, %v937, %v938
    %v940 = vmul.f32 %v939, %v272
    %s941 = sld [smem:[#allocation6 + $0x30]]
    %v942 = vstv %s941
    %v943 = vmul.f32 %v942, %v925
    %s944 = sld [smem:[#allocation6 + $0x34]]
    %v945 = vstv %s944
    %v946 = vmul.f32 %v945, %v930
    %v947 = vadd.f32 %v943, %v946
    %s948 = sld [smem:[#allocation6 + $0x38]]
    %v949 = vstv %s948
    %v950 = vmul.f32 %v949, %v935
    %v951 = vadd.f32 %v947, %v950
    %s952 = sld [smem:[#allocation6 + $0x3c]]
    %v953 = vstv %s952
    %v954 = vmul.f32 %v953, %v940
    %v955 = vadd.f32 %v951, %v954
    %v956 = vadd.f32 %v872, %v955
    %s957 = sld [smem:[#allocation6 + $0x31]]
    %v958 = vstv %s957
    %v959 = vmul.f32 %v958, %v925
    %s960 = sld [smem:[#allocation6 + $0x35]]
    %v961 = vstv %s960
    %v962 = vmul.f32 %v961, %v930
    %v963 = vadd.f32 %v959, %v962
    %s964 = sld [smem:[#allocation6 + $0x39]]
    %v965 = vstv %s964
    %v966 = vmul.f32 %v965, %v935
    %v967 = vadd.f32 %v963, %v966
    %s968 = sld [smem:[#allocation6 + $0x3d]]
    %v969 = vstv %s968
    %v970 = vmul.f32 %v969, %v940
    %v971 = vadd.f32 %v967, %v970
    %v972 = vadd.f32 %v888, %v971
    %s973 = sld [smem:[#allocation6 + $0x32]]
    %v974 = vstv %s973
    %v975 = vmul.f32 %v974, %v925
    %s976 = sld [smem:[#allocation6 + $0x36]]
    %v977 = vstv %s976
    %v978 = vmul.f32 %v977, %v930
    %v979 = vadd.f32 %v975, %v978
    %s980 = sld [smem:[#allocation6 + $0x3a]]
    %v981 = vstv %s980
    %v982 = vmul.f32 %v981, %v935
    %v983 = vadd.f32 %v979, %v982
    %s984 = sld [smem:[#allocation6 + $0x3e]]
    %v985 = vstv %s984
    %v986 = vmul.f32 %v985, %v940
    %v987 = vadd.f32 %v983, %v986
    %v988 = vadd.f32 %v904, %v987
    %s989 = sld [smem:[#allocation6 + $0x33]]
    %v990 = vstv %s989
    %v991 = vmul.f32 %v990, %v925
    %s992 = sld [smem:[#allocation6 + $0x37]]
    %v993 = vstv %s992
    %v994 = vmul.f32 %v993, %v930
    %v995 = vadd.f32 %v991, %v994
    %s996 = sld [smem:[#allocation6 + $0x3b]]
    %v997 = vstv %s996
    %v998 = vmul.f32 %v997, %v935
    %v999 = vadd.f32 %v995, %v998
    %s1000 = sld [smem:[#allocation6 + $0x3f]]
    %v1001 = vstv %s1000
    %v1002 = vmul.f32 %v1001, %v940
    %v1003 = vadd.f32 %v999, %v1002
    %v1004 = vadd.f32 %v920, %v1003
    %s1005 = sld [smem:[#allocation6 + $0x40]]
    %v1006 = vstv %s1005
    %v1007 = vmul.f32 %v1006, %v654
    %s1008 = sld [smem:[#allocation6 + $0x44]]
    %v1009 = vstv %s1008
    %v1010 = vmul.f32 %v1009, %v660
    %v1011 = vadd.f32 %v1007, %v1010
    %s1012 = sld [smem:[#allocation6 + $0x48]]
    %v1013 = vstv %s1012
    %v1014 = vmul.f32 %v1013, %v666
    %v1015 = vadd.f32 %v1011, %v1014
    %s1016 = sld [smem:[#allocation6 + $0x4c]]
    %v1017 = vstv %s1016
    %v1018 = vmul.f32 %v1017, %v672
    %v1019 = vadd.f32 %v1015, %v1018
    %v1020 = vadd.f32 %v956, %v1019
    %s1021 = sld [smem:[#allocation6 + $0x41]]
    %v1022 = vstv %s1021
    %v1023 = vmul.f32 %v1022, %v654
    %s1024 = sld [smem:[#allocation6 + $0x45]]
    %v1025 = vstv %s1024
    %v1026 = vmul.f32 %v1025, %v660
    %v1027 = vadd.f32 %v1023, %v1026
    %s1028 = sld [smem:[#allocation6 + $0x49]]
    %v1029 = vstv %s1028
    %v1030 = vmul.f32 %v1029, %v666
    %v1031 = vadd.f32 %v1027, %v1030
    %s1032 = sld [smem:[#allocation6 + $0x4d]]
    %v1033 = vstv %s1032
    %v1034 = vmul.f32 %v1033, %v672
    %v1035 = vadd.f32 %v1031, %v1034
    %v1036 = vadd.f32 %v972, %v1035
    %s1037 = sld [smem:[#allocation6 + $0x42]]
    %v1038 = vstv %s1037
    %v1039 = vmul.f32 %v1038, %v654
    %s1040 = sld [smem:[#allocation6 + $0x46]]
    %v1041 = vstv %s1040
    %v1042 = vmul.f32 %v1041, %v660
    %v1043 = vadd.f32 %v1039, %v1042
    %s1044 = sld [smem:[#allocation6 + $0x4a]]
    %v1045 = vstv %s1044
    %v1046 = vmul.f32 %v1045, %v666
    %v1047 = vadd.f32 %v1043, %v1046
    %s1048 = sld [smem:[#allocation6 + $0x4e]]
    %v1049 = vstv %s1048
    %v1050 = vmul.f32 %v1049, %v672
    %v1051 = vadd.f32 %v1047, %v1050
    %v1052 = vadd.f32 %v988, %v1051
    %s1053 = sld [smem:[#allocation6 + $0x43]]
    %v1054 = vstv %s1053
    %v1055 = vmul.f32 %v1054, %v654
    %s1056 = sld [smem:[#allocation6 + $0x47]]
    %v1057 = vstv %s1056
    %v1058 = vmul.f32 %v1057, %v660
    %v1059 = vadd.f32 %v1055, %v1058
    %s1060 = sld [smem:[#allocation6 + $0x4b]]
    %v1061 = vstv %s1060
    %v1062 = vmul.f32 %v1061, %v666
    %v1063 = vadd.f32 %v1059, %v1062
    %s1064 = sld [smem:[#allocation6 + $0x4f]]
    %v1065 = vstv %s1064
    %v1066 = vmul.f32 %v1065, %v672
    %v1067 = vadd.f32 %v1063, %v1066
    %v1068 = vadd.f32 %v1004, %v1067
    %1069 = vrot.lane.b32.xlu0 %v654, 127
    %v1070 = vpop.permute.xlu0 %1069
    %v1071 = vrot.slane %v1070, 1
    %v1072 = vsel %vm390, %v1070, %v1071
    %v1073 = vmul.f32 %v1072, %v386
    %1074 = vrot.lane.b32.xlu0 %v660, 127
    %v1075 = vpop.permute.xlu0 %1074
    %v1076 = vrot.slane %v1075, 1
    %v1077 = vsel %vm390, %v1075, %v1076
    %v1078 = vmul.f32 %v1077, %v386
    %1079 = vrot.lane.b32.xlu0 %v666, 127
    %v1080 = vpop.permute.xlu0 %1079
    %v1081 = vrot.slane %v1080, 1
    %v1082 = vsel %vm390, %v1080, %v1081
    %v1083 = vmul.f32 %v1082, %v386
    %1084 = vrot.lane.b32.xlu0 %v672, 127
    %v1085 = vpop.permute.xlu0 %1084
    %v1086 = vrot.slane %v1085, 1
    %v1087 = vsel %vm390, %v1085, %v1086
    %v1088 = vmul.f32 %v1087, %v386
    %s1089 = sld [smem:[#allocation6 + $0x50]]
    %v1090 = vstv %s1089
    %v1091 = vmul.f32 %v1090, %v1073
    %s1092 = sld [smem:[#allocation6 + $0x54]]
    %v1093 = vstv %s1092
    %v1094 = vmul.f32 %v1093, %v1078
    %v1095 = vadd.f32 %v1091, %v1094
    %s1096 = sld [smem:[#allocation6 + $0x58]]
    %v1097 = vstv %s1096
    %v1098 = vmul.f32 %v1097, %v1083
    %v1099 = vadd.f32 %v1095, %v1098
    %s1100 = sld [smem:[#allocation6 + $0x5c]]
    %v1101 = vstv %s1100
    %v1102 = vmul.f32 %v1101, %v1088
    %v1103 = vadd.f32 %v1099, %v1102
    %v1104 = vadd.f32 %v1020, %v1103
    %s1105 = sld [smem:[#allocation6 + $0x51]]
    %v1106 = vstv %s1105
    %v1107 = vmul.f32 %v1106, %v1073
    %s1108 = sld [smem:[#allocation6 + $0x55]]
    %v1109 = vstv %s1108
    %v1110 = vmul.f32 %v1109, %v1078
    %v1111 = vadd.f32 %v1107, %v1110
    %s1112 = sld [smem:[#allocation6 + $0x59]]
    %v1113 = vstv %s1112
    %v1114 = vmul.f32 %v1113, %v1083
    %v1115 = vadd.f32 %v1111, %v1114
    %s1116 = sld [smem:[#allocation6 + $0x5d]]
    %v1117 = vstv %s1116
    %v1118 = vmul.f32 %v1117, %v1088
    %v1119 = vadd.f32 %v1115, %v1118
    %v1120 = vadd.f32 %v1036, %v1119
    %s1121 = sld [smem:[#allocation6 + $0x52]]
    %v1122 = vstv %s1121
    %v1123 = vmul.f32 %v1122, %v1073
    %s1124 = sld [smem:[#allocation6 + $0x56]]
    %v1125 = vstv %s1124
    %v1126 = vmul.f32 %v1125, %v1078
    %v1127 = vadd.f32 %v1123, %v1126
    %s1128 = sld [smem:[#allocation6 + $0x5a]]
    %v1129 = vstv %s1128
    %v1130 = vmul.f32 %v1129, %v1083
    %v1131 = vadd.f32 %v1127, %v1130
    %s1132 = sld [smem:[#allocation6 + $0x5e]]
    %v1133 = vstv %s1132
    %v1134 = vmul.f32 %v1133, %v1088
    %v1135 = vadd.f32 %v1131, %v1134
    %v1136 = vadd.f32 %v1052, %v1135
    %s1137 = sld [smem:[#allocation6 + $0x53]]
    %v1138 = vstv %s1137
    %v1139 = vmul.f32 %v1138, %v1073
    %s1140 = sld [smem:[#allocation6 + $0x57]]
    %v1141 = vstv %s1140
    %v1142 = vmul.f32 %v1141, %v1078
    %v1143 = vadd.f32 %v1139, %v1142
    %s1144 = sld [smem:[#allocation6 + $0x5b]]
    %v1145 = vstv %s1144
    %v1146 = vmul.f32 %v1145, %v1083
    %v1147 = vadd.f32 %v1143, %v1146
    %s1148 = sld [smem:[#allocation6 + $0x5f]]
    %v1149 = vstv %s1148
    %v1150 = vmul.f32 %v1149, %v1088
    %v1151 = vadd.f32 %v1147, %v1150
    %v1152 = vadd.f32 %v1068, %v1151
    %1153 = vrot.lane.b32.xlu0 %v654, 113
    %v1154 = vpop.permute.xlu0 %1153
    %v1155 = vrot.slane %v1154, 1
    %v1156 = vsel %vm456, %v1154, %v1155
    %v1157 = vmul.f32 %v1156, %v452
    %1158 = vrot.lane.b32.xlu0 %v660, 113
    %v1159 = vpop.permute.xlu0 %1158
    %v1160 = vrot.slane %v1159, 1
    %v1161 = vsel %vm456, %v1159, %v1160
    %v1162 = vmul.f32 %v1161, %v452
    %1163 = vrot.lane.b32.xlu0 %v666, 113
    %v1164 = vpop.permute.xlu0 %1163
    %v1165 = vrot.slane %v1164, 1
    %v1166 = vsel %vm456, %v1164, %v1165
    %v1167 = vmul.f32 %v1166, %v452
    %1168 = vrot.lane.b32.xlu0 %v672, 113
    %v1169 = vpop.permute.xlu0 %1168
    %v1170 = vrot.slane %v1169, 1
    %v1171 = vsel %vm456, %v1169, %v1170
    %v1172 = vmul.f32 %v1171, %v452
    %s1173 = sld [smem:[#allocation6 + $0x60]]
    %v1174 = vstv %s1173
    %v1175 = vmul.f32 %v1174, %v1157
    %s1176 = sld [smem:[#allocation6 + $0x64]]
    %v1177 = vstv %s1176
    %v1178 = vmul.f32 %v1177, %v1162
    %v1179 = vadd.f32 %v1175, %v1178
    %s1180 = sld [smem:[#allocation6 + $0x68]]
    %v1181 = vstv %s1180
    %v1182 = vmul.f32 %v1181, %v1167
    %v1183 = vadd.f32 %v1179, %v1182
    %s1184 = sld [smem:[#allocation6 + $0x6c]]
    %v1185 = vstv %s1184
    %v1186 = vmul.f32 %v1185, %v1172
    %v1187 = vadd.f32 %v1183, %v1186
    %v1188 = vadd.f32 %v1104, %v1187
    %s1189 = sld [smem:[#allocation6 + $0x61]]
    %v1190 = vstv %s1189
    %v1191 = vmul.f32 %v1190, %v1157
    %s1192 = sld [smem:[#allocation6 + $0x65]]
    %v1193 = vstv %s1192
    %v1194 = vmul.f32 %v1193, %v1162
    %v1195 = vadd.f32 %v1191, %v1194
    %s1196 = sld [smem:[#allocation6 + $0x69]]
    %v1197 = vstv %s1196
    %v1198 = vmul.f32 %v1197, %v1167
    %v1199 = vadd.f32 %v1195, %v1198
    %s1200 = sld [smem:[#allocation6 + $0x6d]]
    %v1201 = vstv %s1200
    %v1202 = vmul.f32 %v1201, %v1172
    %v1203 = vadd.f32 %v1199, %v1202
    %v1204 = vadd.f32 %v1120, %v1203
    %s1205 = sld [smem:[#allocation6 + $0x62]]
    %v1206 = vstv %s1205
    %v1207 = vmul.f32 %v1206, %v1157
    %s1208 = sld [smem:[#allocation6 + $0x66]]
    %v1209 = vstv %s1208
    %v1210 = vmul.f32 %v1209, %v1162
    %v1211 = vadd.f32 %v1207, %v1210
    %s1212 = sld [smem:[#allocation6 + $0x6a]]
    %v1213 = vstv %s1212
    %v1214 = vmul.f32 %v1213, %v1167
    %v1215 = vadd.f32 %v1211, %v1214
    %s1216 = sld [smem:[#allocation6 + $0x6e]]
    %v1217 = vstv %s1216
    %v1218 = vmul.f32 %v1217, %v1172
    %v1219 = vadd.f32 %v1215, %v1218
    %v1220 = vadd.f32 %v1136, %v1219
    %s1221 = sld [smem:[#allocation6 + $0x63]]
    %v1222 = vstv %s1221
    %v1223 = vmul.f32 %v1222, %v1157
    %s1224 = sld [smem:[#allocation6 + $0x67]]
    %v1225 = vstv %s1224
    %v1226 = vmul.f32 %v1225, %v1162
    %v1227 = vadd.f32 %v1223, %v1226
    %s1228 = sld [smem:[#allocation6 + $0x6b]]
    %v1229 = vstv %s1228
    %v1230 = vmul.f32 %v1229, %v1167
    %v1231 = vadd.f32 %v1227, %v1230
    %s1232 = sld [smem:[#allocation6 + $0x6f]]
    %v1233 = vstv %s1232
    %v1234 = vmul.f32 %v1233, %v1172
    %v1235 = vadd.f32 %v1231, %v1234
    %v1236 = vadd.f32 %v1152, %v1235
    %1237 = vrot.lane.b32.xlu0 %v654, 112
    %v1238 = vpop.permute.xlu0 %1237
    %v1239 = vrot.slane %v1238, 1
    %v1240 = vsel %vm522, %v1238, %v1239
    %v1241 = vmul.f32 %v1240, %v518
    %1242 = vrot.lane.b32.xlu0 %v660, 112
    %v1243 = vpop.permute.xlu0 %1242
    %v1244 = vrot.slane %v1243, 1
    %v1245 = vsel %vm522, %v1243, %v1244
    %v1246 = vmul.f32 %v1245, %v518
    %1247 = vrot.lane.b32.xlu0 %v666, 112
    %v1248 = vpop.permute.xlu0 %1247
    %v1249 = vrot.slane %v1248, 1
    %v1250 = vsel %vm522, %v1248, %v1249
    %v1251 = vmul.f32 %v1250, %v518
    %1252 = vrot.lane.b32.xlu0 %v672, 112
    %v1253 = vpop.permute.xlu0 %1252
    %v1254 = vrot.slane %v1253, 1
    %v1255 = vsel %vm522, %v1253, %v1254
    %v1256 = vmul.f32 %v1255, %v518
    %s1257 = sld [smem:[#allocation6 + $0x70]]
    %v1258 = vstv %s1257
    %v1259 = vmul.f32 %v1258, %v1241
    %s1260 = sld [smem:[#allocation6 + $0x74]]
    %v1261 = vstv %s1260
    %v1262 = vmul.f32 %v1261, %v1246
    %v1263 = vadd.f32 %v1259, %v1262
    %s1264 = sld [smem:[#allocation6 + $0x78]]
    %v1265 = vstv %s1264
    %v1266 = vmul.f32 %v1265, %v1251
    %v1267 = vadd.f32 %v1263, %v1266
    %s1268 = sld [smem:[#allocation6 + $0x7c]]
    %v1269 = vstv %s1268
    %v1270 = vmul.f32 %v1269, %v1256
    %v1271 = vadd.f32 %v1267, %v1270
    %v1272 = vadd.f32 %v1188, %v1271
    %s1273 = sld [smem:[#allocation6 + $0x71]]
    %v1274 = vstv %s1273
    %v1275 = vmul.f32 %v1274, %v1241
    %s1276 = sld [smem:[#allocation6 + $0x75]]
    %v1277 = vstv %s1276
    %v1278 = vmul.f32 %v1277, %v1246
    %v1279 = vadd.f32 %v1275, %v1278
    %s1280 = sld [smem:[#allocation6 + $0x79]]
    %v1281 = vstv %s1280
    %v1282 = vmul.f32 %v1281, %v1251
    %v1283 = vadd.f32 %v1279, %v1282
    %s1284 = sld [smem:[#allocation6 + $0x7d]]
    %v1285 = vstv %s1284
    %v1286 = vmul.f32 %v1285, %v1256
    %v1287 = vadd.f32 %v1283, %v1286
    %v1288 = vadd.f32 %v1204, %v1287
    %s1289 = sld [smem:[#allocation6 + $0x72]]
    %v1290 = vstv %s1289
    %v1291 = vmul.f32 %v1290, %v1241
    %s1292 = sld [smem:[#allocation6 + $0x76]]
    %v1293 = vstv %s1292
    %v1294 = vmul.f32 %v1293, %v1246
    %v1295 = vadd.f32 %v1291, %v1294
    %s1296 = sld [smem:[#allocation6 + $0x7a]]
    %v1297 = vstv %s1296
    %v1298 = vmul.f32 %v1297, %v1251
    %v1299 = vadd.f32 %v1295, %v1298
    %s1300 = sld [smem:[#allocation6 + $0x7e]]
    %v1301 = vstv %s1300
    %v1302 = vmul.f32 %v1301, %v1256
    %v1303 = vadd.f32 %v1299, %v1302
    %v1304 = vadd.f32 %v1220, %v1303
    %s1305 = sld [smem:[#allocation6 + $0x73]]
    %v1306 = vstv %s1305
    %v1307 = vmul.f32 %v1306, %v1241
    %s1308 = sld [smem:[#allocation6 + $0x77]]
    %v1309 = vstv %s1308
    %v1310 = vmul.f32 %v1309, %v1246
    %v1311 = vadd.f32 %v1307, %v1310
    %s1312 = sld [smem:[#allocation6 + $0x7b]]
    %v1313 = vstv %s1312
    %v1314 = vmul.f32 %v1313, %v1251
    %v1315 = vadd.f32 %v1311, %v1314
    %s1316 = sld [smem:[#allocation6 + $0x7f]]
    %v1317 = vstv %s1316
    %v1318 = vmul.f32 %v1317, %v1256
    %v1319 = vadd.f32 %v1315, %v1318
    %v1320 = vadd.f32 %v1236, %v1319
    %1321 = vrot.lane.b32.xlu0 %v654, 111
    %v1322 = vpop.permute.xlu0 %1321
    %v1323 = vrot.slane %v1322, 1
    %v1324 = vsel %vm588, %v1322, %v1323
    %v1325 = vmul.f32 %v1324, %v584
    %1326 = vrot.lane.b32.xlu0 %v660, 111
    %v1327 = vpop.permute.xlu0 %1326
    %v1328 = vrot.slane %v1327, 1
    %v1329 = vsel %vm588, %v1327, %v1328
    %v1330 = vmul.f32 %v1329, %v584
    %1331 = vrot.lane.b32.xlu0 %v666, 111
    %v1332 = vpop.permute.xlu0 %1331
    %v1333 = vrot.slane %v1332, 1
    %v1334 = vsel %vm588, %v1332, %v1333
    %v1335 = vmul.f32 %v1334, %v584
    %1336 = vrot.lane.b32.xlu0 %v672, 111
    %v1337 = vpop.permute.xlu0 %1336
    %v1338 = vrot.slane %v1337, 1
    %v1339 = vsel %vm588, %v1337, %v1338
    %v1340 = vmul.f32 %v1339, %v584
    %s1341 = sld [smem:[#allocation6 + $0x80]]
    %v1342 = vstv %s1341
    %v1343 = vmul.f32 %v1342, %v1325
    %s1344 = sld [smem:[#allocation6 + $0x84]]
    %v1345 = vstv %s1344
    %v1346 = vmul.f32 %v1345, %v1330
    %v1347 = vadd.f32 %v1343, %v1346
    %s1348 = sld [smem:[#allocation6 + $0x88]]
    %v1349 = vstv %s1348
    %v1350 = vmul.f32 %v1349, %v1335
    %v1351 = vadd.f32 %v1347, %v1350
    %s1352 = sld [smem:[#allocation6 + $0x8c]]
    %v1353 = vstv %s1352
    %v1354 = vmul.f32 %v1353, %v1340
    %v1355 = vadd.f32 %v1351, %v1354
    %v1356 = vadd.f32 %v1272, %v1355
    %s1357 = sld [smem:[#allocation6 + $0x81]]
    %v1358 = vstv %s1357
    %v1359 = vmul.f32 %v1358, %v1325
    %s1360 = sld [smem:[#allocation6 + $0x85]]
    %v1361 = vstv %s1360
    %v1362 = vmul.f32 %v1361, %v1330
    %v1363 = vadd.f32 %v1359, %v1362
    %s1364 = sld [smem:[#allocation6 + $0x89]]
    %v1365 = vstv %s1364
    %v1366 = vmul.f32 %v1365, %v1335
    %v1367 = vadd.f32 %v1363, %v1366
    %s1368 = sld [smem:[#allocation6 + $0x8d]]
    %v1369 = vstv %s1368
    %v1370 = vmul.f32 %v1369, %v1340
    %v1371 = vadd.f32 %v1367, %v1370
    %v1372 = vadd.f32 %v1288, %v1371
    %s1373 = sld [smem:[#allocation6 + $0x82]]
    %v1374 = vstv %s1373
    %v1375 = vmul.f32 %v1374, %v1325
    %s1376 = sld [smem:[#allocation6 + $0x86]]
    %v1377 = vstv %s1376
    %v1378 = vmul.f32 %v1377, %v1330
    %v1379 = vadd.f32 %v1375, %v1378
    %s1380 = sld [smem:[#allocation6 + $0x8a]]
    %v1381 = vstv %s1380
    %v1382 = vmul.f32 %v1381, %v1335
    %v1383 = vadd.f32 %v1379, %v1382
    %s1384 = sld [smem:[#allocation6 + $0x8e]]
    %v1385 = vstv %s1384
    %v1386 = vmul.f32 %v1385, %v1340
    %v1387 = vadd.f32 %v1383, %v1386
    %v1388 = vadd.f32 %v1304, %v1387
    %s1389 = sld [smem:[#allocation6 + $0x83]]
    %v1390 = vstv %s1389
    %v1391 = vmul.f32 %v1390, %v1325
    %s1392 = sld [smem:[#allocation6 + $0x87]]
    %v1393 = vstv %s1392
    %v1394 = vmul.f32 %v1393, %v1330
    %v1395 = vadd.f32 %v1391, %v1394
    %s1396 = sld [smem:[#allocation6 + $0x8b]]
    %v1397 = vstv %s1396
    %v1398 = vmul.f32 %v1397, %v1335
    %v1399 = vadd.f32 %v1395, %v1398
    %s1400 = sld [smem:[#allocation6 + $0x8f]]
    %v1401 = vstv %s1400
    %v1402 = vmul.f32 %v1401, %v1340
    %v1403 = vadd.f32 %v1399, %v1402
    %v1404 = vadd.f32 %v1320, %v1403
    %s1405 = sld [smem:[#allocation7]]
    %v1406 = vstv %s1405
    %v1407 = vadd.f32 %v1356, %v1406
    %vm1408 = vcmp.gt.f32.partialorder %v1407, 0.0
    %v1409 = vmul.f32 %v1407, 0.01
    %v1410 = vsel %vm1408, %v1407, %v1409
    %s1411 = sld [smem:[#allocation7 + $0x1]]
    %v1412 = vstv %s1411
    %v1413 = vadd.f32 %v1372, %v1412
    %vm1414 = vcmp.gt.f32.partialorder %v1413, 0.0
    %v1415 = vmul.f32 %v1413, 0.01
    %v1416 = vsel %vm1414, %v1413, %v1415
    %s1417 = sld [smem:[#allocation7 + $0x2]]
    %v1418 = vstv %s1417
    %v1419 = vadd.f32 %v1388, %v1418
    %vm1420 = vcmp.gt.f32.partialorder %v1419, 0.0
    %v1421 = vmul.f32 %v1419, 0.01
    %v1422 = vsel %vm1420, %v1419, %v1421
    %s1423 = sld [smem:[#allocation7 + $0x3]]
    %v1424 = vstv %s1423
    %v1425 = vadd.f32 %v1404, %v1424
    %vm1426 = vcmp.gt.f32.partialorder %v1425, 0.0
    %v1427 = vmul.f32 %v1425, 0.01
    %v1428 = vsel %vm1426, %v1425, %v1427
    %1429 = vst [vmem:[%s6] sm:$0xff] %v1410
    %s1430 = scalar_lea.vmem %s6, 8
    %1431 = vst [vmem:[%s1430] sm:$0xff] %v1416
    %s1432 = scalar_lea.vmem %s6, 16
    %1433 = vst [vmem:[%s1432] sm:$0xff] %v1422
    %s1434 = scalar_lea.vmem %s6, 24
    %1435 = vst [vmem:[%s1434] sm:$0xff] %v1428
    // Predicated region
    $region42: #{standard_conv2d_forward.1} parent=1 // pred_check
      _
    $region43: #{standard_conv2d_forward.1} parent=1 // pred_check_branch
      %1437 = sbr.rel (0) target = $region45
    $region44: #{standard_conv2d_forward.1} parent=1 // pred_region
      _
    $region45: #{standard_conv2d_forward.1} parent=1 // pred_fallthru
      _
    // Predicated region
    $region46: #{standard_conv2d_forward.1} parent=1 // pred_check
      _
    $region47: #{standard_conv2d_forward.1} parent=1 // pred_check_branch
      %1439 = sbr.rel (0) target = $region49
    $region48: #{standard_conv2d_forward.1} parent=1 // pred_region
      _
    $region49: #{standard_conv2d_forward.1} parent=1 // pred_fallthru
      _
    %1440 = vsyncpa [#allocation3], 1
    %1441 = vsyncpa [#allocation5], 1
    %1442 = vsyncpa [#allocation8], 1

</llo_original>
